<compile_context>
chip_gen: v6e
topology: v6e:2x2x1
jax: 0.10.0
libtpu: 0.0.40
codegen_flags: <defaults>
</compile_context>

<pallas_src>
import functools

import jax
import jax.numpy as jnp
from jax.experimental import pallas as pl
from jax.experimental.pallas import tpu as pltpu


# ----------------------------------------------------------------------------
# VMEM budgeting helpers (per-generation: 128 MiB v5e/v6e, 64 MiB v7x).
# ----------------------------------------------------------------------------
def _vmem_limit_bytes():
    cap = 64 * 1024 * 1024
    try:
        info = pltpu.get_tpu_info()
        c = int(getattr(info, "vmem_capacity_bytes", cap))
        if c > 0:
            cap = c
    except Exception:
        pass
    return int(min(100 * 1024 * 1024, cap * 3 // 4))


def _pick_t_block(T, b_block, d_in, H, in_bytes, out_bytes, vmem_limit, target=128):
    """Largest time block whose double-buffered in/out blocks + gates scratch fit the budget."""
    fixed = (d_in * 4 * H + H * 4 * H) * in_bytes + 6 * b_block * H * 4 + 16 * H
    budget = max(vmem_limit - fixed - (4 << 20), 1 << 20)
    per_t = b_block * (2 * d_in * in_bytes + 2 * H * out_bytes + 4 * 4 * H)
    tb = max(1, min(target, budget // per_t, T))
    if tb >= 8:
        tb = (tb // 8) * 8
    return int(tb)


def _pick_tile(dim, target, align):
    if dim <= target:
        return dim
    t = (target // align) * align
    while t >= align:
        if dim % t == 0:
            return t
        t -= align
    return dim


# ----------------------------------------------------------------------------
# Tiled matmul + bias kernel (used for the ff head applied to the whole sequence).
# ----------------------------------------------------------------------------
def _linear_kernel(x_ref, w_ref, b_ref, o_ref, acc_ref):
    k = pl.program_id(2)

    @pl.when(k == 0)
    def _():
        acc_ref[...] = jnp.zeros_like(acc_ref)

    acc_ref[...] += jnp.dot(x_ref[...], w_ref[...], preferred_element_type=jnp.float32)

    @pl.when(k == pl.num_programs(2) - 1)
    def _():
        o_ref[...] = (acc_ref[...] + b_ref[...]).astype(o_ref.dtype)


def _linear(x, w, b_row, *, out_dtype=jnp.float32, tm=256, tn=256, tk=512,
            vmem_limit=None):
    """x: (M, K), w: (K, N), b_row: (1, N) f32 -> (M, N) out_dtype."""
    M, K = x.shape
    _, N = w.shape
    tm = _pick_tile(M, tm, 8)
    tk = _pick_tile(K, tk, 128)
    tn = _pick_tile(N, tn, 128)
    return pl.pallas_call(
        _linear_kernel,
        out_shape=jax.ShapeDtypeStruct((M, N), out_dtype),
        grid_spec=pltpu.PrefetchScalarGridSpec(
            num_scalar_prefetch=0,
            grid=(M // tm, N // tn, K // tk),
            in_specs=[pl.BlockSpec((tm, tk), lambda i, j, k: (i, k)),
                      pl.BlockSpec((tk, tn), lambda i, j, k: (k, j)),
                      pl.BlockSpec((1, tn), lambda i, j, k: (0, j))],
            out_specs=pl.BlockSpec((tm, tn), lambda i, j, k: (i, j)),
            scratch_shapes=[pltpu.VMEM((tm, tn), jnp.float32)]),
        compiler_params=pltpu.CompilerParams(
            dimension_semantics=("parallel", "parallel", "arbitrary"),
            vmem_limit_bytes=vmem_limit),
    )(x, w, b_row)


# ----------------------------------------------------------------------------
# Fused recurrent LSTM-layer kernel.
# Grid: (batch chunks [parallel], time blocks [arbitrary]).
# Per grid step: one batched input-projection matmul for the whole time block, then an
# unrolled fori_loop over timesteps with h/c carried in registers; scratch h/c carries
# the state across time blocks; hN/cN written only on the last time block.
# ----------------------------------------------------------------------------
def _lstm_layer_kernel(x_ref, wih_ref, whh_ref, b_ref, h0_ref, c0_ref,
                       out_ref, hN_ref, cN_ref,
                       gx_scr, h_scr, c_scr, *, t_total, t_block):
    ti = pl.program_id(1)
    H = h_scr.shape[-1]
    tb, bb, d_in = x_ref.shape
    needs_mask = (t_total % t_block) != 0  # static: only emit tail masking if T was padded

    @pl.when(ti == 0)
    def _():
        h_scr[...] = h0_ref[...]
        c_scr[...] = c0_ref[...]

    # Hoisted input projection for the whole time block: one MXU matmul, f32 accumulation.
    x_flat = x_ref[...].reshape(tb * bb, d_in)
    gx = jnp.dot(x_flat, wih_ref[...], preferred_element_type=jnp.float32) + b_ref[...]
    gx_scr[...] = gx.reshape(tb, bb, 4 * H)

    whh = whh_ref[...]  # constant index_map -> block is not re-DMA'd across grid steps

    def sig(v):  # exact identity sigmoid(x) = 0.5*tanh(x/2)+0.5 : one EUP op vs exp+recip
        return 0.5 * jnp.tanh(0.5 * v) + 0.5

    def step(t, carry):
        h_prev, c_prev = carry
        gates = gx_scr[t] + jnp.dot(h_prev.astype(whh.dtype), whh,
                                    preferred_element_type=jnp.float32)
        # NOTE: for H >= 128 these lane slices are aligned and free; at small H they cost XLU.
        i = sig(gates[:, 0 * H:1 * H])
        f = sig(gates[:, 1 * H:2 * H])
        g = jnp.tanh(gates[:, 2 * H:3 * H])
        o = sig(gates[:, 3 * H:4 * H])
        c_new = f * c_prev + i * g
        h_new = o * jnp.tanh(c_new)
        out_ref[t] = h_new.astype(out_ref.dtype)
        if needs_mask:
            valid = (ti * t_block + t) < t_total
            h_new = jnp.where(valid, h_new, h_prev)
            c_new = jnp.where(valid, c_new, c_prev)
        return (h_new, c_new)

    h_f, c_f = jax.lax.fori_loop(0, tb, step, (h_scr[...], c_scr[...]), unroll=True)
    h_scr[...] = h_f
    c_scr[...] = c_f

    @pl.when(ti == pl.num_programs(1) - 1)
    def _():
        hN_ref[...] = h_f
        cN_ref[...] = c_f


def _run_lstm_layer(x_tbd, wih_t, whh_t, b_row, h0, c0, *,
                    t_total, t_block, b_block, out_dtype, vmem_limit):
    """x_tbd: (T_pad, B_pad, D_in); wih_t: (D_in, 4H); whh_t: (H, 4H); b_row: (1, 4H);
    h0/c0: (B_pad, H) f32."""
    T_pad, B_pad, D_in = x_tbd.shape
    H = whh_t.shape[0]
    G = 4 * H
    n_t = T_pad // t_block
    n_b = B_pad // b_block

    kernel = functools.partial(_lstm_layer_kernel, t_total=t_total, t_block=t_block)

    return pl.pallas_call(
        kernel,
        out_shape=(jax.ShapeDtypeStruct((T_pad, B_pad, H), out_dtype),
                   jax.ShapeDtypeStruct((B_pad, H), jnp.float32),
                   jax.ShapeDtypeStruct((B_pad, H), jnp.float32)),
        grid_spec=pltpu.PrefetchScalarGridSpec(
            num_scalar_prefetch=0,
            grid=(n_b, n_t),
            in_specs=[
                pl.BlockSpec((t_block, b_block, D_in), lambda bi, ti: (ti, bi, 0)),
                pl.BlockSpec((D_in, G), lambda bi, ti: (0, 0)),
                pl.BlockSpec((H, G), lambda bi, ti: (0, 0)),
                pl.BlockSpec((1, G), lambda bi, ti: (0, 0)),
                pl.BlockSpec((b_block, H), lambda bi, ti: (bi, 0)),
                pl.BlockSpec((b_block, H), lambda bi, ti: (bi, 0)),
            ],
            out_specs=(
                pl.BlockSpec((t_block, b_block, H), lambda bi, ti: (ti, bi, 0)),
                pl.BlockSpec((b_block, H), lambda bi, ti: (bi, 0)),
                pl.BlockSpec((b_block, H), lambda bi, ti: (bi, 0)),
            ),
            scratch_shapes=[
                pltpu.VMEM((t_block, b_block, G), jnp.float32),  # per-block precomputed gates
                pltpu.VMEM((b_block, H), jnp.float32),           # h carried across time blocks
                pltpu.VMEM((b_block, H), jnp.float32),           # c carried across time blocks
            ]),
        compiler_params=pltpu.CompilerParams(
            dimension_semantics=("parallel", "arbitrary"),
            vmem_limit_bytes=vmem_limit),
    )(x_tbd, wih_t, whh_t, b_row, h0, c0)


# ----------------------------------------------------------------------------
# DecoderLSTM forward: multi-layer LSTM(x, (h_0, c_0)) followed by Linear over the sequence.
# ----------------------------------------------------------------------------
def decoder_lstm_forward(x_bto, h0, c0, params, hidden_size, num_layers,
                         compute_dtype=jnp.float32, t_block_target=128):
    """x_bto: (B, T, output_size); h0/c0: (num_layers, B, hidden_size) f32.
    Returns (output (B, T, output_size) f32, h_n, c_n)."""
    B, T, D0 = x_bto.shape
    H = hidden_size
    B_pad = ((B + 7) // 8) * 8
    vmem_limit = _vmem_limit_bytes()

    x = jnp.transpose(x_bto, (1, 0, 2))                   # (T, B, D) time-major
    if B_pad != B:
        pad = B_pad - B
        x = jnp.pad(x, ((0, 0), (0, pad), (0, 0)))
        h0 = jnp.pad(h0, ((0, 0), (0, pad), (0, 0)))
        c0 = jnp.pad(c0, ((0, 0), (0, pad), (0, 0)))

    # Batch chunking: a leading "parallel" grid axis lets v7x split the recurrence across
    # its 2 TensorCores; single chunk (harmless) on v5e/v6e or small batches.
    b_block = B_pad // 2 if (B_pad >= 16 and (B_pad // 2) % 8 == 0) else B_pad

    elem = jnp.dtype(compute_dtype).itemsize
    t_block = _pick_t_block(T, b_block, max(D0, H), H, elem, elem, vmem_limit,
                            target=t_block_target)
    T_pad = (-(-T // t_block)) * t_block
    if T_pad != T:  # pad the tail; carry is masked in-kernel at t >= T
        x = jnp.pad(x, ((0, T_pad - T), (0, 0), (0, 0)))

    layer_in = x.astype(compute_dtype)
    h_out, c_out = [], []
    for l in range(num_layers):
        p = params["lstm"][l]
        out_seq, h_f, c_f = _run_lstm_layer(
            layer_in,
            p["wih_t"].astype(compute_dtype),
            p["whh_t"].astype(compute_dtype),
            p["b"], h0[l], c0[l],
            t_total=T, t_block=t_block, b_block=b_block,
            out_dtype=compute_dtype, vmem_limit=vmem_limit)
        h_out.append(h_f)
        c_out.append(c_f)
        layer_in = out_seq

    # ff head over the whole (padded) output sequence as one tiled matmul.
    O = params["ff"]["w_t"].shape[1]
    y = _linear(layer_in.reshape(T_pad * B_pad, H),
                params["ff"]["w_t"].astype(compute_dtype),
                params["ff"]["b"], out_dtype=jnp.float32, vmem_limit=vmem_limit)
    y = y.reshape(T_pad, B_pad, O)[:T, :B]
    y = jnp.transpose(y, (1, 0, 2))                        # (B, T, O)

    h_n = jnp.stack(h_out, axis=0)[:, :B]
    c_n = jnp.stack(c_out, axis=0)[:, :B]
    return y, h_n, c_n


# ----------------------------------------------------------------------------
# Pure-JAX reference (lax.scan) for verification.
# ----------------------------------------------------------------------------
def _ref_lstm_layer(x_tbd, wih_t, whh_t, b_row, h0, c0):
    H = whh_t.shape[0]

    def step(carry, x_t):
        h, c = carry
        gates = x_t @ wih_t + h @ whh_t + b_row[0]
        i = jax.nn.sigmoid(gates[:, :H])
        f = jax.nn.sigmoid(gates[:, H:2 * H])
        g = jnp.tanh(gates[:, 2 * H:3 * H])
        o = jax.nn.sigmoid(gates[:, 3 * H:4 * H])
        c = f * c + i * g
        h = o * jnp.tanh(c)
        return (h, c), h

    (h, c), ys = jax.lax.scan(step, (h0, c0), x_tbd)
    return ys, h, c


def decoder_lstm_reference(x_bto, h0, c0, params, hidden_size, num_layers):
    x = jnp.transpose(x_bto, (1, 0, 2))
    layer_in = x
    h_out, c_out = [], []
    for l in range(num_layers):
        p = params["lstm"][l]
        out_seq, h_f, c_f = _ref_lstm_layer(layer_in, p["wih_t"], p["whh_t"], p["b"],
                                            h0[l], c0[l])
        h_out.append(h_f)
        c_out.append(c_f)
        layer_in = out_seq
    y = layer_in @ params["ff"]["w_t"] + params["ff"]["b"][0]
    y = jnp.transpose(y, (1, 0, 2))
    return y, jnp.stack(h_out, 0), jnp.stack(c_out, 0)


# ----------------------------------------------------------------------------
# Deterministic parameter init (matches nn.LSTM / nn.Linear shapes; uniform(-1/sqrt(H), 1/sqrt(H))).
# ----------------------------------------------------------------------------
def init_params(key, output_size, hidden_size, num_layers):
    params = {"lstm": [], "ff": None}
    k = 1.0 / jnp.sqrt(hidden_size)
    for l in range(num_layers):
        d_in = output_size if l == 0 else hidden_size
        key, k1, k2, k3, k4 = jax.random.split(key, 5)
        w_ih = jax.random.uniform(k1, (4 * hidden_size, d_in), jnp.float32, -k, k)
        w_hh = jax.random.uniform(k2, (4 * hidden_size, hidden_size), jnp.float32, -k, k)
        b_ih = jax.random.uniform(k3, (4 * hidden_size,), jnp.float32, -k, k)
        b_hh = jax.random.uniform(k4, (4 * hidden_size,), jnp.float32, -k, k)
        params["lstm"].append({
            "wih_t": w_ih.T,                                  # (D_in, 4H)  for x @ W_ih^T
            "whh_t": w_hh.T,                                  # (H, 4H)    for h @ W_hh^T
            "b": (b_ih + b_hh).reshape(1, 4 * hidden_size),   # fused biases, kept f32
        })
    key, k1, k2 = jax.random.split(key, 3)
    w_ff = jax.random.uniform(k1, (output_size, hidden_size), jnp.float32, -k, k)
    b_ff = jax.random.uniform(k2, (output_size,), jnp.float32, -k, k)
    params["ff"] = {"w_t": w_ff.T, "b": b_ff.reshape(1, output_size)}
    return params


if __name__ == "__main__":
    B, T = 2, 8
    output_size, hidden_size, num_layers = 16, 32, 2

    key = jax.random.PRNGKey(0)
    key, kx, kh, kc = jax.random.split(key, 4)
    x = jax.random.normal(kx, (B, T, output_size), dtype=jnp.float32)
    h0 = jax.random.normal(kh, (num_layers, B, hidden_size), dtype=jnp.float32)
    c0 = jax.random.normal(kc, (num_layers, B, hidden_size), dtype=jnp.float32)

    params = init_params(key, output_size, hidden_size, num_layers)

    y_ref, h_ref, c_ref = decoder_lstm_reference(x, h0, c0, params, hidden_size, num_layers)

    # f32 path: tight check against the lax.scan reference.
    fwd32 = jax.jit(functools.partial(
        decoder_lstm_forward, hidden_size=hidden_size, num_layers=num_layers,
        compute_dtype=jnp.float32))
    y, h_n, c_n = fwd32(x, h0, c0, params)
    jax.block_until_ready((y, h_n, c_n))
    assert y.shape == (B, T, output_size)
    assert h_n.shape == (num_layers, B, hidden_size)
    assert c_n.shape == (num_layers, B, hidden_size)
    assert jnp.allclose(y, y_ref, atol=2e-4, rtol=2e-4)
    assert jnp.allclose(h_n, h_ref, atol=2e-4, rtol=2e-4)
    assert jnp.allclose(c_n, c_ref, atol=2e-4, rtol=2e-4)

    # bf16 matmul-operand path (halves weight + inter-layer activation HBM traffic; f32
    # accumulation and f32 h/c state): loose check only, as recommended.
    fwd16 = jax.jit(functools.partial(
        decoder_lstm_forward, hidden_size=hidden_size, num_layers=num_layers,
        compute_dtype=jnp.bfloat16))
    y16, h16, c16 = fwd16(x, h0, c0, params)
    jax.block_until_ready((y16, h16, c16))
    assert jnp.allclose(y16, y_ref, atol=1e-1, rtol=1e-1)
    assert jnp.allclose(h16, h_ref, atol=1e-1, rtol=1e-1)
    assert jnp.allclose(c16, c_ref, atol=1e-1, rtol=1e-1)

    print("KERNEL_OK")
</pallas_src>

<mosaic_0001>
module attributes {stable_mosaic.version = 11 : i64} {
  func.func @_lstm_layer_kernel(%arg0: i32, %arg1: i32, %arg2: memref<8x8x16xf32, #tpu.memory_space<vmem>>, %arg3: memref<16x128xf32, #tpu.memory_space<vmem>>, %arg4: memref<32x128xf32, #tpu.memory_space<vmem>>, %arg5: memref<1x128xf32, #tpu.memory_space<vmem>>, %arg6: memref<8x32xf32, #tpu.memory_space<vmem>>, %arg7: memref<8x32xf32, #tpu.memory_space<vmem>>, %arg8: memref<8x8x32xf32, #tpu.memory_space<vmem>>, %arg9: memref<8x32xf32, #tpu.memory_space<vmem>>, %arg10: memref<8x32xf32, #tpu.memory_space<vmem>>, %arg11: memref<8x8x128xf32, #tpu.memory_space<vmem>>, %arg12: memref<8x32xf32, #tpu.memory_space<vmem>>, %arg13: memref<8x32xf32, #tpu.memory_space<vmem>>) attributes {dimension_semantics = [#tpu.dimension_semantics<parallel>, #tpu.dimension_semantics<arbitrary>], iteration_bounds = array<i64: 1, 1>, scalar_prefetch = 0 : i64, scratch_operands = 3 : i64, tpu.core_type = #tpu.core_type<tc>, window_params = [{transform_indices = @transform_0, window_bounds = array<i64: 8, 8, 16>}, {pipeline_mode = #tpu.pipeline_mode<synchronous>, transform_indices = @transform_1, window_bounds = array<i64: 16, 128>}, {pipeline_mode = #tpu.pipeline_mode<synchronous>, transform_indices = @transform_2, window_bounds = array<i64: 32, 128>}, {pipeline_mode = #tpu.pipeline_mode<synchronous>, transform_indices = @transform_3, window_bounds = array<i64: 1, 128>}, {transform_indices = @transform_4, window_bounds = array<i64: 8, 32>}, {transform_indices = @transform_5, window_bounds = array<i64: 8, 32>}, {transform_indices = @transform_6, window_bounds = array<i64: 8, 8, 32>}, {transform_indices = @transform_7, window_bounds = array<i64: 8, 32>}, {transform_indices = @transform_8, window_bounds = array<i64: 8, 32>}]} {
    %c0_i32 = arith.constant 0 : i32
    %0 = arith.cmpi eq, %arg1, %c0_i32 : i32
    %1 = arith.extui %0 : i1 to i32
    %c0_i32_0 = arith.constant 0 : i32
    %2 = arith.cmpi ne, %1, %c0_i32_0 : i32
    scf.if %2 {
      %c0_135 = arith.constant 0 : index
      %c0_136 = arith.constant 0 : index
      %340 = vector.load %arg6[%c0_135, %c0_136] : memref<8x32xf32, #tpu.memory_space<vmem>>, vector<8x32xf32>
      %c0_137 = arith.constant 0 : index
      %c0_138 = arith.constant 0 : index
      %341 = vector.load %arg12[%c0_137, %c0_138] : memref<8x32xf32, #tpu.memory_space<vmem>>, vector<8x32xf32>
      tpu.vector_store %arg12[%c0_137, %c0_138], %340 {strides = array<i32>} : memref<8x32xf32, #tpu.memory_space<vmem>>, vector<8x32xf32>,
      %c0_139 = arith.constant 0 : index
      %c0_140 = arith.constant 0 : index
      %342 = vector.load %arg7[%c0_139, %c0_140] : memref<8x32xf32, #tpu.memory_space<vmem>>, vector<8x32xf32>
      %c0_141 = arith.constant 0 : index
      %c0_142 = arith.constant 0 : index
      %343 = vector.load %arg13[%c0_141, %c0_142] : memref<8x32xf32, #tpu.memory_space<vmem>>, vector<8x32xf32>
      tpu.vector_store %arg13[%c0_141, %c0_142], %342 {strides = array<i32>} : memref<8x32xf32, #tpu.memory_space<vmem>>, vector<8x32xf32>,
    } else {
    }
    %c0 = arith.constant 0 : index
    %c0_1 = arith.constant 0 : index
    %c0_2 = arith.constant 0 : index
    %3 = vector.load %arg2[%c0, %c0_1, %c0_2] : memref<8x8x16xf32, #tpu.memory_space<vmem>>, vector<8x8x16xf32>
    %4 = vector.shape_cast %3 : vector<8x8x16xf32> to vector<64x16xf32>
    %c0_3 = arith.constant 0 : index
    %c0_4 = arith.constant 0 : index
    %5 = vector.load %arg3[%c0_3, %c0_4] : memref<16x128xf32, #tpu.memory_space<vmem>>, vector<16x128xf32>
    %cst = arith.constant dense<0.000000e+00> : vector<64x128xf32>
    %6 = tpu.matmul %4, %5, %cst {dimension_numbers = #tpu.dot_dimension_numbers<[1], [0], [0], [1], [0, 0, 1, 1], [], []>} : vector<64x16xf32>, vector<16x128xf32>, vector<64x128xf32> -> vector<64x128xf32>
    %c0_5 = arith.constant 0 : index
    %c0_6 = arith.constant 0 : index
    %7 = vector.load %arg5[%c0_5, %c0_6] : memref<1x128xf32, #tpu.memory_space<vmem>>, vector<1x128xf32>
    %8 = vector.broadcast %7 : vector<1x128xf32> to vector<64x128xf32>
    %9 = arith.addf %6, %8 : vector<64x128xf32>
    %10 = vector.shape_cast %9 : vector<64x128xf32> to vector<8x8x128xf32>
    %c0_7 = arith.constant 0 : index
    %c0_8 = arith.constant 0 : index
    %c0_9 = arith.constant 0 : index
    %11 = vector.load %arg11[%c0_7, %c0_8, %c0_9] : memref<8x8x128xf32, #tpu.memory_space<vmem>>, vector<8x8x128xf32>
    tpu.vector_store %arg11[%c0_7, %c0_8, %c0_9], %10 {strides = array<i32>} : memref<8x8x128xf32, #tpu.memory_space<vmem>>, vector<8x8x128xf32>,
    %c0_10 = arith.constant 0 : index
    %c0_11 = arith.constant 0 : index
    %12 = vector.load %arg4[%c0_10, %c0_11] : memref<32x128xf32, #tpu.memory_space<vmem>>, vector<32x128xf32>
    %c0_12 = arith.constant 0 : index
    %c0_13 = arith.constant 0 : index
    %13 = vector.load %arg12[%c0_12, %c0_13] : memref<8x32xf32, #tpu.memory_space<vmem>>, vector<8x32xf32>
    %c0_14 = arith.constant 0 : index
    %c0_15 = arith.constant 0 : index
    %14 = vector.load %arg13[%c0_14, %c0_15] : memref<8x32xf32, #tpu.memory_space<vmem>>, vector<8x32xf32>
    %c0_i32_16 = arith.constant 0 : i32
    %15 = arith.index_cast %c0_i32_16 : i32 to index
    %c0_17 = arith.constant 0 : index
    %c0_18 = arith.constant 0 : index
    %16 = vector.load %arg11[%15, %c0_17, %c0_18] : memref<8x8x128xf32, #tpu.memory_space<vmem>>, vector<1x8x128xf32>
    %17 = vector.shape_cast %16 : vector<1x8x128xf32> to vector<8x128xf32>
    %cst_19 = arith.constant dense<0.000000e+00> : vector<8x128xf32>
    %18 = tpu.matmul %13, %12, %cst_19 {dimension_numbers = #tpu.dot_dimension_numbers<[1], [0], [0], [1], [0, 0, 1, 1], [], []>} : vector<8x32xf32>, vector<32x128xf32>, vector<8x128xf32> -> vector<8x128xf32>
    %19 = arith.addf %17, %18 : vector<8x128xf32>
    %20 = vector.extract_strided_slice %19 {offsets = [0, 0], sizes = [8, 32], strides = [1, 1]} : vector<8x128xf32> to vector<8x32xf32>
    %cst_20 = arith.constant 5.000000e-01 : f32
    %21 = vector.broadcast %cst_20 : f32 to vector<8x32xf32>
    %22 = arith.mulf %21, %20 : vector<8x32xf32>
    %23 = math.tanh %22 : vector<8x32xf32>
    %cst_21 = arith.constant 5.000000e-01 : f32
    %24 = vector.broadcast %cst_21 : f32 to vector<8x32xf32>
    %25 = arith.mulf %24, %23 : vector<8x32xf32>
    %cst_22 = arith.constant 5.000000e-01 : f32
    %26 = vector.broadcast %cst_22 : f32 to vector<8x32xf32>
    %27 = arith.addf %25, %26 : vector<8x32xf32>
    %28 = vector.extract_strided_slice %19 {offsets = [0, 32], sizes = [8, 32], strides = [1, 1]} : vector<8x128xf32> to vector<8x32xf32>
    %cst_23 = arith.constant 5.000000e-01 : f32
    %29 = vector.broadcast %cst_23 : f32 to vector<8x32xf32>
    %30 = arith.mulf %29, %28 : vector<8x32xf32>
    %31 = math.tanh %30 : vector<8x32xf32>
    %cst_24 = arith.constant 5.000000e-01 : f32
    %32 = vector.broadcast %cst_24 : f32 to vector<8x32xf32>
    %33 = arith.mulf %32, %31 : vector<8x32xf32>
    %cst_25 = arith.constant 5.000000e-01 : f32
    %34 = vector.broadcast %cst_25 : f32 to vector<8x32xf32>
    %35 = arith.addf %33, %34 : vector<8x32xf32>
    %36 = vector.extract_strided_slice %19 {offsets = [0, 64], sizes = [8, 32], strides = [1, 1]} : vector<8x128xf32> to vector<8x32xf32>
    %37 = math.tanh %36 : vector<8x32xf32>
    %38 = vector.extract_strided_slice %19 {offsets = [0, 96], sizes = [8, 32], strides = [1, 1]} : vector<8x128xf32> to vector<8x32xf32>
    %cst_26 = arith.constant 5.000000e-01 : f32
    %39 = vector.broadcast %cst_26 : f32 to vector<8x32xf32>
    %40 = arith.mulf %39, %38 : vector<8x32xf32>
    %41 = math.tanh %40 : vector<8x32xf32>
    %cst_27 = arith.constant 5.000000e-01 : f32
    %42 = vector.broadcast %cst_27 : f32 to vector<8x32xf32>
    %43 = arith.mulf %42, %41 : vector<8x32xf32>
    %cst_28 = arith.constant 5.000000e-01 : f32
    %44 = vector.broadcast %cst_28 : f32 to vector<8x32xf32>
    %45 = arith.addf %43, %44 : vector<8x32xf32>
    %46 = arith.mulf %35, %14 : vector<8x32xf32>
    %47 = arith.mulf %27, %37 : vector<8x32xf32>
    %48 = arith.addf %46, %47 : vector<8x32xf32>
    %49 = math.tanh %48 : vector<8x32xf32>
    %50 = arith.mulf %45, %49 : vector<8x32xf32>
    %51 = arith.index_cast %c0_i32_16 : i32 to index
    %c0_29 = arith.constant 0 : index
    %c0_30 = arith.constant 0 : index
    %52 = vector.load %arg8[%51, %c0_29, %c0_30] : memref<8x8x32xf32, #tpu.memory_space<vmem>>, vector<1x8x32xf32>
    %53 = vector.shape_cast %52 : vector<1x8x32xf32> to vector<8x32xf32>
    %54 = vector.shape_cast %50 : vector<8x32xf32> to vector<1x8x32xf32>
    tpu.vector_store %arg8[%51, %c0_29, %c0_30], %54 {strides = array<i32>} : memref<8x8x32xf32, #tpu.memory_space<vmem>>, vector<1x8x32xf32>,
    %c1_i32 = arith.constant 1 : i32
    %55 = arith.index_cast %c1_i32 : i32 to index
    %c0_31 = arith.constant 0 : index
    %c0_32 = arith.constant 0 : index
    %56 = vector.load %arg11[%55, %c0_31, %c0_32] : memref<8x8x128xf32, #tpu.memory_space<vmem>>, vector<1x8x128xf32>
    %57 = vector.shape_cast %56 : vector<1x8x128xf32> to vector<8x128xf32>
    %cst_33 = arith.constant dense<0.000000e+00> : vector<8x128xf32>
    %58 = tpu.matmul %50, %12, %cst_33 {dimension_numbers = #tpu.dot_dimension_numbers<[1], [0], [0], [1], [0, 0, 1, 1], [], []>} : vector<8x32xf32>, vector<32x128xf32>, vector<8x128xf32> -> vector<8x128xf32>
    %59 = arith.addf %57, %58 : vector<8x128xf32>
    %60 = vector.extract_strided_slice %59 {offsets = [0, 0], sizes = [8, 32], strides = [1, 1]} : vector<8x128xf32> to vector<8x32xf32>
    %cst_34 = arith.constant 5.000000e-01 : f32
    %61 = vector.broadcast %cst_34 : f32 to vector<8x32xf32>
    %62 = arith.mulf %61, %60 : vector<8x32xf32>
    %63 = math.tanh %62 : vector<8x32xf32>
    %cst_35 = arith.constant 5.000000e-01 : f32
    %64 = vector.broadcast %cst_35 : f32 to vector<8x32xf32>
    %65 = arith.mulf %64, %63 : vector<8x32xf32>
    %cst_36 = arith.constant 5.000000e-01 : f32
    %66 = vector.broadcast %cst_36 : f32 to vector<8x32xf32>
    %67 = arith.addf %65, %66 : vector<8x32xf32>
    %68 = vector.extract_strided_slice %59 {offsets = [0, 32], sizes = [8, 32], strides = [1, 1]} : vector<8x128xf32> to vector<8x32xf32>
    %cst_37 = arith.constant 5.000000e-01 : f32
    %69 = vector.broadcast %cst_37 : f32 to vector<8x32xf32>
    %70 = arith.mulf %69, %68 : vector<8x32xf32>
    %71 = math.tanh %70 : vector<8x32xf32>
    %cst_38 = arith.constant 5.000000e-01 : f32
    %72 = vector.broadcast %cst_38 : f32 to vector<8x32xf32>
    %73 = arith.mulf %72, %71 : vector<8x32xf32>
    %cst_39 = arith.constant 5.000000e-01 : f32
    %74 = vector.broadcast %cst_39 : f32 to vector<8x32xf32>
    %75 = arith.addf %73, %74 : vector<8x32xf32>
    %76 = vector.extract_strided_slice %59 {offsets = [0, 64], sizes = [8, 32], strides = [1, 1]} : vector<8x128xf32> to vector<8x32xf32>
    %77 = math.tanh %76 : vector<8x32xf32>
    %78 = vector.extract_strided_slice %59 {offsets = [0, 96], sizes = [8, 32], strides = [1, 1]} : vector<8x128xf32> to vector<8x32xf32>
    %cst_40 = arith.constant 5.000000e-01 : f32
    %79 = vector.broadcast %cst_40 : f32 to vector<8x32xf32>
    %80 = arith.mulf %79, %78 : vector<8x32xf32>
    %81 = math.tanh %80 : vector<8x32xf32>
    %cst_41 = arith.constant 5.000000e-01 : f32
    %82 = vector.broadcast %cst_41 : f32 to vector<8x32xf32>
    %83 = arith.mulf %82, %81 : vector<8x32xf32>
    %cst_42 = arith.constant 5.000000e-01 : f32
    %84 = vector.broadcast %cst_42 : f32 to vector<8x32xf32>
    %85 = arith.addf %83, %84 : vector<8x32xf32>
    %86 = arith.mulf %75, %48 : vector<8x32xf32>
    %87 = arith.mulf %67, %77 : vector<8x32xf32>
    %88 = arith.addf %86, %87 : vector<8x32xf32>
    %89 = math.tanh %88 : vector<8x32xf32>
    %90 = arith.mulf %85, %89 : vector<8x32xf32>
    %91 = arith.index_cast %c1_i32 : i32 to index
    %c0_43 = arith.constant 0 : index
    %c0_44 = arith.constant 0 : index
    %92 = vector.load %arg8[%91, %c0_43, %c0_44] : memref<8x8x32xf32, #tpu.memory_space<vmem>>, vector<1x8x32xf32>
    %93 = vector.shape_cast %92 : vector<1x8x32xf32> to vector<8x32xf32>
    %94 = vector.shape_cast %90 : vector<8x32xf32> to vector<1x8x32xf32>
    tpu.vector_store %arg8[%91, %c0_43, %c0_44], %94 {strides = array<i32>} : memref<8x8x32xf32, #tpu.memory_space<vmem>>, vector<1x8x32xf32>,
    %c2_i32 = arith.constant 2 : i32
    %95 = arith.index_cast %c2_i32 : i32 to index
    %c0_45 = arith.constant 0 : index
    %c0_46 = arith.constant 0 : index
    %96 = vector.load %arg11[%95, %c0_45, %c0_46] : memref<8x8x128xf32, #tpu.memory_space<vmem>>, vector<1x8x128xf32>
    %97 = vector.shape_cast %96 : vector<1x8x128xf32> to vector<8x128xf32>
    %cst_47 = arith.constant dense<0.000000e+00> : vector<8x128xf32>
    %98 = tpu.matmul %90, %12, %cst_47 {dimension_numbers = #tpu.dot_dimension_numbers<[1], [0], [0], [1], [0, 0, 1, 1], [], []>} : vector<8x32xf32>, vector<32x128xf32>, vector<8x128xf32> -> vector<8x128xf32>
    %99 = arith.addf %97, %98 : vector<8x128xf32>
    %100 = vector.extract_strided_slice %99 {offsets = [0, 0], sizes = [8, 32], strides = [1, 1]} : vector<8x128xf32> to vector<8x32xf32>
    %cst_48 = arith.constant 5.000000e-01 : f32
    %101 = vector.broadcast %cst_48 : f32 to vector<8x32xf32>
    %102 = arith.mulf %101, %100 : vector<8x32xf32>
    %103 = math.tanh %102 : vector<8x32xf32>
    %cst_49 = arith.constant 5.000000e-01 : f32
    %104 = vector.broadcast %cst_49 : f32 to vector<8x32xf32>
    %105 = arith.mulf %104, %103 : vector<8x32xf32>
    %cst_50 = arith.constant 5.000000e-01 : f32
    %106 = vector.broadcast %cst_50 : f32 to vector<8x32xf32>
    %107 = arith.addf %105, %106 : vector<8x32xf32>
    %108 = vector.extract_strided_slice %99 {offsets = [0, 32], sizes = [8, 32], strides = [1, 1]} : vector<8x128xf32> to vector<8x32xf32>
    %cst_51 = arith.constant 5.000000e-01 : f32
    %109 = vector.broadcast %cst_51 : f32 to vector<8x32xf32>
    %110 = arith.mulf %109, %108 : vector<8x32xf32>
    %111 = math.tanh %110 : vector<8x32xf32>
    %cst_52 = arith.constant 5.000000e-01 : f32
    %112 = vector.broadcast %cst_52 : f32 to vector<8x32xf32>
    %113 = arith.mulf %112, %111 : vector<8x32xf32>
    %cst_53 = arith.constant 5.000000e-01 : f32
    %114 = vector.broadcast %cst_53 : f32 to vector<8x32xf32>
    %115 = arith.addf %113, %114 : vector<8x32xf32>
    %116 = vector.extract_strided_slice %99 {offsets = [0, 64], sizes = [8, 32], strides = [1, 1]} : vector<8x128xf32> to vector<8x32xf32>
    %117 = math.tanh %116 : vector<8x32xf32>
    %118 = vector.extract_strided_slice %99 {offsets = [0, 96], sizes = [8, 32], strides = [1, 1]} : vector<8x128xf32> to vector<8x32xf32>
    %cst_54 = arith.constant 5.000000e-01 : f32
    %119 = vector.broadcast %cst_54 : f32 to vector<8x32xf32>
    %120 = arith.mulf %119, %118 : vector<8x32xf32>
    %121 = math.tanh %120 : vector<8x32xf32>
    %cst_55 = arith.constant 5.000000e-01 : f32
    %122 = vector.broadcast %cst_55 : f32 to vector<8x32xf32>
    %123 = arith.mulf %122, %121 : vector<8x32xf32>
    %cst_56 = arith.constant 5.000000e-01 : f32
    %124 = vector.broadcast %cst_56 : f32 to vector<8x32xf32>
    %125 = arith.addf %123, %124 : vector<8x32xf32>
    %126 = arith.mulf %115, %88 : vector<8x32xf32>
    %127 = arith.mulf %107, %117 : vector<8x32xf32>
    %128 = arith.addf %126, %127 : vector<8x32xf32>
    %129 = math.tanh %128 : vector<8x32xf32>
    %130 = arith.mulf %125, %129 : vector<8x32xf32>
    %131 = arith.index_cast %c2_i32 : i32 to index
    %c0_57 = arith.constant 0 : index
    %c0_58 = arith.constant 0 : index
    %132 = vector.load %arg8[%131, %c0_57, %c0_58] : memref<8x8x32xf32, #tpu.memory_space<vmem>>, vector<1x8x32xf32>
    %133 = vector.shape_cast %132 : vector<1x8x32xf32> to vector<8x32xf32>
    %134 = vector.shape_cast %130 : vector<8x32xf32> to vector<1x8x32xf32>
    tpu.vector_store %arg8[%131, %c0_57, %c0_58], %134 {strides = array<i32>} : memref<8x8x32xf32, #tpu.memory_space<vmem>>, vector<1x8x32xf32>,
    %c3_i32 = arith.constant 3 : i32
    %135 = arith.index_cast %c3_i32 : i32 to index
    %c0_59 = arith.constant 0 : index
    %c0_60 = arith.constant 0 : index
    %136 = vector.load %arg11[%135, %c0_59, %c0_60] : memref<8x8x128xf32, #tpu.memory_space<vmem>>, vector<1x8x128xf32>
    %137 = vector.shape_cast %136 : vector<1x8x128xf32> to vector<8x128xf32>
    %cst_61 = arith.constant dense<0.000000e+00> : vector<8x128xf32>
    %138 = tpu.matmul %130, %12, %cst_61 {dimension_numbers = #tpu.dot_dimension_numbers<[1], [0], [0], [1], [0, 0, 1, 1], [], []>} : vector<8x32xf32>, vector<32x128xf32>, vector<8x128xf32> -> vector<8x128xf32>
    %139 = arith.addf %137, %138 : vector<8x128xf32>
    %140 = vector.extract_strided_slice %139 {offsets = [0, 0], sizes = [8, 32], strides = [1, 1]} : vector<8x128xf32> to vector<8x32xf32>
    %cst_62 = arith.constant 5.000000e-01 : f32
    %141 = vector.broadcast %cst_62 : f32 to vector<8x32xf32>
    %142 = arith.mulf %141, %140 : vector<8x32xf32>
    %143 = math.tanh %142 : vector<8x32xf32>
    %cst_63 = arith.constant 5.000000e-01 : f32
    %144 = vector.broadcast %cst_63 : f32 to vector<8x32xf32>
    %145 = arith.mulf %144, %143 : vector<8x32xf32>
    %cst_64 = arith.constant 5.000000e-01 : f32
    %146 = vector.broadcast %cst_64 : f32 to vector<8x32xf32>
    %147 = arith.addf %145, %146 : vector<8x32xf32>
    %148 = vector.extract_strided_slice %139 {offsets = [0, 32], sizes = [8, 32], strides = [1, 1]} : vector<8x128xf32> to vector<8x32xf32>
    %cst_65 = arith.constant 5.000000e-01 : f32
    %149 = vector.broadcast %cst_65 : f32 to vector<8x32xf32>
    %150 = arith.mulf %149, %148 : vector<8x32xf32>
    %151 = math.tanh %150 : vector<8x32xf32>
    %cst_66 = arith.constant 5.000000e-01 : f32
    %152 = vector.broadcast %cst_66 : f32 to vector<8x32xf32>
    %153 = arith.mulf %152, %151 : vector<8x32xf32>
    %cst_67 = arith.constant 5.000000e-01 : f32
    %154 = vector.broadcast %cst_67 : f32 to vector<8x32xf32>
    %155 = arith.addf %153, %154 : vector<8x32xf32>
    %156 = vector.extract_strided_slice %139 {offsets = [0, 64], sizes = [8, 32], strides = [1, 1]} : vector<8x128xf32> to vector<8x32xf32>
    %157 = math.tanh %156 : vector<8x32xf32>
    %158 = vector.extract_strided_slice %139 {offsets = [0, 96], sizes = [8, 32], strides = [1, 1]} : vector<8x128xf32> to vector<8x32xf32>
    %cst_68 = arith.constant 5.000000e-01 : f32
    %159 = vector.broadcast %cst_68 : f32 to vector<8x32xf32>
    %160 = arith.mulf %159, %158 : vector<8x32xf32>
    %161 = math.tanh %160 : vector<8x32xf32>
    %cst_69 = arith.constant 5.000000e-01 : f32
    %162 = vector.broadcast %cst_69 : f32 to vector<8x32xf32>
    %163 = arith.mulf %162, %161 : vector<8x32xf32>
    %cst_70 = arith.constant 5.000000e-01 : f32
    %164 = vector.broadcast %cst_70 : f32 to vector<8x32xf32>
    %165 = arith.addf %163, %164 : vector<8x32xf32>
    %166 = arith.mulf %155, %128 : vector<8x32xf32>
    %167 = arith.mulf %147, %157 : vector<8x32xf32>
    %168 = arith.addf %166, %167 : vector<8x32xf32>
    %169 = math.tanh %168 : vector<8x32xf32>
    %170 = arith.mulf %165, %169 : vector<8x32xf32>
    %171 = arith.index_cast %c3_i32 : i32 to index
    %c0_71 = arith.constant 0 : index
    %c0_72 = arith.constant 0 : index
    %172 = vector.load %arg8[%171, %c0_71, %c0_72] : memref<8x8x32xf32, #tpu.memory_space<vmem>>, vector<1x8x32xf32>
    %173 = vector.shape_cast %172 : vector<1x8x32xf32> to vector<8x32xf32>
    %174 = vector.shape_cast %170 : vector<8x32xf32> to vector<1x8x32xf32>
    tpu.vector_store %arg8[%171, %c0_71, %c0_72], %174 {strides = array<i32>} : memref<8x8x32xf32, #tpu.memory_space<vmem>>, vector<1x8x32xf32>,
    %c4_i32 = arith.constant 4 : i32
    %175 = arith.index_cast %c4_i32 : i32 to index
    %c0_73 = arith.constant 0 : index
    %c0_74 = arith.constant 0 : index
    %176 = vector.load %arg11[%175, %c0_73, %c0_74] : memref<8x8x128xf32, #tpu.memory_space<vmem>>, vector<1x8x128xf32>
    %177 = vector.shape_cast %176 : vector<1x8x128xf32> to vector<8x128xf32>
    %cst_75 = arith.constant dense<0.000000e+00> : vector<8x128xf32>
    %178 = tpu.matmul %170, %12, %cst_75 {dimension_numbers = #tpu.dot_dimension_numbers<[1], [0], [0], [1], [0, 0, 1, 1], [], []>} : vector<8x32xf32>, vector<32x128xf32>, vector<8x128xf32> -> vector<8x128xf32>
    %179 = arith.addf %177, %178 : vector<8x128xf32>
    %180 = vector.extract_strided_slice %179 {offsets = [0, 0], sizes = [8, 32], strides = [1, 1]} : vector<8x128xf32> to vector<8x32xf32>
    %cst_76 = arith.constant 5.000000e-01 : f32
    %181 = vector.broadcast %cst_76 : f32 to vector<8x32xf32>
    %182 = arith.mulf %181, %180 : vector<8x32xf32>
    %183 = math.tanh %182 : vector<8x32xf32>
    %cst_77 = arith.constant 5.000000e-01 : f32
    %184 = vector.broadcast %cst_77 : f32 to vector<8x32xf32>
    %185 = arith.mulf %184, %183 : vector<8x32xf32>
    %cst_78 = arith.constant 5.000000e-01 : f32
    %186 = vector.broadcast %cst_78 : f32 to vector<8x32xf32>
    %187 = arith.addf %185, %186 : vector<8x32xf32>
    %188 = vector.extract_strided_slice %179 {offsets = [0, 32], sizes = [8, 32], strides = [1, 1]} : vector<8x128xf32> to vector<8x32xf32>
    %cst_79 = arith.constant 5.000000e-01 : f32
    %189 = vector.broadcast %cst_79 : f32 to vector<8x32xf32>
    %190 = arith.mulf %189, %188 : vector<8x32xf32>
    %191 = math.tanh %190 : vector<8x32xf32>
    %cst_80 = arith.constant 5.000000e-01 : f32
    %192 = vector.broadcast %cst_80 : f32 to vector<8x32xf32>
    %193 = arith.mulf %192, %191 : vector<8x32xf32>
    %cst_81 = arith.constant 5.000000e-01 : f32
    %194 = vector.broadcast %cst_81 : f32 to vector<8x32xf32>
    %195 = arith.addf %193, %194 : vector<8x32xf32>
    %196 = vector.extract_strided_slice %179 {offsets = [0, 64], sizes = [8, 32], strides = [1, 1]} : vector<8x128xf32> to vector<8x32xf32>
    %197 = math.tanh %196 : vector<8x32xf32>
    %198 = vector.extract_strided_slice %179 {offsets = [0, 96], sizes = [8, 32], strides = [1, 1]} : vector<8x128xf32> to vector<8x32xf32>
    %cst_82 = arith.constant 5.000000e-01 : f32
    %199 = vector.broadcast %cst_82 : f32 to vector<8x32xf32>
    %200 = arith.mulf %199, %198 : vector<8x32xf32>
    %201 = math.tanh %200 : vector<8x32xf32>
    %cst_83 = arith.constant 5.000000e-01 : f32
    %202 = vector.broadcast %cst_83 : f32 to vector<8x32xf32>
    %203 = arith.mulf %202, %201 : vector<8x32xf32>
    %cst_84 = arith.constant 5.000000e-01 : f32
    %204 = vector.broadcast %cst_84 : f32 to vector<8x32xf32>
    %205 = arith.addf %203, %204 : vector<8x32xf32>
    %206 = arith.mulf %195, %168 : vector<8x32xf32>
    %207 = arith.mulf %187, %197 : vector<8x32xf32>
    %208 = arith.addf %206, %207 : vector<8x32xf32>
    %209 = math.tanh %208 : vector<8x32xf32>
    %210 = arith.mulf %205, %209 : vector<8x32xf32>
    %211 = arith.index_cast %c4_i32 : i32 to index
    %c0_85 = arith.constant 0 : index
    %c0_86 = arith.constant 0 : index
    %212 = vector.load %arg8[%211, %c0_85, %c0_86] : memref<8x8x32xf32, #tpu.memory_space<vmem>>, vector<1x8x32xf32>
    %213 = vector.shape_cast %212 : vector<1x8x32xf32> to vector<8x32xf32>
    %214 = vector.shape_cast %210 : vector<8x32xf32> to vector<1x8x32xf32>
    tpu.vector_store %arg8[%211, %c0_85, %c0_86], %214 {strides = array<i32>} : memref<8x8x32xf32, #tpu.memory_space<vmem>>, vector<1x8x32xf32>,
    %c5_i32 = arith.constant 5 : i32
    %215 = arith.index_cast %c5_i32 : i32 to index
    %c0_87 = arith.constant 0 : index
    %c0_88 = arith.constant 0 : index
    %216 = vector.load %arg11[%215, %c0_87, %c0_88] : memref<8x8x128xf32, #tpu.memory_space<vmem>>, vector<1x8x128xf32>
    %217 = vector.shape_cast %216 : vector<1x8x128xf32> to vector<8x128xf32>
    %cst_89 = arith.constant dense<0.000000e+00> : vector<8x128xf32>
    %218 = tpu.matmul %210, %12, %cst_89 {dimension_numbers = #tpu.dot_dimension_numbers<[1], [0], [0], [1], [0, 0, 1, 1], [], []>} : vector<8x32xf32>, vector<32x128xf32>, vector<8x128xf32> -> vector<8x128xf32>
    %219 = arith.addf %217, %218 : vector<8x128xf32>
    %220 = vector.extract_strided_slice %219 {offsets = [0, 0], sizes = [8, 32], strides = [1, 1]} : vector<8x128xf32> to vector<8x32xf32>
    %cst_90 = arith.constant 5.000000e-01 : f32
    %221 = vector.broadcast %cst_90 : f32 to vector<8x32xf32>
    %222 = arith.mulf %221, %220 : vector<8x32xf32>
    %223 = math.tanh %222 : vector<8x32xf32>
    %cst_91 = arith.constant 5.000000e-01 : f32
    %224 = vector.broadcast %cst_91 : f32 to vector<8x32xf32>
    %225 = arith.mulf %224, %223 : vector<8x32xf32>
    %cst_92 = arith.constant 5.000000e-01 : f32
    %226 = vector.broadcast %cst_92 : f32 to vector<8x32xf32>
    %227 = arith.addf %225, %226 : vector<8x32xf32>
    %228 = vector.extract_strided_slice %219 {offsets = [0, 32], sizes = [8, 32], strides = [1, 1]} : vector<8x128xf32> to vector<8x32xf32>
    %cst_93 = arith.constant 5.000000e-01 : f32
    %229 = vector.broadcast %cst_93 : f32 to vector<8x32xf32>
    %230 = arith.mulf %229, %228 : vector<8x32xf32>
    %231 = math.tanh %230 : vector<8x32xf32>
    %cst_94 = arith.constant 5.000000e-01 : f32
    %232 = vector.broadcast %cst_94 : f32 to vector<8x32xf32>
    %233 = arith.mulf %232, %231 : vector<8x32xf32>
    %cst_95 = arith.constant 5.000000e-01 : f32
    %234 = vector.broadcast %cst_95 : f32 to vector<8x32xf32>
    %235 = arith.addf %233, %234 : vector<8x32xf32>
    %236 = vector.extract_strided_slice %219 {offsets = [0, 64], sizes = [8, 32], strides = [1, 1]} : vector<8x128xf32> to vector<8x32xf32>
    %237 = math.tanh %236 : vector<8x32xf32>
    %238 = vector.extract_strided_slice %219 {offsets = [0, 96], sizes = [8, 32], strides = [1, 1]} : vector<8x128xf32> to vector<8x32xf32>
    %cst_96 = arith.constant 5.000000e-01 : f32
    %239 = vector.broadcast %cst_96 : f32 to vector<8x32xf32>
    %240 = arith.mulf %239, %238 : vector<8x32xf32>
    %241 = math.tanh %240 : vector<8x32xf32>
    %cst_97 = arith.constant 5.000000e-01 : f32
    %242 = vector.broadcast %cst_97 : f32 to vector<8x32xf32>
    %243 = arith.mulf %242, %241 : vector<8x32xf32>
    %cst_98 = arith.constant 5.000000e-01 : f32
    %244 = vector.broadcast %cst_98 : f32 to vector<8x32xf32>
    %245 = arith.addf %243, %244 : vector<8x32xf32>
    %246 = arith.mulf %235, %208 : vector<8x32xf32>
    %247 = arith.mulf %227, %237 : vector<8x32xf32>
    %248 = arith.addf %246, %247 : vector<8x32xf32>
    %249 = math.tanh %248 : vector<8x32xf32>
    %250 = arith.mulf %245, %249 : vector<8x32xf32>
    %251 = arith.index_cast %c5_i32 : i32 to index
    %c0_99 = arith.constant 0 : index
    %c0_100 = arith.constant 0 : index
    %252 = vector.load %arg8[%251, %c0_99, %c0_100] : memref<8x8x32xf32, #tpu.memory_space<vmem>>, vector<1x8x32xf32>
    %253 = vector.shape_cast %252 : vector<1x8x32xf32> to vector<8x32xf32>
    %254 = vector.shape_cast %250 : vector<8x32xf32> to vector<1x8x32xf32>
    tpu.vector_store %arg8[%251, %c0_99, %c0_100], %254 {strides = array<i32>} : memref<8x8x32xf32, #tpu.memory_space<vmem>>, vector<1x8x32xf32>,
    %c6_i32 = arith.constant 6 : i32
    %255 = arith.index_cast %c6_i32 : i32 to index
    %c0_101 = arith.constant 0 : index
    %c0_102 = arith.constant 0 : index
    %256 = vector.load %arg11[%255, %c0_101, %c0_102] : memref<8x8x128xf32, #tpu.memory_space<vmem>>, vector<1x8x128xf32>
    %257 = vector.shape_cast %256 : vector<1x8x128xf32> to vector<8x128xf32>
    %cst_103 = arith.constant dense<0.000000e+00> : vector<8x128xf32>
    %258 = tpu.matmul %250, %12, %cst_103 {dimension_numbers = #tpu.dot_dimension_numbers<[1], [0], [0], [1], [0, 0, 1, 1], [], []>} : vector<8x32xf32>, vector<32x128xf32>, vector<8x128xf32> -> vector<8x128xf32>
    %259 = arith.addf %257, %258 : vector<8x128xf32>
    %260 = vector.extract_strided_slice %259 {offsets = [0, 0], sizes = [8, 32], strides = [1, 1]} : vector<8x128xf32> to vector<8x32xf32>
    %cst_104 = arith.constant 5.000000e-01 : f32
    %261 = vector.broadcast %cst_104 : f32 to vector<8x32xf32>
    %262 = arith.mulf %261, %260 : vector<8x32xf32>
    %263 = math.tanh %262 : vector<8x32xf32>
    %cst_105 = arith.constant 5.000000e-01 : f32
    %264 = vector.broadcast %cst_105 : f32 to vector<8x32xf32>
    %265 = arith.mulf %264, %263 : vector<8x32xf32>
    %cst_106 = arith.constant 5.000000e-01 : f32
    %266 = vector.broadcast %cst_106 : f32 to vector<8x32xf32>
    %267 = arith.addf %265, %266 : vector<8x32xf32>
    %268 = vector.extract_strided_slice %259 {offsets = [0, 32], sizes = [8, 32], strides = [1, 1]} : vector<8x128xf32> to vector<8x32xf32>
    %cst_107 = arith.constant 5.000000e-01 : f32
    %269 = vector.broadcast %cst_107 : f32 to vector<8x32xf32>
    %270 = arith.mulf %269, %268 : vector<8x32xf32>
    %271 = math.tanh %270 : vector<8x32xf32>
    %cst_108 = arith.constant 5.000000e-01 : f32
    %272 = vector.broadcast %cst_108 : f32 to vector<8x32xf32>
    %273 = arith.mulf %272, %271 : vector<8x32xf32>
    %cst_109 = arith.constant 5.000000e-01 : f32
    %274 = vector.broadcast %cst_109 : f32 to vector<8x32xf32>
    %275 = arith.addf %273, %274 : vector<8x32xf32>
    %276 = vector.extract_strided_slice %259 {offsets = [0, 64], sizes = [8, 32], strides = [1, 1]} : vector<8x128xf32> to vector<8x32xf32>
    %277 = math.tanh %276 : vector<8x32xf32>
    %278 = vector.extract_strided_slice %259 {offsets = [0, 96], sizes = [8, 32], strides = [1, 1]} : vector<8x128xf32> to vector<8x32xf32>
    %cst_110 = arith.constant 5.000000e-01 : f32
    %279 = vector.broadcast %cst_110 : f32 to vector<8x32xf32>
    %280 = arith.mulf %279, %278 : vector<8x32xf32>
    %281 = math.tanh %280 : vector<8x32xf32>
    %cst_111 = arith.constant 5.000000e-01 : f32
    %282 = vector.broadcast %cst_111 : f32 to vector<8x32xf32>
    %283 = arith.mulf %282, %281 : vector<8x32xf32>
    %cst_112 = arith.constant 5.000000e-01 : f32
    %284 = vector.broadcast %cst_112 : f32 to vector<8x32xf32>
    %285 = arith.addf %283, %284 : vector<8x32xf32>
    %286 = arith.mulf %275, %248 : vector<8x32xf32>
    %287 = arith.mulf %267, %277 : vector<8x32xf32>
    %288 = arith.addf %286, %287 : vector<8x32xf32>
    %289 = math.tanh %288 : vector<8x32xf32>
    %290 = arith.mulf %285, %289 : vector<8x32xf32>
    %291 = arith.index_cast %c6_i32 : i32 to index
    %c0_113 = arith.constant 0 : index
    %c0_114 = arith.constant 0 : index
    %292 = vector.load %arg8[%291, %c0_113, %c0_114] : memref<8x8x32xf32, #tpu.memory_space<vmem>>, vector<1x8x32xf32>
    %293 = vector.shape_cast %292 : vector<1x8x32xf32> to vector<8x32xf32>
    %294 = vector.shape_cast %290 : vector<8x32xf32> to vector<1x8x32xf32>
    tpu.vector_store %arg8[%291, %c0_113, %c0_114], %294 {strides = array<i32>} : memref<8x8x32xf32, #tpu.memory_space<vmem>>, vector<1x8x32xf32>,
    %c7_i32 = arith.constant 7 : i32
    %295 = arith.index_cast %c7_i32 : i32 to index
    %c0_115 = arith.constant 0 : index
    %c0_116 = arith.constant 0 : index
    %296 = vector.load %arg11[%295, %c0_115, %c0_116] : memref<8x8x128xf32, #tpu.memory_space<vmem>>, vector<1x8x128xf32>
    %297 = vector.shape_cast %296 : vector<1x8x128xf32> to vector<8x128xf32>
    %cst_117 = arith.constant dense<0.000000e+00> : vector<8x128xf32>
    %298 = tpu.matmul %290, %12, %cst_117 {dimension_numbers = #tpu.dot_dimension_numbers<[1], [0], [0], [1], [0, 0, 1, 1], [], []>} : vector<8x32xf32>, vector<32x128xf32>, vector<8x128xf32> -> vector<8x128xf32>
    %299 = arith.addf %297, %298 : vector<8x128xf32>
    %300 = vector.extract_strided_slice %299 {offsets = [0, 0], sizes = [8, 32], strides = [1, 1]} : vector<8x128xf32> to vector<8x32xf32>
    %cst_118 = arith.constant 5.000000e-01 : f32
    %301 = vector.broadcast %cst_118 : f32 to vector<8x32xf32>
    %302 = arith.mulf %301, %300 : vector<8x32xf32>
    %303 = math.tanh %302 : vector<8x32xf32>
    %cst_119 = arith.constant 5.000000e-01 : f32
    %304 = vector.broadcast %cst_119 : f32 to vector<8x32xf32>
    %305 = arith.mulf %304, %303 : vector<8x32xf32>
    %cst_120 = arith.constant 5.000000e-01 : f32
    %306 = vector.broadcast %cst_120 : f32 to vector<8x32xf32>
    %307 = arith.addf %305, %306 : vector<8x32xf32>
    %308 = vector.extract_strided_slice %299 {offsets = [0, 32], sizes = [8, 32], strides = [1, 1]} : vector<8x128xf32> to vector<8x32xf32>
    %cst_121 = arith.constant 5.000000e-01 : f32
    %309 = vector.broadcast %cst_121 : f32 to vector<8x32xf32>
    %310 = arith.mulf %309, %308 : vector<8x32xf32>
    %311 = math.tanh %310 : vector<8x32xf32>
    %cst_122 = arith.constant 5.000000e-01 : f32
    %312 = vector.broadcast %cst_122 : f32 to vector<8x32xf32>
    %313 = arith.mulf %312, %311 : vector<8x32xf32>
    %cst_123 = arith.constant 5.000000e-01 : f32
    %314 = vector.broadcast %cst_123 : f32 to vector<8x32xf32>
    %315 = arith.addf %313, %314 : vector<8x32xf32>
    %316 = vector.extract_strided_slice %299 {offsets = [0, 64], sizes = [8, 32], strides = [1, 1]} : vector<8x128xf32> to vector<8x32xf32>
    %317 = math.tanh %316 : vector<8x32xf32>
    %318 = vector.extract_strided_slice %299 {offsets = [0, 96], sizes = [8, 32], strides = [1, 1]} : vector<8x128xf32> to vector<8x32xf32>
    %cst_124 = arith.constant 5.000000e-01 : f32
    %319 = vector.broadcast %cst_124 : f32 to vector<8x32xf32>
    %320 = arith.mulf %319, %318 : vector<8x32xf32>
    %321 = math.tanh %320 : vector<8x32xf32>
    %cst_125 = arith.constant 5.000000e-01 : f32
    %322 = vector.broadcast %cst_125 : f32 to vector<8x32xf32>
    %323 = arith.mulf %322, %321 : vector<8x32xf32>
    %cst_126 = arith.constant 5.000000e-01 : f32
    %324 = vector.broadcast %cst_126 : f32 to vector<8x32xf32>
    %325 = arith.addf %323, %324 : vector<8x32xf32>
    %326 = arith.mulf %315, %288 : vector<8x32xf32>
    %327 = arith.mulf %307, %317 : vector<8x32xf32>
    %328 = arith.addf %326, %327 : vector<8x32xf32>
    %329 = math.tanh %328 : vector<8x32xf32>
    %330 = arith.mulf %325, %329 : vector<8x32xf32>
    %331 = arith.index_cast %c7_i32 : i32 to index
    %c0_127 = arith.constant 0 : index
    %c0_128 = arith.constant 0 : index
    %332 = vector.load %arg8[%331, %c0_127, %c0_128] : memref<8x8x32xf32, #tpu.memory_space<vmem>>, vector<1x8x32xf32>
    %333 = vector.shape_cast %332 : vector<1x8x32xf32> to vector<8x32xf32>
    %334 = vector.shape_cast %330 : vector<8x32xf32> to vector<1x8x32xf32>
    tpu.vector_store %arg8[%331, %c0_127, %c0_128], %334 {strides = array<i32>} : memref<8x8x32xf32, #tpu.memory_space<vmem>>, vector<1x8x32xf32>,
    %c8_i32 = arith.constant 8 : i32
    %c0_129 = arith.constant 0 : index
    %c0_130 = arith.constant 0 : index
    %335 = vector.load %arg12[%c0_129, %c0_130] : memref<8x32xf32, #tpu.memory_space<vmem>>, vector<8x32xf32>
    tpu.vector_store %arg12[%c0_129, %c0_130], %330 {strides = array<i32>} : memref<8x32xf32, #tpu.memory_space<vmem>>, vector<8x32xf32>,
    %c0_131 = arith.constant 0 : index
    %c0_132 = arith.constant 0 : index
    %336 = vector.load %arg13[%c0_131, %c0_132] : memref<8x32xf32, #tpu.memory_space<vmem>>, vector<8x32xf32>
    tpu.vector_store %arg13[%c0_131, %c0_132], %328 {strides = array<i32>} : memref<8x32xf32, #tpu.memory_space<vmem>>, vector<8x32xf32>,
    %c0_i32_133 = arith.constant 0 : i32
    %337 = arith.cmpi eq, %arg1, %c0_i32_133 : i32
    %338 = arith.extui %337 : i1 to i32
    %c0_i32_134 = arith.constant 0 : i32
    %339 = arith.cmpi ne, %338, %c0_i32_134 : i32
    scf.if %339 {
      %c0_135 = arith.constant 0 : index
      %c0_136 = arith.constant 0 : index
      %340 = vector.load %arg9[%c0_135, %c0_136] : memref<8x32xf32, #tpu.memory_space<vmem>>, vector<8x32xf32>
      tpu.vector_store %arg9[%c0_135, %c0_136], %330 {strides = array<i32>} : memref<8x32xf32, #tpu.memory_space<vmem>>, vector<8x32xf32>,
      %c0_137 = arith.constant 0 : index
      %c0_138 = arith.constant 0 : index
      %341 = vector.load %arg10[%c0_137, %c0_138] : memref<8x32xf32, #tpu.memory_space<vmem>>, vector<8x32xf32>
      tpu.vector_store %arg10[%c0_137, %c0_138], %328 {strides = array<i32>} : memref<8x32xf32, #tpu.memory_space<vmem>>, vector<8x32xf32>,
    } else {
    }
    return
  }
  func.func @transform_0(%arg0: i32, %arg1: i32) -> (i32, i32, i32) {
    %c0_i32 = arith.constant 0 : i32
    %c0_i32_0 = arith.constant 0 : i32
    return %arg1, %arg0, %c0_i32 : i32, i32, i32
  }
  func.func @transform_1(%arg0: i32, %arg1: i32) -> (i32, i32) {
    %c0_i32 = arith.constant 0 : i32
    %c0_i32_0 = arith.constant 0 : i32
    %c0_i32_1 = arith.constant 0 : i32
    return %c0_i32, %c0_i32_0 : i32, i32
  }
  func.func @transform_2(%arg0: i32, %arg1: i32) -> (i32, i32) {
    %c0_i32 = arith.constant 0 : i32
    %c0_i32_0 = arith.constant 0 : i32
    %c0_i32_1 = arith.constant 0 : i32
    return %c0_i32, %c0_i32_0 : i32, i32
  }
  func.func @transform_3(%arg0: i32, %arg1: i32) -> (i32, i32) {
    %c0_i32 = arith.constant 0 : i32
    %c0_i32_0 = arith.constant 0 : i32
    %c0_i32_1 = arith.constant 0 : i32
    return %c0_i32, %c0_i32_0 : i32, i32
  }
  func.func @transform_4(%arg0: i32, %arg1: i32) -> (i32, i32) {
    %c0_i32 = arith.constant 0 : i32
    %c0_i32_0 = arith.constant 0 : i32
    return %arg0, %c0_i32 : i32, i32
  }
  func.func @transform_5(%arg0: i32, %arg1: i32) -> (i32, i32) {
    %c0_i32 = arith.constant 0 : i32
    %c0_i32_0 = arith.constant 0 : i32
    return %arg0, %c0_i32 : i32, i32
  }
  func.func @transform_6(%arg0: i32, %arg1: i32) -> (i32, i32, i32) {
    %c0_i32 = arith.constant 0 : i32
    %c0_i32_0 = arith.constant 0 : i32
    return %arg1, %arg0, %c0_i32 : i32, i32, i32
  }
  func.func @transform_7(%arg0: i32, %arg1: i32) -> (i32, i32) {
    %c0_i32 = arith.constant 0 : i32
    %c0_i32_0 = arith.constant 0 : i32
    return %arg0, %c0_i32 : i32, i32
  }
  func.func @transform_8(%arg0: i32, %arg1: i32) -> (i32, i32) {
    %c0_i32 = arith.constant 0 : i32
    %c0_i32_0 = arith.constant 0 : i32
    return %arg0, %c0_i32 : i32, i32
  }
}

module attributes {stable_mosaic.version = 11 : i64} {
  func.func @_linear_kernel(%arg0: i32, %arg1: i32, %arg2: i32, %arg3: memref<64x32xf32, #tpu.memory_space<vmem>>, %arg4: memref<32x16xf32, #tpu.memory_space<vmem>>, %arg5: memref<1x16xf32, #tpu.memory_space<vmem>>, %arg6: memref<64x16xf32, #tpu.memory_space<vmem>>, %arg7: memref<64x16xf32, #tpu.memory_space<vmem>>) attributes {dimension_semantics = [#tpu.dimension_semantics<parallel>, #tpu.dimension_semantics<parallel>, #tpu.dimension_semantics<arbitrary>], iteration_bounds = array<i64: 1, 1, 1>, scalar_prefetch = 0 : i64, scratch_operands = 1 : i64, tpu.core_type = #tpu.core_type<tc>, window_params = [{transform_indices = @transform_0, window_bounds = array<i64: 64, 32>}, {transform_indices = @transform_1, window_bounds = array<i64: 32, 16>}, {transform_indices = @transform_2, window_bounds = array<i64: 1, 16>}, {transform_indices = @transform_3, window_bounds = array<i64: 64, 16>}]} {
    %c0_i32 = arith.constant 0 : i32
    %0 = arith.cmpi eq, %arg2, %c0_i32 : i32
    %1 = arith.extui %0 : i1 to i32
    %c0_i32_0 = arith.constant 0 : i32
    %2 = arith.cmpi ne, %1, %c0_i32_0 : i32
    scf.if %2 {
      %cst_10 = arith.constant 0.000000e+00 : f32
      %12 = vector.broadcast %cst_10 : f32 to vector<64x16xf32>
      %c0_11 = arith.constant 0 : index
      %c0_12 = arith.constant 0 : index
      %13 = vector.load %arg7[%c0_11, %c0_12] : memref<64x16xf32, #tpu.memory_space<vmem>>, vector<64x16xf32>
      tpu.vector_store %arg7[%c0_11, %c0_12], %12 {strides = array<i32>} : memref<64x16xf32, #tpu.memory_space<vmem>>, vector<64x16xf32>,
    } else {
    }
    %c0 = arith.constant 0 : index
    %c0_1 = arith.constant 0 : index
    %3 = vector.load %arg7[%c0, %c0_1] : memref<64x16xf32, #tpu.memory_space<vmem>>, vector<64x16xf32>
    %c0_2 = arith.constant 0 : index
    %c0_3 = arith.constant 0 : index
    %4 = vector.load %arg3[%c0_2, %c0_3] : memref<64x32xf32, #tpu.memory_space<vmem>>, vector<64x32xf32>
    %c0_4 = arith.constant 0 : index
    %c0_5 = arith.constant 0 : index
    %5 = vector.load %arg4[%c0_4, %c0_5] : memref<32x16xf32, #tpu.memory_space<vmem>>, vector<32x16xf32>
    %cst = arith.constant dense<0.000000e+00> : vector<64x16xf32>
    %6 = tpu.matmul %4, %5, %cst {dimension_numbers = #tpu.dot_dimension_numbers<[1], [0], [0], [1], [0, 0, 1, 1], [], []>} : vector<64x32xf32>, vector<32x16xf32>, vector<64x16xf32> -> vector<64x16xf32>
    %7 = arith.addf %3, %6 : vector<64x16xf32>
    %c0_6 = arith.constant 0 : index
    %c0_7 = arith.constant 0 : index
    %8 = vector.load %arg7[%c0_6, %c0_7] : memref<64x16xf32, #tpu.memory_space<vmem>>, vector<64x16xf32>
    tpu.vector_store %arg7[%c0_6, %c0_7], %7 {strides = array<i32>} : memref<64x16xf32, #tpu.memory_space<vmem>>, vector<64x16xf32>,
    %c0_i32_8 = arith.constant 0 : i32
    %9 = arith.cmpi eq, %arg2, %c0_i32_8 : i32
    %10 = arith.extui %9 : i1 to i32
    %c0_i32_9 = arith.constant 0 : i32
    %11 = arith.cmpi ne, %10, %c0_i32_9 : i32
    scf.if %11 {
      %c0_10 = arith.constant 0 : index
      %c0_11 = arith.constant 0 : index
      %12 = vector.load %arg7[%c0_10, %c0_11] : memref<64x16xf32, #tpu.memory_space<vmem>>, vector<64x16xf32>
      %c0_12 = arith.constant 0 : index
      %c0_13 = arith.constant 0 : index
      %13 = vector.load %arg5[%c0_12, %c0_13] : memref<1x16xf32, #tpu.memory_space<vmem>>, vector<1x16xf32>
      %14 = vector.broadcast %13 : vector<1x16xf32> to vector<64x16xf32>
      %15 = arith.addf %12, %14 : vector<64x16xf32>
      %c0_14 = arith.constant 0 : index
      %c0_15 = arith.constant 0 : index
      %16 = vector.load %arg6[%c0_14, %c0_15] : memref<64x16xf32, #tpu.memory_space<vmem>>, vector<64x16xf32>
      tpu.vector_store %arg6[%c0_14, %c0_15], %15 {strides = array<i32>} : memref<64x16xf32, #tpu.memory_space<vmem>>, vector<64x16xf32>,
    } else {
    }
    return
  }
  func.func @transform_0(%arg0: i32, %arg1: i32, %arg2: i32) -> (i32, i32) {
    %c0_i32 = arith.constant 0 : i32
    return %arg0, %arg2 : i32, i32
  }
  func.func @transform_1(%arg0: i32, %arg1: i32, %arg2: i32) -> (i32, i32) {
    %c0_i32 = arith.constant 0 : i32
    return %arg2, %arg1 : i32, i32
  }
  func.func @transform_2(%arg0: i32, %arg1: i32, %arg2: i32) -> (i32, i32) {
    %c0_i32 = arith.constant 0 : i32
    %c0_i32_0 = arith.constant 0 : i32
    return %c0_i32, %arg1 : i32, i32
  }
  func.func @transform_3(%arg0: i32, %arg1: i32, %arg2: i32) -> (i32, i32) {
    %c0_i32 = arith.constant 0 : i32
    return %arg0, %arg1 : i32, i32
  }
}

module attributes {stable_mosaic.version = 11 : i64} {
  func.func @_lstm_layer_kernel(%arg0: i32, %arg1: i32, %arg2: memref<8x8x32xf32, #tpu.memory_space<vmem>>, %arg3: memref<32x128xf32, #tpu.memory_space<vmem>>, %arg4: memref<32x128xf32, #tpu.memory_space<vmem>>, %arg5: memref<1x128xf32, #tpu.memory_space<vmem>>, %arg6: memref<8x32xf32, #tpu.memory_space<vmem>>, %arg7: memref<8x32xf32, #tpu.memory_space<vmem>>, %arg8: memref<8x8x32xf32, #tpu.memory_space<vmem>>, %arg9: memref<8x32xf32, #tpu.memory_space<vmem>>, %arg10: memref<8x32xf32, #tpu.memory_space<vmem>>, %arg11: memref<8x8x128xf32, #tpu.memory_space<vmem>>, %arg12: memref<8x32xf32, #tpu.memory_space<vmem>>, %arg13: memref<8x32xf32, #tpu.memory_space<vmem>>) attributes {dimension_semantics = [#tpu.dimension_semantics<parallel>, #tpu.dimension_semantics<arbitrary>], iteration_bounds = array<i64: 1, 1>, scalar_prefetch = 0 : i64, scratch_operands = 3 : i64, tpu.core_type = #tpu.core_type<tc>, window_params = [{transform_indices = @transform_0, window_bounds = array<i64: 8, 8, 32>}, {pipeline_mode = #tpu.pipeline_mode<synchronous>, transform_indices = @transform_1, window_bounds = array<i64: 32, 128>}, {pipeline_mode = #tpu.pipeline_mode<synchronous>, transform_indices = @transform_2, window_bounds = array<i64: 32, 128>}, {pipeline_mode = #tpu.pipeline_mode<synchronous>, transform_indices = @transform_3, window_bounds = array<i64: 1, 128>}, {transform_indices = @transform_4, window_bounds = array<i64: 8, 32>}, {transform_indices = @transform_5, window_bounds = array<i64: 8, 32>}, {transform_indices = @transform_6, window_bounds = array<i64: 8, 8, 32>}, {transform_indices = @transform_7, window_bounds = array<i64: 8, 32>}, {transform_indices = @transform_8, window_bounds = array<i64: 8, 32>}]} {
    %c0_i32 = arith.constant 0 : i32
    %0 = arith.cmpi eq, %arg1, %c0_i32 : i32
    %1 = arith.extui %0 : i1 to i32
    %c0_i32_0 = arith.constant 0 : i32
    %2 = arith.cmpi ne, %1, %c0_i32_0 : i32
    scf.if %2 {
      %c0_135 = arith.constant 0 : index
      %c0_136 = arith.constant 0 : index
      %340 = vector.load %arg6[%c0_135, %c0_136] : memref<8x32xf32, #tpu.memory_space<vmem>>, vector<8x32xf32>
      %c0_137 = arith.constant 0 : index
      %c0_138 = arith.constant 0 : index
      %341 = vector.load %arg12[%c0_137, %c0_138] : memref<8x32xf32, #tpu.memory_space<vmem>>, vector<8x32xf32>
      tpu.vector_store %arg12[%c0_137, %c0_138], %340 {strides = array<i32>} : memref<8x32xf32, #tpu.memory_space<vmem>>, vector<8x32xf32>,
      %c0_139 = arith.constant 0 : index
      %c0_140 = arith.constant 0 : index
      %342 = vector.load %arg7[%c0_139, %c0_140] : memref<8x32xf32, #tpu.memory_space<vmem>>, vector<8x32xf32>
      %c0_141 = arith.constant 0 : index
      %c0_142 = arith.constant 0 : index
      %343 = vector.load %arg13[%c0_141, %c0_142] : memref<8x32xf32, #tpu.memory_space<vmem>>, vector<8x32xf32>
      tpu.vector_store %arg13[%c0_141, %c0_142], %342 {strides = array<i32>} : memref<8x32xf32, #tpu.memory_space<vmem>>, vector<8x32xf32>,
    } else {
    }
    %c0 = arith.constant 0 : index
    %c0_1 = arith.constant 0 : index
    %c0_2 = arith.constant 0 : index
    %3 = vector.load %arg2[%c0, %c0_1, %c0_2] : memref<8x8x32xf32, #tpu.memory_space<vmem>>, vector<8x8x32xf32>
    %4 = vector.shape_cast %3 : vector<8x8x32xf32> to vector<64x32xf32>
    %c0_3 = arith.constant 0 : index
    %c0_4 = arith.constant 0 : index
    %5 = vector.load %arg3[%c0_3, %c0_4] : memref<32x128xf32, #tpu.memory_space<vmem>>, vector<32x128xf32>
    %cst = arith.constant dense<0.000000e+00> : vector<64x128xf32>
    %6 = tpu.matmul %4, %5, %cst {dimension_numbers = #tpu.dot_dimension_numbers<[1], [0], [0], [1], [0, 0, 1, 1], [], []>} : vector<64x32xf32>, vector<32x128xf32>, vector<64x128xf32> -> vector<64x128xf32>
    %c0_5 = arith.constant 0 : index
    %c0_6 = arith.constant 0 : index
    %7 = vector.load %arg5[%c0_5, %c0_6] : memref<1x128xf32, #tpu.memory_space<vmem>>, vector<1x128xf32>
    %8 = vector.broadcast %7 : vector<1x128xf32> to vector<64x128xf32>
    %9 = arith.addf %6, %8 : vector<64x128xf32>
    %10 = vector.shape_cast %9 : vector<64x128xf32> to vector<8x8x128xf32>
    %c0_7 = arith.constant 0 : index
    %c0_8 = arith.constant 0 : index
    %c0_9 = arith.constant 0 : index
    %11 = vector.load %arg11[%c0_7, %c0_8, %c0_9] : memref<8x8x128xf32, #tpu.memory_space<vmem>>, vector<8x8x128xf32>
    tpu.vector_store %arg11[%c0_7, %c0_8, %c0_9], %10 {strides = array<i32>} : memref<8x8x128xf32, #tpu.memory_space<vmem>>, vector<8x8x128xf32>,
    %c0_10 = arith.constant 0 : index
    %c0_11 = arith.constant 0 : index
    %12 = vector.load %arg4[%c0_10, %c0_11] : memref<32x128xf32, #tpu.memory_space<vmem>>, vector<32x128xf32>
    %c0_12 = arith.constant 0 : index
    %c0_13 = arith.constant 0 : index
    %13 = vector.load %arg12[%c0_12, %c0_13] : memref<8x32xf32, #tpu.memory_space<vmem>>, vector<8x32xf32>
    %c0_14 = arith.constant 0 : index
    %c0_15 = arith.constant 0 : index
    %14 = vector.load %arg13[%c0_14, %c0_15] : memref<8x32xf32, #tpu.memory_space<vmem>>, vector<8x32xf32>
    %c0_i32_16 = arith.constant 0 : i32
    %15 = arith.index_cast %c0_i32_16 : i32 to index
    %c0_17 = arith.constant 0 : index
    %c0_18 = arith.constant 0 : index
    %16 = vector.load %arg11[%15, %c0_17, %c0_18] : memref<8x8x128xf32, #tpu.memory_space<vmem>>, vector<1x8x128xf32>
    %17 = vector.shape_cast %16 : vector<1x8x128xf32> to vector<8x128xf32>
    %cst_19 = arith.constant dense<0.000000e+00> : vector<8x128xf32>
    %18 = tpu.matmul %13, %12, %cst_19 {dimension_numbers = #tpu.dot_dimension_numbers<[1], [0], [0], [1], [0, 0, 1, 1], [], []>} : vector<8x32xf32>, vector<32x128xf32>, vector<8x128xf32> -> vector<8x128xf32>
    %19 = arith.addf %17, %18 : vector<8x128xf32>
    %20 = vector.extract_strided_slice %19 {offsets = [0, 0], sizes = [8, 32], strides = [1, 1]} : vector<8x128xf32> to vector<8x32xf32>
    %cst_20 = arith.constant 5.000000e-01 : f32
    %21 = vector.broadcast %cst_20 : f32 to vector<8x32xf32>
    %22 = arith.mulf %21, %20 : vector<8x32xf32>
    %23 = math.tanh %22 : vector<8x32xf32>
    %cst_21 = arith.constant 5.000000e-01 : f32
    %24 = vector.broadcast %cst_21 : f32 to vector<8x32xf32>
    %25 = arith.mulf %24, %23 : vector<8x32xf32>
    %cst_22 = arith.constant 5.000000e-01 : f32
    %26 = vector.broadcast %cst_22 : f32 to vector<8x32xf32>
    %27 = arith.addf %25, %26 : vector<8x32xf32>
    %28 = vector.extract_strided_slice %19 {offsets = [0, 32], sizes = [8, 32], strides = [1, 1]} : vector<8x128xf32> to vector<8x32xf32>
    %cst_23 = arith.constant 5.000000e-01 : f32
    %29 = vector.broadcast %cst_23 : f32 to vector<8x32xf32>
    %30 = arith.mulf %29, %28 : vector<8x32xf32>
    %31 = math.tanh %30 : vector<8x32xf32>
    %cst_24 = arith.constant 5.000000e-01 : f32
    %32 = vector.broadcast %cst_24 : f32 to vector<8x32xf32>
    %33 = arith.mulf %32, %31 : vector<8x32xf32>
    %cst_25 = arith.constant 5.000000e-01 : f32
    %34 = vector.broadcast %cst_25 : f32 to vector<8x32xf32>
    %35 = arith.addf %33, %34 : vector<8x32xf32>
    %36 = vector.extract_strided_slice %19 {offsets = [0, 64], sizes = [8, 32], strides = [1, 1]} : vector<8x128xf32> to vector<8x32xf32>
    %37 = math.tanh %36 : vector<8x32xf32>
    %38 = vector.extract_strided_slice %19 {offsets = [0, 96], sizes = [8, 32], strides = [1, 1]} : vector<8x128xf32> to vector<8x32xf32>
    %cst_26 = arith.constant 5.000000e-01 : f32
    %39 = vector.broadcast %cst_26 : f32 to vector<8x32xf32>
    %40 = arith.mulf %39, %38 : vector<8x32xf32>
    %41 = math.tanh %40 : vector<8x32xf32>
    %cst_27 = arith.constant 5.000000e-01 : f32
    %42 = vector.broadcast %cst_27 : f32 to vector<8x32xf32>
    %43 = arith.mulf %42, %41 : vector<8x32xf32>
    %cst_28 = arith.constant 5.000000e-01 : f32
    %44 = vector.broadcast %cst_28 : f32 to vector<8x32xf32>
    %45 = arith.addf %43, %44 : vector<8x32xf32>
    %46 = arith.mulf %35, %14 : vector<8x32xf32>
    %47 = arith.mulf %27, %37 : vector<8x32xf32>
    %48 = arith.addf %46, %47 : vector<8x32xf32>
    %49 = math.tanh %48 : vector<8x32xf32>
    %50 = arith.mulf %45, %49 : vector<8x32xf32>
    %51 = arith.index_cast %c0_i32_16 : i32 to index
    %c0_29 = arith.constant 0 : index
    %c0_30 = arith.constant 0 : index
    %52 = vector.load %arg8[%51, %c0_29, %c0_30] : memref<8x8x32xf32, #tpu.memory_space<vmem>>, vector<1x8x32xf32>
    %53 = vector.shape_cast %52 : vector<1x8x32xf32> to vector<8x32xf32>
    %54 = vector.shape_cast %50 : vector<8x32xf32> to vector<1x8x32xf32>
    tpu.vector_store %arg8[%51, %c0_29, %c0_30], %54 {strides = array<i32>} : memref<8x8x32xf32, #tpu.memory_space<vmem>>, vector<1x8x32xf32>,
    %c1_i32 = arith.constant 1 : i32
    %55 = arith.index_cast %c1_i32 : i32 to index
    %c0_31 = arith.constant 0 : index
    %c0_32 = arith.constant 0 : index
    %56 = vector.load %arg11[%55, %c0_31, %c0_32] : memref<8x8x128xf32, #tpu.memory_space<vmem>>, vector<1x8x128xf32>
    %57 = vector.shape_cast %56 : vector<1x8x128xf32> to vector<8x128xf32>
    %cst_33 = arith.constant dense<0.000000e+00> : vector<8x128xf32>
    %58 = tpu.matmul %50, %12, %cst_33 {dimension_numbers = #tpu.dot_dimension_numbers<[1], [0], [0], [1], [0, 0, 1, 1], [], []>} : vector<8x32xf32>, vector<32x128xf32>, vector<8x128xf32> -> vector<8x128xf32>
    %59 = arith.addf %57, %58 : vector<8x128xf32>
    %60 = vector.extract_strided_slice %59 {offsets = [0, 0], sizes = [8, 32], strides = [1, 1]} : vector<8x128xf32> to vector<8x32xf32>
    %cst_34 = arith.constant 5.000000e-01 : f32
    %61 = vector.broadcast %cst_34 : f32 to vector<8x32xf32>
    %62 = arith.mulf %61, %60 : vector<8x32xf32>
    %63 = math.tanh %62 : vector<8x32xf32>
    %cst_35 = arith.constant 5.000000e-01 : f32
    %64 = vector.broadcast %cst_35 : f32 to vector<8x32xf32>
    %65 = arith.mulf %64, %63 : vector<8x32xf32>
    %cst_36 = arith.constant 5.000000e-01 : f32
    %66 = vector.broadcast %cst_36 : f32 to vector<8x32xf32>
    %67 = arith.addf %65, %66 : vector<8x32xf32>
    %68 = vector.extract_strided_slice %59 {offsets = [0, 32], sizes = [8, 32], strides = [1, 1]} : vector<8x128xf32> to vector<8x32xf32>
    %cst_37 = arith.constant 5.000000e-01 : f32
    %69 = vector.broadcast %cst_37 : f32 to vector<8x32xf32>
    %70 = arith.mulf %69, %68 : vector<8x32xf32>
    %71 = math.tanh %70 : vector<8x32xf32>
    %cst_38 = arith.constant 5.000000e-01 : f32
    %72 = vector.broadcast %cst_38 : f32 to vector<8x32xf32>
    %73 = arith.mulf %72, %71 : vector<8x32xf32>
    %cst_39 = arith.constant 5.000000e-01 : f32
    %74 = vector.broadcast %cst_39 : f32 to vector<8x32xf32>
    %75 = arith.addf %73, %74 : vector<8x32xf32>
    %76 = vector.extract_strided_slice %59 {offsets = [0, 64], sizes = [8, 32], strides = [1, 1]} : vector<8x128xf32> to vector<8x32xf32>
    %77 = math.tanh %76 : vector<8x32xf32>
    %78 = vector.extract_strided_slice %59 {offsets = [0, 96], sizes = [8, 32], strides = [1, 1]} : vector<8x128xf32> to vector<8x32xf32>
    %cst_40 = arith.constant 5.000000e-01 : f32
    %79 = vector.broadcast %cst_40 : f32 to vector<8x32xf32>
    %80 = arith.mulf %79, %78 : vector<8x32xf32>
    %81 = math.tanh %80 : vector<8x32xf32>
    %cst_41 = arith.constant 5.000000e-01 : f32
    %82 = vector.broadcast %cst_41 : f32 to vector<8x32xf32>
    %83 = arith.mulf %82, %81 : vector<8x32xf32>
    %cst_42 = arith.constant 5.000000e-01 : f32
    %84 = vector.broadcast %cst_42 : f32 to vector<8x32xf32>
    %85 = arith.addf %83, %84 : vector<8x32xf32>
    %86 = arith.mulf %75, %48 : vector<8x32xf32>
    %87 = arith.mulf %67, %77 : vector<8x32xf32>
    %88 = arith.addf %86, %87 : vector<8x32xf32>
    %89 = math.tanh %88 : vector<8x32xf32>
    %90 = arith.mulf %85, %89 : vector<8x32xf32>
    %91 = arith.index_cast %c1_i32 : i32 to index
    %c0_43 = arith.constant 0 : index
    %c0_44 = arith.constant 0 : index
    %92 = vector.load %arg8[%91, %c0_43, %c0_44] : memref<8x8x32xf32, #tpu.memory_space<vmem>>, vector<1x8x32xf32>
    %93 = vector.shape_cast %92 : vector<1x8x32xf32> to vector<8x32xf32>
    %94 = vector.shape_cast %90 : vector<8x32xf32> to vector<1x8x32xf32>
    tpu.vector_store %arg8[%91, %c0_43, %c0_44], %94 {strides = array<i32>} : memref<8x8x32xf32, #tpu.memory_space<vmem>>, vector<1x8x32xf32>,
    %c2_i32 = arith.constant 2 : i32
    %95 = arith.index_cast %c2_i32 : i32 to index
    %c0_45 = arith.constant 0 : index
    %c0_46 = arith.constant 0 : index
    %96 = vector.load %arg11[%95, %c0_45, %c0_46] : memref<8x8x128xf32, #tpu.memory_space<vmem>>, vector<1x8x128xf32>
    %97 = vector.shape_cast %96 : vector<1x8x128xf32> to vector<8x128xf32>
    %cst_47 = arith.constant dense<0.000000e+00> : vector<8x128xf32>
    %98 = tpu.matmul %90, %12, %cst_47 {dimension_numbers = #tpu.dot_dimension_numbers<[1], [0], [0], [1], [0, 0, 1, 1], [], []>} : vector<8x32xf32>, vector<32x128xf32>, vector<8x128xf32> -> vector<8x128xf32>
    %99 = arith.addf %97, %98 : vector<8x128xf32>
    %100 = vector.extract_strided_slice %99 {offsets = [0, 0], sizes = [8, 32], strides = [1, 1]} : vector<8x128xf32> to vector<8x32xf32>
    %cst_48 = arith.constant 5.000000e-01 : f32
    %101 = vector.broadcast %cst_48 : f32 to vector<8x32xf32>
    %102 = arith.mulf %101, %100 : vector<8x32xf32>
    %103 = math.tanh %102 : vector<8x32xf32>
    %cst_49 = arith.constant 5.000000e-01 : f32
    %104 = vector.broadcast %cst_49 : f32 to vector<8x32xf32>
    %105 = arith.mulf %104, %103 : vector<8x32xf32>
    %cst_50 = arith.constant 5.000000e-01 : f32
    %106 = vector.broadcast %cst_50 : f32 to vector<8x32xf32>
    %107 = arith.addf %105, %106 : vector<8x32xf32>
    %108 = vector.extract_strided_slice %99 {offsets = [0, 32], sizes = [8, 32], strides = [1, 1]} : vector<8x128xf32> to vector<8x32xf32>
    %cst_51 = arith.constant 5.000000e-01 : f32
    %109 = vector.broadcast %cst_51 : f32 to vector<8x32xf32>
    %110 = arith.mulf %109, %108 : vector<8x32xf32>
    %111 = math.tanh %110 : vector<8x32xf32>
    %cst_52 = arith.constant 5.000000e-01 : f32
    %112 = vector.broadcast %cst_52 : f32 to vector<8x32xf32>
    %113 = arith.mulf %112, %111 : vector<8x32xf32>
    %cst_53 = arith.constant 5.000000e-01 : f32
    %114 = vector.broadcast %cst_53 : f32 to vector<8x32xf32>
    %115 = arith.addf %113, %114 : vector<8x32xf32>
    %116 = vector.extract_strided_slice %99 {offsets = [0, 64], sizes = [8, 32], strides = [1, 1]} : vector<8x128xf32> to vector<8x32xf32>
    %117 = math.tanh %116 : vector<8x32xf32>
    %118 = vector.extract_strided_slice %99 {offsets = [0, 96], sizes = [8, 32], strides = [1, 1]} : vector<8x128xf32> to vector<8x32xf32>
    %cst_54 = arith.constant 5.000000e-01 : f32
    %119 = vector.broadcast %cst_54 : f32 to vector<8x32xf32>
    %120 = arith.mulf %119, %118 : vector<8x32xf32>
    %121 = math.tanh %120 : vector<8x32xf32>
    %cst_55 = arith.constant 5.000000e-01 : f32
    %122 = vector.broadcast %cst_55 : f32 to vector<8x32xf32>
    %123 = arith.mulf %122, %121 : vector<8x32xf32>
    %cst_56 = arith.constant 5.000000e-01 : f32
    %124 = vector.broadcast %cst_56 : f32 to vector<8x32xf32>
    %125 = arith.addf %123, %124 : vector<8x32xf32>
    %126 = arith.mulf %115, %88 : vector<8x32xf32>
    %127 = arith.mulf %107, %117 : vector<8x32xf32>
    %128 = arith.addf %126, %127 : vector<8x32xf32>
    %129 = math.tanh %128 : vector<8x32xf32>
    %130 = arith.mulf %125, %129 : vector<8x32xf32>
    %131 = arith.index_cast %c2_i32 : i32 to index
    %c0_57 = arith.constant 0 : index
    %c0_58 = arith.constant 0 : index
    %132 = vector.load %arg8[%131, %c0_57, %c0_58] : memref<8x8x32xf32, #tpu.memory_space<vmem>>, vector<1x8x32xf32>
    %133 = vector.shape_cast %132 : vector<1x8x32xf32> to vector<8x32xf32>
    %134 = vector.shape_cast %130 : vector<8x32xf32> to vector<1x8x32xf32>
    tpu.vector_store %arg8[%131, %c0_57, %c0_58], %134 {strides = array<i32>} : memref<8x8x32xf32, #tpu.memory_space<vmem>>, vector<1x8x32xf32>,
    %c3_i32 = arith.constant 3 : i32
    %135 = arith.index_cast %c3_i32 : i32 to index
    %c0_59 = arith.constant 0 : index
    %c0_60 = arith.constant 0 : index
    %136 = vector.load %arg11[%135, %c0_59, %c0_60] : memref<8x8x128xf32, #tpu.memory_space<vmem>>, vector<1x8x128xf32>
    %137 = vector.shape_cast %136 : vector<1x8x128xf32> to vector<8x128xf32>
    %cst_61 = arith.constant dense<0.000000e+00> : vector<8x128xf32>
    %138 = tpu.matmul %130, %12, %cst_61 {dimension_numbers = #tpu.dot_dimension_numbers<[1], [0], [0], [1], [0, 0, 1, 1], [], []>} : vector<8x32xf32>, vector<32x128xf32>, vector<8x128xf32> -> vector<8x128xf32>
    %139 = arith.addf %137, %138 : vector<8x128xf32>
    %140 = vector.extract_strided_slice %139 {offsets = [0, 0], sizes = [8, 32], strides = [1, 1]} : vector<8x128xf32> to vector<8x32xf32>
    %cst_62 = arith.constant 5.000000e-01 : f32
    %141 = vector.broadcast %cst_62 : f32 to vector<8x32xf32>
    %142 = arith.mulf %141, %140 : vector<8x32xf32>
    %143 = math.tanh %142 : vector<8x32xf32>
    %cst_63 = arith.constant 5.000000e-01 : f32
    %144 = vector.broadcast %cst_63 : f32 to vector<8x32xf32>
    %145 = arith.mulf %144, %143 : vector<8x32xf32>
    %cst_64 = arith.constant 5.000000e-01 : f32
    %146 = vector.broadcast %cst_64 : f32 to vector<8x32xf32>
    %147 = arith.addf %145, %146 : vector<8x32xf32>
    %148 = vector.extract_strided_slice %139 {offsets = [0, 32], sizes = [8, 32], strides = [1, 1]} : vector<8x128xf32> to vector<8x32xf32>
    %cst_65 = arith.constant 5.000000e-01 : f32
    %149 = vector.broadcast %cst_65 : f32 to vector<8x32xf32>
    %150 = arith.mulf %149, %148 : vector<8x32xf32>
    %151 = math.tanh %150 : vector<8x32xf32>
    %cst_66 = arith.constant 5.000000e-01 : f32
    %152 = vector.broadcast %cst_66 : f32 to vector<8x32xf32>
    %153 = arith.mulf %152, %151 : vector<8x32xf32>
    %cst_67 = arith.constant 5.000000e-01 : f32
    %154 = vector.broadcast %cst_67 : f32 to vector<8x32xf32>
    %155 = arith.addf %153, %154 : vector<8x32xf32>
    %156 = vector.extract_strided_slice %139 {offsets = [0, 64], sizes = [8, 32], strides = [1, 1]} : vector<8x128xf32> to vector<8x32xf32>
    %157 = math.tanh %156 : vector<8x32xf32>
    %158 = vector.extract_strided_slice %139 {offsets = [0, 96], sizes = [8, 32], strides = [1, 1]} : vector<8x128xf32> to vector<8x32xf32>
    %cst_68 = arith.constant 5.000000e-01 : f32
    %159 = vector.broadcast %cst_68 : f32 to vector<8x32xf32>
    %160 = arith.mulf %159, %158 : vector<8x32xf32>
    %161 = math.tanh %160 : vector<8x32xf32>
    %cst_69 = arith.constant 5.000000e-01 : f32
    %162 = vector.broadcast %cst_69 : f32 to vector<8x32xf32>
    %163 = arith.mulf %162, %161 : vector<8x32xf32>
    %cst_70 = arith.constant 5.000000e-01 : f32
    %164 = vector.broadcast %cst_70 : f32 to vector<8x32xf32>
    %165 = arith.addf %163, %164 : vector<8x32xf32>
    %166 = arith.mulf %155, %128 : vector<8x32xf32>
    %167 = arith.mulf %147, %157 : vector<8x32xf32>
    %168 = arith.addf %166, %167 : vector<8x32xf32>
    %169 = math.tanh %168 : vector<8x32xf32>
    %170 = arith.mulf %165, %169 : vector<8x32xf32>
    %171 = arith.index_cast %c3_i32 : i32 to index
    %c0_71 = arith.constant 0 : index
    %c0_72 = arith.constant 0 : index
    %172 = vector.load %arg8[%171, %c0_71, %c0_72] : memref<8x8x32xf32, #tpu.memory_space<vmem>>, vector<1x8x32xf32>
    %173 = vector.shape_cast %172 : vector<1x8x32xf32> to vector<8x32xf32>
    %174 = vector.shape_cast %170 : vector<8x32xf32> to vector<1x8x32xf32>
    tpu.vector_store %arg8[%171, %c0_71, %c0_72], %174 {strides = array<i32>} : memref<8x8x32xf32, #tpu.memory_space<vmem>>, vector<1x8x32xf32>,
    %c4_i32 = arith.constant 4 : i32
    %175 = arith.index_cast %c4_i32 : i32 to index
    %c0_73 = arith.constant 0 : index
    %c0_74 = arith.constant 0 : index
    %176 = vector.load %arg11[%175, %c0_73, %c0_74] : memref<8x8x128xf32, #tpu.memory_space<vmem>>, vector<1x8x128xf32>
    %177 = vector.shape_cast %176 : vector<1x8x128xf32> to vector<8x128xf32>
    %cst_75 = arith.constant dense<0.000000e+00> : vector<8x128xf32>
    %178 = tpu.matmul %170, %12, %cst_75 {dimension_numbers = #tpu.dot_dimension_numbers<[1], [0], [0], [1], [0, 0, 1, 1], [], []>} : vector<8x32xf32>, vector<32x128xf32>, vector<8x128xf32> -> vector<8x128xf32>
    %179 = arith.addf %177, %178 : vector<8x128xf32>
    %180 = vector.extract_strided_slice %179 {offsets = [0, 0], sizes = [8, 32], strides = [1, 1]} : vector<8x128xf32> to vector<8x32xf32>
    %cst_76 = arith.constant 5.000000e-01 : f32
    %181 = vector.broadcast %cst_76 : f32 to vector<8x32xf32>
    %182 = arith.mulf %181, %180 : vector<8x32xf32>
    %183 = math.tanh %182 : vector<8x32xf32>
    %cst_77 = arith.constant 5.000000e-01 : f32
    %184 = vector.broadcast %cst_77 : f32 to vector<8x32xf32>
    %185 = arith.mulf %184, %183 : vector<8x32xf32>
    %cst_78 = arith.constant 5.000000e-01 : f32
    %186 = vector.broadcast %cst_78 : f32 to vector<8x32xf32>
    %187 = arith.addf %185, %186 : vector<8x32xf32>
    %188 = vector.extract_strided_slice %179 {offsets = [0, 32], sizes = [8, 32], strides = [1, 1]} : vector<8x128xf32> to vector<8x32xf32>
    %cst_79 = arith.constant 5.000000e-01 : f32
    %189 = vector.broadcast %cst_79 : f32 to vector<8x32xf32>
    %190 = arith.mulf %189, %188 : vector<8x32xf32>
    %191 = math.tanh %190 : vector<8x32xf32>
    %cst_80 = arith.constant 5.000000e-01 : f32
    %192 = vector.broadcast %cst_80 : f32 to vector<8x32xf32>
    %193 = arith.mulf %192, %191 : vector<8x32xf32>
    %cst_81 = arith.constant 5.000000e-01 : f32
    %194 = vector.broadcast %cst_81 : f32 to vector<8x32xf32>
    %195 = arith.addf %193, %194 : vector<8x32xf32>
    %196 = vector.extract_strided_slice %179 {offsets = [0, 64], sizes = [8, 32], strides = [1, 1]} : vector<8x128xf32> to vector<8x32xf32>
    %197 = math.tanh %196 : vector<8x32xf32>
    %198 = vector.extract_strided_slice %179 {offsets = [0, 96], sizes = [8, 32], strides = [1, 1]} : vector<8x128xf32> to vector<8x32xf32>
    %cst_82 = arith.constant 5.000000e-01 : f32
    %199 = vector.broadcast %cst_82 : f32 to vector<8x32xf32>
    %200 = arith.mulf %199, %198 : vector<8x32xf32>
    %201 = math.tanh %200 : vector<8x32xf32>
    %cst_83 = arith.constant 5.000000e-01 : f32
    %202 = vector.broadcast %cst_83 : f32 to vector<8x32xf32>
    %203 = arith.mulf %202, %201 : vector<8x32xf32>
    %cst_84 = arith.constant 5.000000e-01 : f32
    %204 = vector.broadcast %cst_84 : f32 to vector<8x32xf32>
    %205 = arith.addf %203, %204 : vector<8x32xf32>
    %206 = arith.mulf %195, %168 : vector<8x32xf32>
    %207 = arith.mulf %187, %197 : vector<8x32xf32>
    %208 = arith.addf %206, %207 : vector<8x32xf32>
    %209 = math.tanh %208 : vector<8x32xf32>
    %210 = arith.mulf %205, %209 : vector<8x32xf32>
    %211 = arith.index_cast %c4_i32 : i32 to index
    %c0_85 = arith.constant 0 : index
    %c0_86 = arith.constant 0 : index
    %212 = vector.load %arg8[%211, %c0_85, %c0_86] : memref<8x8x32xf32, #tpu.memory_space<vmem>>, vector<1x8x32xf32>
    %213 = vector.shape_cast %212 : vector<1x8x32xf32> to vector<8x32xf32>
    %214 = vector.shape_cast %210 : vector<8x32xf32> to vector<1x8x32xf32>
    tpu.vector_store %arg8[%211, %c0_85, %c0_86], %214 {strides = array<i32>} : memref<8x8x32xf32, #tpu.memory_space<vmem>>, vector<1x8x32xf32>,
    %c5_i32 = arith.constant 5 : i32
    %215 = arith.index_cast %c5_i32 : i32 to index
    %c0_87 = arith.constant 0 : index
    %c0_88 = arith.constant 0 : index
    %216 = vector.load %arg11[%215, %c0_87, %c0_88] : memref<8x8x128xf32, #tpu.memory_space<vmem>>, vector<1x8x128xf32>
    %217 = vector.shape_cast %216 : vector<1x8x128xf32> to vector<8x128xf32>
    %cst_89 = arith.constant dense<0.000000e+00> : vector<8x128xf32>
    %218 = tpu.matmul %210, %12, %cst_89 {dimension_numbers = #tpu.dot_dimension_numbers<[1], [0], [0], [1], [0, 0, 1, 1], [], []>} : vector<8x32xf32>, vector<32x128xf32>, vector<8x128xf32> -> vector<8x128xf32>
    %219 = arith.addf %217, %218 : vector<8x128xf32>
    %220 = vector.extract_strided_slice %219 {offsets = [0, 0], sizes = [8, 32], strides = [1, 1]} : vector<8x128xf32> to vector<8x32xf32>
    %cst_90 = arith.constant 5.000000e-01 : f32
    %221 = vector.broadcast %cst_90 : f32 to vector<8x32xf32>
    %222 = arith.mulf %221, %220 : vector<8x32xf32>
    %223 = math.tanh %222 : vector<8x32xf32>
    %cst_91 = arith.constant 5.000000e-01 : f32
    %224 = vector.broadcast %cst_91 : f32 to vector<8x32xf32>
    %225 = arith.mulf %224, %223 : vector<8x32xf32>
    %cst_92 = arith.constant 5.000000e-01 : f32
    %226 = vector.broadcast %cst_92 : f32 to vector<8x32xf32>
    %227 = arith.addf %225, %226 : vector<8x32xf32>
    %228 = vector.extract_strided_slice %219 {offsets = [0, 32], sizes = [8, 32], strides = [1, 1]} : vector<8x128xf32> to vector<8x32xf32>
    %cst_93 = arith.constant 5.000000e-01 : f32
    %229 = vector.broadcast %cst_93 : f32 to vector<8x32xf32>
    %230 = arith.mulf %229, %228 : vector<8x32xf32>
    %231 = math.tanh %230 : vector<8x32xf32>
    %cst_94 = arith.constant 5.000000e-01 : f32
    %232 = vector.broadcast %cst_94 : f32 to vector<8x32xf32>
    %233 = arith.mulf %232, %231 : vector<8x32xf32>
    %cst_95 = arith.constant 5.000000e-01 : f32
    %234 = vector.broadcast %cst_95 : f32 to vector<8x32xf32>
    %235 = arith.addf %233, %234 : vector<8x32xf32>
    %236 = vector.extract_strided_slice %219 {offsets = [0, 64], sizes = [8, 32], strides = [1, 1]} : vector<8x128xf32> to vector<8x32xf32>
    %237 = math.tanh %236 : vector<8x32xf32>
    %238 = vector.extract_strided_slice %219 {offsets = [0, 96], sizes = [8, 32], strides = [1, 1]} : vector<8x128xf32> to vector<8x32xf32>
    %cst_96 = arith.constant 5.000000e-01 : f32
    %239 = vector.broadcast %cst_96 : f32 to vector<8x32xf32>
    %240 = arith.mulf %239, %238 : vector<8x32xf32>
    %241 = math.tanh %240 : vector<8x32xf32>
    %cst_97 = arith.constant 5.000000e-01 : f32
    %242 = vector.broadcast %cst_97 : f32 to vector<8x32xf32>
    %243 = arith.mulf %242, %241 : vector<8x32xf32>
    %cst_98 = arith.constant 5.000000e-01 : f32
    %244 = vector.broadcast %cst_98 : f32 to vector<8x32xf32>
    %245 = arith.addf %243, %244 : vector<8x32xf32>
    %246 = arith.mulf %235, %208 : vector<8x32xf32>
    %247 = arith.mulf %227, %237 : vector<8x32xf32>
    %248 = arith.addf %246, %247 : vector<8x32xf32>
    %249 = math.tanh %248 : vector<8x32xf32>
    %250 = arith.mulf %245, %249 : vector<8x32xf32>
    %251 = arith.index_cast %c5_i32 : i32 to index
    %c0_99 = arith.constant 0 : index
    %c0_100 = arith.constant 0 : index
    %252 = vector.load %arg8[%251, %c0_99, %c0_100] : memref<8x8x32xf32, #tpu.memory_space<vmem>>, vector<1x8x32xf32>
    %253 = vector.shape_cast %252 : vector<1x8x32xf32> to vector<8x32xf32>
    %254 = vector.shape_cast %250 : vector<8x32xf32> to vector<1x8x32xf32>
    tpu.vector_store %arg8[%251, %c0_99, %c0_100], %254 {strides = array<i32>} : memref<8x8x32xf32, #tpu.memory_space<vmem>>, vector<1x8x32xf32>,
    %c6_i32 = arith.constant 6 : i32
    %255 = arith.index_cast %c6_i32 : i32 to index
    %c0_101 = arith.constant 0 : index
    %c0_102 = arith.constant 0 : index
    %256 = vector.load %arg11[%255, %c0_101, %c0_102] : memref<8x8x128xf32, #tpu.memory_space<vmem>>, vector<1x8x128xf32>
    %257 = vector.shape_cast %256 : vector<1x8x128xf32> to vector<8x128xf32>
    %cst_103 = arith.constant dense<0.000000e+00> : vector<8x128xf32>
    %258 = tpu.matmul %250, %12, %cst_103 {dimension_numbers = #tpu.dot_dimension_numbers<[1], [0], [0], [1], [0, 0, 1, 1], [], []>} : vector<8x32xf32>, vector<32x128xf32>, vector<8x128xf32> -> vector<8x128xf32>
    %259 = arith.addf %257, %258 : vector<8x128xf32>
    %260 = vector.extract_strided_slice %259 {offsets = [0, 0], sizes = [8, 32], strides = [1, 1]} : vector<8x128xf32> to vector<8x32xf32>
    %cst_104 = arith.constant 5.000000e-01 : f32
    %261 = vector.broadcast %cst_104 : f32 to vector<8x32xf32>
    %262 = arith.mulf %261, %260 : vector<8x32xf32>
    %263 = math.tanh %262 : vector<8x32xf32>
    %cst_105 = arith.constant 5.000000e-01 : f32
    %264 = vector.broadcast %cst_105 : f32 to vector<8x32xf32>
    %265 = arith.mulf %264, %263 : vector<8x32xf32>
    %cst_106 = arith.constant 5.000000e-01 : f32
    %266 = vector.broadcast %cst_106 : f32 to vector<8x32xf32>
    %267 = arith.addf %265, %266 : vector<8x32xf32>
    %268 = vector.extract_strided_slice %259 {offsets = [0, 32], sizes = [8, 32], strides = [1, 1]} : vector<8x128xf32> to vector<8x32xf32>
    %cst_107 = arith.constant 5.000000e-01 : f32
    %269 = vector.broadcast %cst_107 : f32 to vector<8x32xf32>
    %270 = arith.mulf %269, %268 : vector<8x32xf32>
    %271 = math.tanh %270 : vector<8x32xf32>
    %cst_108 = arith.constant 5.000000e-01 : f32
    %272 = vector.broadcast %cst_108 : f32 to vector<8x32xf32>
    %273 = arith.mulf %272, %271 : vector<8x32xf32>
    %cst_109 = arith.constant 5.000000e-01 : f32
    %274 = vector.broadcast %cst_109 : f32 to vector<8x32xf32>
    %275 = arith.addf %273, %274 : vector<8x32xf32>
    %276 = vector.extract_strided_slice %259 {offsets = [0, 64], sizes = [8, 32], strides = [1, 1]} : vector<8x128xf32> to vector<8x32xf32>
    %277 = math.tanh %276 : vector<8x32xf32>
    %278 = vector.extract_strided_slice %259 {offsets = [0, 96], sizes = [8, 32], strides = [1, 1]} : vector<8x128xf32> to vector<8x32xf32>
    %cst_110 = arith.constant 5.000000e-01 : f32
    %279 = vector.broadcast %cst_110 : f32 to vector<8x32xf32>
    %280 = arith.mulf %279, %278 : vector<8x32xf32>
    %281 = math.tanh %280 : vector<8x32xf32>
    %cst_111 = arith.constant 5.000000e-01 : f32
    %282 = vector.broadcast %cst_111 : f32 to vector<8x32xf32>
    %283 = arith.mulf %282, %281 : vector<8x32xf32>
    %cst_112 = arith.constant 5.000000e-01 : f32
    %284 = vector.broadcast %cst_112 : f32 to vector<8x32xf32>
    %285 = arith.addf %283, %284 : vector<8x32xf32>
    %286 = arith.mulf %275, %248 : vector<8x32xf32>
    %287 = arith.mulf %267, %277 : vector<8x32xf32>
    %288 = arith.addf %286, %287 : vector<8x32xf32>
    %289 = math.tanh %288 : vector<8x32xf32>
    %290 = arith.mulf %285, %289 : vector<8x32xf32>
    %291 = arith.index_cast %c6_i32 : i32 to index
    %c0_113 = arith.constant 0 : index
    %c0_114 = arith.constant 0 : index
    %292 = vector.load %arg8[%291, %c0_113, %c0_114] : memref<8x8x32xf32, #tpu.memory_space<vmem>>, vector<1x8x32xf32>
    %293 = vector.shape_cast %292 : vector<1x8x32xf32> to vector<8x32xf32>
    %294 = vector.shape_cast %290 : vector<8x32xf32> to vector<1x8x32xf32>
    tpu.vector_store %arg8[%291, %c0_113, %c0_114], %294 {strides = array<i32>} : memref<8x8x32xf32, #tpu.memory_space<vmem>>, vector<1x8x32xf32>,
    %c7_i32 = arith.constant 7 : i32
    %295 = arith.index_cast %c7_i32 : i32 to index
    %c0_115 = arith.constant 0 : index
    %c0_116 = arith.constant 0 : index
    %296 = vector.load %arg11[%295, %c0_115, %c0_116] : memref<8x8x128xf32, #tpu.memory_space<vmem>>, vector<1x8x128xf32>
    %297 = vector.shape_cast %296 : vector<1x8x128xf32> to vector<8x128xf32>
    %cst_117 = arith.constant dense<0.000000e+00> : vector<8x128xf32>
    %298 = tpu.matmul %290, %12, %cst_117 {dimension_numbers = #tpu.dot_dimension_numbers<[1], [0], [0], [1], [0, 0, 1, 1], [], []>} : vector<8x32xf32>, vector<32x128xf32>, vector<8x128xf32> -> vector<8x128xf32>
    %299 = arith.addf %297, %298 : vector<8x128xf32>
    %300 = vector.extract_strided_slice %299 {offsets = [0, 0], sizes = [8, 32], strides = [1, 1]} : vector<8x128xf32> to vector<8x32xf32>
    %cst_118 = arith.constant 5.000000e-01 : f32
    %301 = vector.broadcast %cst_118 : f32 to vector<8x32xf32>
    %302 = arith.mulf %301, %300 : vector<8x32xf32>
    %303 = math.tanh %302 : vector<8x32xf32>
    %cst_119 = arith.constant 5.000000e-01 : f32
    %304 = vector.broadcast %cst_119 : f32 to vector<8x32xf32>
    %305 = arith.mulf %304, %303 : vector<8x32xf32>
    %cst_120 = arith.constant 5.000000e-01 : f32
    %306 = vector.broadcast %cst_120 : f32 to vector<8x32xf32>
    %307 = arith.addf %305, %306 : vector<8x32xf32>
    %308 = vector.extract_strided_slice %299 {offsets = [0, 32], sizes = [8, 32], strides = [1, 1]} : vector<8x128xf32> to vector<8x32xf32>
    %cst_121 = arith.constant 5.000000e-01 : f32
    %309 = vector.broadcast %cst_121 : f32 to vector<8x32xf32>
    %310 = arith.mulf %309, %308 : vector<8x32xf32>
    %311 = math.tanh %310 : vector<8x32xf32>
    %cst_122 = arith.constant 5.000000e-01 : f32
    %312 = vector.broadcast %cst_122 : f32 to vector<8x32xf32>
    %313 = arith.mulf %312, %311 : vector<8x32xf32>
    %cst_123 = arith.constant 5.000000e-01 : f32
    %314 = vector.broadcast %cst_123 : f32 to vector<8x32xf32>
    %315 = arith.addf %313, %314 : vector<8x32xf32>
    %316 = vector.extract_strided_slice %299 {offsets = [0, 64], sizes = [8, 32], strides = [1, 1]} : vector<8x128xf32> to vector<8x32xf32>
    %317 = math.tanh %316 : vector<8x32xf32>
    %318 = vector.extract_strided_slice %299 {offsets = [0, 96], sizes = [8, 32], strides = [1, 1]} : vector<8x128xf32> to vector<8x32xf32>
    %cst_124 = arith.constant 5.000000e-01 : f32
    %319 = vector.broadcast %cst_124 : f32 to vector<8x32xf32>
    %320 = arith.mulf %319, %318 : vector<8x32xf32>
    %321 = math.tanh %320 : vector<8x32xf32>
    %cst_125 = arith.constant 5.000000e-01 : f32
    %322 = vector.broadcast %cst_125 : f32 to vector<8x32xf32>
    %323 = arith.mulf %322, %321 : vector<8x32xf32>
    %cst_126 = arith.constant 5.000000e-01 : f32
    %324 = vector.broadcast %cst_126 : f32 to vector<8x32xf32>
    %325 = arith.addf %323, %324 : vector<8x32xf32>
    %326 = arith.mulf %315, %288 : vector<8x32xf32>
    %327 = arith.mulf %307, %317 : vector<8x32xf32>
    %328 = arith.addf %326, %327 : vector<8x32xf32>
    %329 = math.tanh %328 : vector<8x32xf32>
    %330 = arith.mulf %325, %329 : vector<8x32xf32>
    %331 = arith.index_cast %c7_i32 : i32 to index
    %c0_127 = arith.constant 0 : index
    %c0_128 = arith.constant 0 : index
    %332 = vector.load %arg8[%331, %c0_127, %c0_128] : memref<8x8x32xf32, #tpu.memory_space<vmem>>, vector<1x8x32xf32>
    %333 = vector.shape_cast %332 : vector<1x8x32xf32> to vector<8x32xf32>
    %334 = vector.shape_cast %330 : vector<8x32xf32> to vector<1x8x32xf32>
    tpu.vector_store %arg8[%331, %c0_127, %c0_128], %334 {strides = array<i32>} : memref<8x8x32xf32, #tpu.memory_space<vmem>>, vector<1x8x32xf32>,
    %c8_i32 = arith.constant 8 : i32
    %c0_129 = arith.constant 0 : index
    %c0_130 = arith.constant 0 : index
    %335 = vector.load %arg12[%c0_129, %c0_130] : memref<8x32xf32, #tpu.memory_space<vmem>>, vector<8x32xf32>
    tpu.vector_store %arg12[%c0_129, %c0_130], %330 {strides = array<i32>} : memref<8x32xf32, #tpu.memory_space<vmem>>, vector<8x32xf32>,
    %c0_131 = arith.constant 0 : index
    %c0_132 = arith.constant 0 : index
    %336 = vector.load %arg13[%c0_131, %c0_132] : memref<8x32xf32, #tpu.memory_space<vmem>>, vector<8x32xf32>
    tpu.vector_store %arg13[%c0_131, %c0_132], %328 {strides = array<i32>} : memref<8x32xf32, #tpu.memory_space<vmem>>, vector<8x32xf32>,
    %c0_i32_133 = arith.constant 0 : i32
    %337 = arith.cmpi eq, %arg1, %c0_i32_133 : i32
    %338 = arith.extui %337 : i1 to i32
    %c0_i32_134 = arith.constant 0 : i32
    %339 = arith.cmpi ne, %338, %c0_i32_134 : i32
    scf.if %339 {
      %c0_135 = arith.constant 0 : index
      %c0_136 = arith.constant 0 : index
      %340 = vector.load %arg9[%c0_135, %c0_136] : memref<8x32xf32, #tpu.memory_space<vmem>>, vector<8x32xf32>
      tpu.vector_store %arg9[%c0_135, %c0_136], %330 {strides = array<i32>} : memref<8x32xf32, #tpu.memory_space<vmem>>, vector<8x32xf32>,
      %c0_137 = arith.constant 0 : index
      %c0_138 = arith.constant 0 : index
      %341 = vector.load %arg10[%c0_137, %c0_138] : memref<8x32xf32, #tpu.memory_space<vmem>>, vector<8x32xf32>
      tpu.vector_store %arg10[%c0_137, %c0_138], %328 {strides = array<i32>} : memref<8x32xf32, #tpu.memory_space<vmem>>, vector<8x32xf32>,
    } else {
    }
    return
  }
  func.func @transform_0(%arg0: i32, %arg1: i32) -> (i32, i32, i32) {
    %c0_i32 = arith.constant 0 : i32
    %c0_i32_0 = arith.constant 0 : i32
    return %arg1, %arg0, %c0_i32 : i32, i32, i32
  }
  func.func @transform_1(%arg0: i32, %arg1: i32) -> (i32, i32) {
    %c0_i32 = arith.constant 0 : i32
    %c0_i32_0 = arith.constant 0 : i32
    %c0_i32_1 = arith.constant 0 : i32
    return %c0_i32, %c0_i32_0 : i32, i32
  }
  func.func @transform_2(%arg0: i32, %arg1: i32) -> (i32, i32) {
    %c0_i32 = arith.constant 0 : i32
    %c0_i32_0 = arith.constant 0 : i32
    %c0_i32_1 = arith.constant 0 : i32
    return %c0_i32, %c0_i32_0 : i32, i32
  }
  func.func @transform_3(%arg0: i32, %arg1: i32) -> (i32, i32) {
    %c0_i32 = arith.constant 0 : i32
    %c0_i32_0 = arith.constant 0 : i32
    %c0_i32_1 = arith.constant 0 : i32
    return %c0_i32, %c0_i32_0 : i32, i32
  }
  func.func @transform_4(%arg0: i32, %arg1: i32) -> (i32, i32) {
    %c0_i32 = arith.constant 0 : i32
    %c0_i32_0 = arith.constant 0 : i32
    return %arg0, %c0_i32 : i32, i32
  }
  func.func @transform_5(%arg0: i32, %arg1: i32) -> (i32, i32) {
    %c0_i32 = arith.constant 0 : i32
    %c0_i32_0 = arith.constant 0 : i32
    return %arg0, %c0_i32 : i32, i32
  }
  func.func @transform_6(%arg0: i32, %arg1: i32) -> (i32, i32, i32) {
    %c0_i32 = arith.constant 0 : i32
    %c0_i32_0 = arith.constant 0 : i32
    return %arg1, %arg0, %c0_i32 : i32, i32, i32
  }
  func.func @transform_7(%arg0: i32, %arg1: i32) -> (i32, i32) {
    %c0_i32 = arith.constant 0 : i32
    %c0_i32_0 = arith.constant 0 : i32
    return %arg0, %c0_i32 : i32, i32
  }
  func.func @transform_8(%arg0: i32, %arg1: i32) -> (i32, i32) {
    %c0_i32 = arith.constant 0 : i32
    %c0_i32_0 = arith.constant 0 : i32
    return %arg0, %c0_i32 : i32, i32
  }
}

</mosaic_0001>

<llo_original>
// kernel: decoder_lstm_forward.5
$region0: #{decoder_lstm_forward.5}
  #allocation0 [shape = 'u32[]', space=smem, size = 0x4, offset = 0x4, fixed_abs, tag = 'smem constant byte address 0x4 - core index']
  #allocation1 [shape = 'u32[144,128]{1,0:T(1,128)}', space=vmem, size = 0x12000, scoped, tag = 'internal scratch']
  #allocation2 [shape = 'f32[64,16]{1,0:T(8,128)}', space=vmem, size = 0x8000, scoped, tag = 'scratch operand']
  %s0 = inlined_call_operand.vmem [shape: f32[64,32], index: 0, kind: input, shape index: {}]
  %s1 = inlined_call_operand.vmem [shape: f32[32,16], index: 1, kind: input, shape index: {}]
  %s2 = inlined_call_operand.vmem [shape: f32[1,16], index: 2, kind: input, shape index: {}]
  %s3 = inlined_call_operand.vmem [shape: f32[64,16], index: 3, kind: output, shape index: {}]
  %s4 = sld [smem:[#allocation0]]
  $region30: #{decoder_lstm_forward.5} parent=0
    _
  %s6 = ssub.s32 1, %s4
  %s7 = scalar_select 0, %s6, %s4
  // Predicated region
  $region2: #{decoder_lstm_forward.5} parent=0 // pred_check
    _
  $region3: #{decoder_lstm_forward.5} parent=0 // pred_check_branch
    %9 = sbr.rel (0) target = $region5
  $region4: #{decoder_lstm_forward.5} parent=0 // pred_region
    _
  $region5: #{decoder_lstm_forward.5} parent=0 // pred_fallthru
    _
  // Predicated region
  $region6: #{decoder_lstm_forward.5} parent=0 // pred_check
    _
  $region7: #{decoder_lstm_forward.5} parent=0 // pred_check_branch
    %11 = sbr.rel (0) target = $region9
  $region8: #{decoder_lstm_forward.5} parent=0 // pred_region
    _
  $region9: #{decoder_lstm_forward.5} parent=0 // pred_fallthru
    _
  // Predicated region
  $region10: #{decoder_lstm_forward.5} parent=0 // pred_check
    _
  $region11: #{decoder_lstm_forward.5} parent=0 // pred_check_branch
    %13 = sbr.rel (0) target = $region13
  $region12: #{decoder_lstm_forward.5} parent=0 // pred_region
    _
  $region13: #{decoder_lstm_forward.5} parent=0 // pred_fallthru
    _
  %p14 = scmp.eq.s32.totalorder 0, 0
  // Predicated region
  $region14: #{decoder_lstm_forward.5} parent=0 // pred_check
    %p15 = pneg %p14
  $region15: #{decoder_lstm_forward.5} parent=0 // pred_check_branch
    %17 = sbr.rel (%p15) target = $region17
  $region16: #{decoder_lstm_forward.5} parent=0 // pred_region
    %vm18 = vcmask 130048
    %19 = vst.msk [vmem:[#allocation2] sm:$0xff] %vm18, 0.0
    %20 = vst.msk [vmem:[#allocation2 + $0x8] sm:$0xff] %vm18, 0.0
    %21 = vst.msk [vmem:[#allocation2 + $0x10] sm:$0xff] %vm18, 0.0
    %22 = vst.msk [vmem:[#allocation2 + $0x18] sm:$0xff] %vm18, 0.0
    %23 = vst.msk [vmem:[#allocation2 + $0x20] sm:$0xff] %vm18, 0.0
    %24 = vst.msk [vmem:[#allocation2 + $0x28] sm:$0xff] %vm18, 0.0
    %25 = vst.msk [vmem:[#allocation2 + $0x30] sm:$0xff] %vm18, 0.0
    %26 = vst.msk [vmem:[#allocation2 + $0x38] sm:$0xff] %vm18, 0.0
  $region17: #{decoder_lstm_forward.5} parent=0 // pred_fallthru
    _
  %v27 = vld [vmem:[#allocation2] sm:$0xff]
  %v28 = vld [vmem:[#allocation2 + $0x8] sm:$0xff]
  %v29 = vld [vmem:[#allocation2 + $0x10] sm:$0xff]
  %v30 = vld [vmem:[#allocation2 + $0x18] sm:$0xff]
  %v31 = vld [vmem:[#allocation2 + $0x20] sm:$0xff]
  %v32 = vld [vmem:[#allocation2 + $0x28] sm:$0xff]
  %v33 = vld [vmem:[#allocation2 + $0x30] sm:$0xff]
  %v34 = vld [vmem:[#allocation2 + $0x38] sm:$0xff]
  %v35 = vld [vmem:[%s0] sm:$0xff]
  %v36 = vld [vmem:[%s0 + $0x8] sm:$0xff]
  %v37 = vld [vmem:[%s0 + $0x10] sm:$0xff]
  %v38 = vld [vmem:[%s0 + $0x18] sm:$0xff]
  %v39 = vld [vmem:[%s0 + $0x20] sm:$0xff]
  %v40 = vld [vmem:[%s0 + $0x28] sm:$0xff]
  %v41 = vld [vmem:[%s0 + $0x30] sm:$0xff]
  %v42 = vld [vmem:[%s0 + $0x38] sm:$0xff]
  %v43 = vld [vmem:[%s1] sm:$0xff]
  %v44 = vld [vmem:[%s1 + $0x8] sm:$0xff]
  %v45 = vld [vmem:[%s1 + $0x10] sm:$0xff]
  %v46 = vld [vmem:[%s1 + $0x18] sm:$0xff]
  %vm47 = vcmask 261120
  %v49 = vsel %vm47, %v35, 0
  %v52 = vsel %vm47, %v36, 0
  %v55 = vsel %vm47, %v37, 0
  %v58 = vsel %vm47, %v38, 0
  %v61 = vsel %vm47, %v39, 0
  %v64 = vsel %vm47, %v40, 0
  %v67 = vsel %vm47, %v41, 0
  %v70 = vsel %vm47, %v42, 0
  %72 = vmatprep.subr.mxu0 0.0
  %73 = vmatpush1.msra.mxu0 0.0
  %74 = vmatprep.subr.mxu0 0.0
  %75 = vmatpush1.msra.mxu0 0.0
  %76 = vmatprep.subr.mxu0 0.0
  %77 = vmatpush1.msra.mxu0 0.0
  %78 = vmatprep.subr.mxu0 0.0
  %79 = vmatpush1.msra.mxu0 0.0
  %80 = vmatprep.subr.mxu0 0.0
  %81 = vmatpush1.msra.mxu0 0.0
  %82 = vmatprep.subr.mxu0 0.0
  %83 = vmatpush1.msra.mxu0 0.0
  %84 = vmatprep.subr.mxu0 0.0
  %85 = vmatpush1.msra.mxu0 0.0
  %86 = vmatprep.subr.mxu0 0.0
  %87 = vmatpush1.msra.mxu0 0.0
  %88 = vmatprep.subr.mxu0 0.0
  %89 = vmatpush1.msra.mxu0 0.0
  %90 = vmatprep.subr.mxu0 0.0
  %91 = vmatpush1.msra.mxu0 0.0
  %92 = vmatprep.subr.mxu0 0.0
  %93 = vmatpush1.msra.mxu0 0.0
  %94 = vmatprep.subr.mxu0 0.0
  %95 = vmatpush1.msra.mxu0 0.0
  %96 = vmatprep.subr.mxu0 0.0
  %97 = vmatpush1.msra.mxu0 %v46
  %98 = vmatprep.subr.mxu0 0.0
  %99 = vmatpush1.msra.mxu0 %v45
  %100 = vmatprep.subr.mxu0 0.0
  %101 = vmatpush1.msra.mxu0 %v44
  %102 = vmatprep.subr.mxu0 0.0
  %103 = vmatpush1.msra.mxu0 %v43
  %104 = vmatprep.subr.mxu0 0.0
  %105 = vmatpush2.msra.mxu0 0.0
  %106 = vmatprep.subr.mxu0 0.0
  %107 = vmatpush2.msra.mxu0 0.0
  %108 = vmatprep.subr.mxu0 0.0
  %109 = vmatpush2.msra.mxu0 0.0
  %110 = vmatprep.subr.mxu0 0.0
  %111 = vmatpush2.msra.mxu0 0.0
  %112 = vmatprep.subr.mxu0 0.0
  %113 = vmatpush2.msra.mxu0 0.0
  %114 = vmatprep.subr.mxu0 0.0
  %115 = vmatpush2.msra.mxu0 0.0
  %116 = vmatprep.subr.mxu0 0.0
  %117 = vmatpush2.msra.mxu0 0.0
  %118 = vmatprep.subr.mxu0 0.0
  %119 = vmatpush2.msra.mxu0 0.0
  %120 = vmatprep.subr.mxu0 0.0
  %121 = vmatpush2.msra.mxu0 0.0
  %122 = vmatprep.subr.mxu0 0.0
  %123 = vmatpush2.msra.mxu0 0.0
  %124 = vmatprep.subr.mxu0 0.0
  %125 = vmatpush2.msra.mxu0 0.0
  %126 = vmatprep.subr.mxu0 0.0
  %127 = vmatpush2.msra.mxu0 0.0
  %128 = vmatprep.subr.mxu0 0.0
  %129 = vmatpush2.msra.mxu0 0.0
  %130 = vmatprep.subr.mxu0 0.0
  %131 = vmatpush2.msra.mxu0 0.0
  %132 = vmatprep.subr.mxu0 0.0
  %133 = vmatpush2.msra.mxu0 0.0
  %134 = vmatprep.subr.mxu0 0.0
  %135 = vmatpush2.msra.mxu0 0.0
  %136 = vmatprep.mubr.f32.mxu0 0.0
  %137 = vmatmul.mubr.f32.gmra.mxu0 %v49
  %v138 = vpop.f32.mrf.mxu0
  %v139 = vadd.f32 0.0, %v138
  %v140 = vpop.f32.mrf.mxu0
  %141 = vmatprep.mubr.f32.mxu0 0.0
  %142 = vmatmul.mubr.f32.gmra.mxu0 %v52
  %v143 = vpop.f32.mrf.mxu0
  %v144 = vadd.f32 0.0, %v143
  %v145 = vpop.f32.mrf.mxu0
  %146 = vmatprep.mubr.f32.mxu0 0.0
  %147 = vmatmul.mubr.f32.gmra.mxu0 %v55
  %v148 = vpop.f32.mrf.mxu0
  %v149 = vadd.f32 0.0, %v148
  %v150 = vpop.f32.mrf.mxu0
  %151 = vmatprep.mubr.f32.mxu0 0.0
  %152 = vmatmul.mubr.f32.gmra.mxu0 %v58
  %v153 = vpop.f32.mrf.mxu0
  %v154 = vadd.f32 0.0, %v153
  %v155 = vpop.f32.mrf.mxu0
  %156 = vmatprep.mubr.f32.mxu0 0.0
  %157 = vmatmul.mubr.f32.gmra.mxu0 %v61
  %v158 = vpop.f32.mrf.mxu0
  %v159 = vadd.f32 0.0, %v158
  %v160 = vpop.f32.mrf.mxu0
  %161 = vmatprep.mubr.f32.mxu0 0.0
  %162 = vmatmul.mubr.f32.gmra.mxu0 %v64
  %v163 = vpop.f32.mrf.mxu0
  %v164 = vadd.f32 0.0, %v163
  %v165 = vpop.f32.mrf.mxu0
  %166 = vmatprep.mubr.f32.mxu0 0.0
  %167 = vmatmul.mubr.f32.gmra.mxu0 %v67
  %v168 = vpop.f32.mrf.mxu0
  %v169 = vadd.f32 0.0, %v168
  %v170 = vpop.f32.mrf.mxu0
  %171 = vmatprep.mubr.f32.mxu0 0.0
  %172 = vmatmul.mubr.f32.gmra.mxu0 %v70
  %v173 = vpop.f32.mrf.mxu0
  %v174 = vadd.f32 0.0, %v173
  %v175 = vpop.f32.mrf.mxu0
  %176 = vdwg.mxu0
  %v177 = vadd.f32 %v27, %v139
  %v178 = vadd.f32 %v28, %v144
  %v179 = vadd.f32 %v29, %v149
  %v180 = vadd.f32 %v30, %v154
  %v181 = vadd.f32 %v31, %v159
  %v182 = vadd.f32 %v32, %v164
  %v183 = vadd.f32 %v33, %v169
  %v184 = vadd.f32 %v34, %v174
  %vm185 = vcmask 130048
  %186 = vst.msk [vmem:[#allocation2] sm:$0xff] %vm185, %v177
  %187 = vst.msk [vmem:[#allocation2 + $0x8] sm:$0xff] %vm185, %v178
  %188 = vst.msk [vmem:[#allocation2 + $0x10] sm:$0xff] %vm185, %v179
  %189 = vst.msk [vmem:[#allocation2 + $0x18] sm:$0xff] %vm185, %v180
  %190 = vst.msk [vmem:[#allocation2 + $0x20] sm:$0xff] %vm185, %v181
  %191 = vst.msk [vmem:[#allocation2 + $0x28] sm:$0xff] %vm185, %v182
  %192 = vst.msk [vmem:[#allocation2 + $0x30] sm:$0xff] %vm185, %v183
  %193 = vst.msk [vmem:[#allocation2 + $0x38] sm:$0xff] %vm185, %v184
  // Predicated region
  $region18: #{decoder_lstm_forward.5} parent=0 // pred_check
    %p194 = pneg %p14
  $region19: #{decoder_lstm_forward.5} parent=0 // pred_check_branch
    %196 = sbr.rel (%p194) target = $region21
  $region20: #{decoder_lstm_forward.5} parent=0 // pred_region
    %v197 = vld [vmem:[#allocation2] sm:$0xff]
    %v198 = vld [vmem:[#allocation2 + $0x8] sm:$0xff]
    %v199 = vld [vmem:[#allocation2 + $0x10] sm:$0xff]
    %v200 = vld [vmem:[#allocation2 + $0x18] sm:$0xff]
    %v201 = vld [vmem:[#allocation2 + $0x20] sm:$0xff]
    %v202 = vld [vmem:[#allocation2 + $0x28] sm:$0xff]
    %v203 = vld [vmem:[#allocation2 + $0x30] sm:$0xff]
    %v204 = vld [vmem:[#allocation2 + $0x38] sm:$0xff]
    %v205 = vld [vmem:[%s2] sm:$0x1]
    %v207 = vlaneseq
    %v208 = vshrl.u32 %v207, 7
    %v209 = vsub.s32 0, %v208
    %v210 = vrot.slane %v205, %v209
    %v212 = vadd.f32 %v197, %v210
    %v213 = vadd.f32 %v198, %v210
    %v214 = vadd.f32 %v199, %v210
    %v215 = vadd.f32 %v200, %v210
    %v216 = vadd.f32 %v201, %v210
    %v217 = vadd.f32 %v202, %v210
    %v218 = vadd.f32 %v203, %v210
    %v219 = vadd.f32 %v204, %v210
    %220 = vst.msk [vmem:[%s3] sm:$0xff] %vm185, %v212
    %221 = vst.msk [vmem:[%s3 + $0x8] sm:$0xff] %vm185, %v213
    %222 = vst.msk [vmem:[%s3 + $0x10] sm:$0xff] %vm185, %v214
    %223 = vst.msk [vmem:[%s3 + $0x18] sm:$0xff] %vm185, %v215
    %224 = vst.msk [vmem:[%s3 + $0x20] sm:$0xff] %vm185, %v216
    %225 = vst.msk [vmem:[%s3 + $0x28] sm:$0xff] %vm185, %v217
    %226 = vst.msk [vmem:[%s3 + $0x30] sm:$0xff] %vm185, %v218
    %227 = vst.msk [vmem:[%s3 + $0x38] sm:$0xff] %vm185, %v219
  $region21: #{decoder_lstm_forward.5} parent=0 // pred_fallthru
    _
  // Predicated region
  $region22: #{decoder_lstm_forward.5} parent=0 // pred_check
    _
  $region23: #{decoder_lstm_forward.5} parent=0 // pred_check_branch
    %229 = sbr.rel (0) target = $region25
  $region24: #{decoder_lstm_forward.5} parent=0 // pred_region
    _
  $region25: #{decoder_lstm_forward.5} parent=0 // pred_fallthru
    _
  // Predicated region
  $region26: #{decoder_lstm_forward.5} parent=0 // pred_check
    _
  $region27: #{decoder_lstm_forward.5} parent=0 // pred_check_branch
    %231 = sbr.rel (0) target = $region29
  $region28: #{decoder_lstm_forward.5} parent=0 // pred_region
    _
  $region29: #{decoder_lstm_forward.5} parent=0 // pred_fallthru
    _

// kernel: decoder_lstm_forward.3
$region0: #{decoder_lstm_forward.3}
  #allocation0 [shape = 'u32[]', space=smem, size = 0x4, offset = 0x4, fixed_abs, tag = 'smem constant byte address 0x4 - core index']
  #allocation1 [shape = 'u32[144,128]{1,0:T(1,128)}', space=vmem, size = 0x12000, scoped, tag = 'internal scratch']
  #allocation2 [shape = 'f32[8,8,128]{2,1,0:T(8,128)}', space=vmem, size = 0x8000, scoped, tag = 'scratch operand']
  #allocation3 [shape = 'f32[8,32]{1,0:T(8,128)}', space=vmem, size = 0x1000, scoped, tag = 'scratch operand']
  #allocation4 [shape = 'f32[8,32]{1,0:T(8,128)}', space=vmem, size = 0x1000, scoped, tag = 'scratch operand']
  %s0 = inlined_call_operand.vmem [shape: f32[8,8,16], index: 0, kind: input, shape index: {}]
  %s1 = inlined_call_operand.vmem [shape: f32[16,128], index: 1, kind: input, shape index: {}]
  %s2 = inlined_call_operand.vmem [shape: f32[32,128], index: 2, kind: input, shape index: {}]
  %s3 = inlined_call_operand.vmem [shape: f32[1,128], index: 3, kind: input, shape index: {}]
  %s4 = inlined_call_operand.vmem [shape: f32[8,32], index: 4, kind: input, shape index: {}]
  %s5 = inlined_call_operand.vmem [shape: f32[8,32], index: 5, kind: input, shape index: {}]
  %s6 = inlined_call_operand.vmem [shape: f32[8,8,32], index: 6, kind: output, shape index: {0}]
  %s7 = inlined_call_operand.vmem [shape: f32[8,32], index: 7, kind: output, shape index: {1}]
  %s8 = inlined_call_operand.vmem [shape: f32[8,32], index: 8, kind: output, shape index: {2}]
  %9 = xla_tuple %s6, %s7, %s8
  %s10 = sld [smem:[#allocation0]]
  $region58: #{decoder_lstm_forward.3} parent=0
    _
  %s12 = ssub.s32 1, %s10
  %s13 = scalar_select 0, %s12, %s10
  // Predicated region
  $region2: #{decoder_lstm_forward.3} parent=0 // pred_check
    _
  $region3: #{decoder_lstm_forward.3} parent=0 // pred_check_branch
    %15 = sbr.rel (0) target = $region5
  $region4: #{decoder_lstm_forward.3} parent=0 // pred_region
    _
  $region5: #{decoder_lstm_forward.3} parent=0 // pred_fallthru
    _
  // Predicated region
  $region6: #{decoder_lstm_forward.3} parent=0 // pred_check
    _
  $region7: #{decoder_lstm_forward.3} parent=0 // pred_check_branch
    %17 = sbr.rel (0) target = $region9
  $region8: #{decoder_lstm_forward.3} parent=0 // pred_region
    _
  $region9: #{decoder_lstm_forward.3} parent=0 // pred_fallthru
    _
  // Predicated region
  $region10: #{decoder_lstm_forward.3} parent=0 // pred_check
    _
  $region11: #{decoder_lstm_forward.3} parent=0 // pred_check_branch
    %19 = sbr.rel (0) target = $region13
  $region12: #{decoder_lstm_forward.3} parent=0 // pred_region
    _
  $region13: #{decoder_lstm_forward.3} parent=0 // pred_fallthru
    _
  // Predicated region
  $region14: #{decoder_lstm_forward.3} parent=0 // pred_check
    _
  $region15: #{decoder_lstm_forward.3} parent=0 // pred_check_branch
    %21 = sbr.rel (0) target = $region17
  $region16: #{decoder_lstm_forward.3} parent=0 // pred_region
    _
  $region17: #{decoder_lstm_forward.3} parent=0 // pred_fallthru
    _
  // Predicated region
  $region18: #{decoder_lstm_forward.3} parent=0 // pred_check
    _
  $region19: #{decoder_lstm_forward.3} parent=0 // pred_check_branch
    %23 = sbr.rel (0) target = $region21
  $region20: #{decoder_lstm_forward.3} parent=0 // pred_region
    _
  $region21: #{decoder_lstm_forward.3} parent=0 // pred_fallthru
    _
  // Predicated region
  $region22: #{decoder_lstm_forward.3} parent=0 // pred_check
    _
  $region23: #{decoder_lstm_forward.3} parent=0 // pred_check_branch
    %25 = sbr.rel (0) target = $region25
  $region24: #{decoder_lstm_forward.3} parent=0 // pred_region
    _
  $region25: #{decoder_lstm_forward.3} parent=0 // pred_fallthru
    _
  %p26 = scmp.eq.s32.totalorder 0, 0
  // Predicated region
  $region26: #{decoder_lstm_forward.3} parent=0 // pred_check
    %p27 = pneg %p26
  $region27: #{decoder_lstm_forward.3} parent=0 // pred_check_branch
    %29 = sbr.rel (%p27) target = $region29
  $region28: #{decoder_lstm_forward.3} parent=0 // pred_region
    %v30 = vld [vmem:[%s4] sm:$0xff]
    %vm31 = vcmask 261120
    %32 = vst.msk [vmem:[#allocation3] sm:$0xff] %vm31, %v30
    %v33 = vld [vmem:[%s5] sm:$0xff]
    %34 = vst.msk [vmem:[#allocation4] sm:$0xff] %vm31, %v33
  $region29: #{decoder_lstm_forward.3} parent=0 // pred_fallthru
    _
  %v35 = vld [vmem:[%s0] sm:$0xff]
  %v36 = vld [vmem:[%s0 + $0x8] sm:$0xff]
  %v37 = vld [vmem:[%s0 + $0x10] sm:$0xff]
  %v38 = vld [vmem:[%s0 + $0x18] sm:$0xff]
  %v39 = vld [vmem:[%s0 + $0x20] sm:$0xff]
  %v40 = vld [vmem:[%s0 + $0x28] sm:$0xff]
  %v41 = vld [vmem:[%s0 + $0x30] sm:$0xff]
  %v42 = vld [vmem:[%s0 + $0x38] sm:$0xff]
  %v43 = vld [vmem:[%s1] sm:$0xff]
  %v44 = vld [vmem:[%s1 + $0x8] sm:$0xff]
  %v45 = vld [vmem:[%s3] sm:$0x1]
  %v47 = vlaneseq
  %v48 = vshrl.u32 %v47, 7
  %v49 = vsub.s32 0, %v48
  %v50 = vrot.slane %v45, %v49
  %vm52 = vcmask 130048
  %v54 = vsel %vm52, %v35, 0
  %v57 = vsel %vm52, %v36, 0
  %v60 = vsel %vm52, %v37, 0
  %v63 = vsel %vm52, %v38, 0
  %v66 = vsel %vm52, %v39, 0
  %v69 = vsel %vm52, %v40, 0
  %v72 = vsel %vm52, %v41, 0
  %v75 = vsel %vm52, %v42, 0
  %77 = vmatprep.subr.mxu0 0.0
  %78 = vmatpush1.msra.mxu0 0.0
  %79 = vmatprep.subr.mxu0 0.0
  %80 = vmatpush1.msra.mxu0 0.0
  %81 = vmatprep.subr.mxu0 0.0
  %82 = vmatpush1.msra.mxu0 0.0
  %83 = vmatprep.subr.mxu0 0.0
  %84 = vmatpush1.msra.mxu0 0.0
  %85 = vmatprep.subr.mxu0 0.0
  %86 = vmatpush1.msra.mxu0 0.0
  %87 = vmatprep.subr.mxu0 0.0
  %88 = vmatpush1.msra.mxu0 0.0
  %89 = vmatprep.subr.mxu0 0.0
  %90 = vmatpush1.msra.mxu0 0.0
  %91 = vmatprep.subr.mxu0 0.0
  %92 = vmatpush1.msra.mxu0 0.0
  %93 = vmatprep.subr.mxu0 0.0
  %94 = vmatpush1.msra.mxu0 0.0
  %95 = vmatprep.subr.mxu0 0.0
  %96 = vmatpush1.msra.mxu0 0.0
  %97 = vmatprep.subr.mxu0 0.0
  %98 = vmatpush1.msra.mxu0 0.0
  %99 = vmatprep.subr.mxu0 0.0
  %100 = vmatpush1.msra.mxu0 0.0
  %101 = vmatprep.subr.mxu0 0.0
  %102 = vmatpush1.msra.mxu0 0.0
  %103 = vmatprep.subr.mxu0 0.0
  %104 = vmatpush1.msra.mxu0 0.0
  %105 = vmatprep.subr.mxu0 0.0
  %106 = vmatpush1.msra.mxu0 %v44
  %107 = vmatprep.subr.mxu0 0.0
  %108 = vmatpush1.msra.mxu0 %v43
  %109 = vmatprep.subr.mxu0 0.0
  %110 = vmatpush2.msra.mxu0 0.0
  %111 = vmatprep.subr.mxu0 0.0
  %112 = vmatpush2.msra.mxu0 0.0
  %113 = vmatprep.subr.mxu0 0.0
  %114 = vmatpush2.msra.mxu0 0.0
  %115 = vmatprep.subr.mxu0 0.0
  %116 = vmatpush2.msra.mxu0 0.0
  %117 = vmatprep.subr.mxu0 0.0
  %118 = vmatpush2.msra.mxu0 0.0
  %119 = vmatprep.subr.mxu0 0.0
  %120 = vmatpush2.msra.mxu0 0.0
  %121 = vmatprep.subr.mxu0 0.0
  %122 = vmatpush2.msra.mxu0 0.0
  %123 = vmatprep.subr.mxu0 0.0
  %124 = vmatpush2.msra.mxu0 0.0
  %125 = vmatprep.subr.mxu0 0.0
  %126 = vmatpush2.msra.mxu0 0.0
  %127 = vmatprep.subr.mxu0 0.0
  %128 = vmatpush2.msra.mxu0 0.0
  %129 = vmatprep.subr.mxu0 0.0
  %130 = vmatpush2.msra.mxu0 0.0
  %131 = vmatprep.subr.mxu0 0.0
  %132 = vmatpush2.msra.mxu0 0.0
  %133 = vmatprep.subr.mxu0 0.0
  %134 = vmatpush2.msra.mxu0 0.0
  %135 = vmatprep.subr.mxu0 0.0
  %136 = vmatpush2.msra.mxu0 0.0
  %137 = vmatprep.subr.mxu0 0.0
  %138 = vmatpush2.msra.mxu0 0.0
  %139 = vmatprep.subr.mxu0 0.0
  %140 = vmatpush2.msra.mxu0 0.0
  %141 = vmatprep.mubr.f32.mxu0 0.0
  %142 = vmatmul.mubr.f32.gmra.mxu0 %v54
  %v143 = vpop.f32.mrf.mxu0
  %v144 = vadd.f32 %v50, %v143
  %v145 = vpop.f32.mrf.mxu0
  %146 = vmatprep.mubr.f32.mxu0 0.0
  %147 = vmatmul.mubr.f32.gmra.mxu0 %v57
  %v148 = vpop.f32.mrf.mxu0
  %v149 = vadd.f32 %v50, %v148
  %v150 = vpop.f32.mrf.mxu0
  %151 = vmatprep.mubr.f32.mxu0 0.0
  %152 = vmatmul.mubr.f32.gmra.mxu0 %v60
  %v153 = vpop.f32.mrf.mxu0
  %v154 = vadd.f32 %v50, %v153
  %v155 = vpop.f32.mrf.mxu0
  %156 = vmatprep.mubr.f32.mxu0 0.0
  %157 = vmatmul.mubr.f32.gmra.mxu0 %v63
  %v158 = vpop.f32.mrf.mxu0
  %v159 = vadd.f32 %v50, %v158
  %v160 = vpop.f32.mrf.mxu0
  %161 = vmatprep.mubr.f32.mxu0 0.0
  %162 = vmatmul.mubr.f32.gmra.mxu0 %v66
  %v163 = vpop.f32.mrf.mxu0
  %v164 = vadd.f32 %v50, %v163
  %v165 = vpop.f32.mrf.mxu0
  %166 = vmatprep.mubr.f32.mxu0 0.0
  %167 = vmatmul.mubr.f32.gmra.mxu0 %v69
  %v168 = vpop.f32.mrf.mxu0
  %v169 = vadd.f32 %v50, %v168
  %v170 = vpop.f32.mrf.mxu0
  %171 = vmatprep.mubr.f32.mxu0 0.0
  %172 = vmatmul.mubr.f32.gmra.mxu0 %v72
  %v173 = vpop.f32.mrf.mxu0
  %v174 = vadd.f32 %v50, %v173
  %v175 = vpop.f32.mrf.mxu0
  %176 = vmatprep.mubr.f32.mxu0 0.0
  %177 = vmatmul.mubr.f32.gmra.mxu0 %v75
  %v178 = vpop.f32.mrf.mxu0
  %v179 = vadd.f32 %v50, %v178
  %v180 = vpop.f32.mrf.mxu0
  %181 = vdwg.mxu0
  %182 = vst [vmem:[#allocation2] sm:$0xff] %v144
  %183 = vst [vmem:[#allocation2 + $0x8] sm:$0xff] %v149
  %184 = vst [vmem:[#allocation2 + $0x10] sm:$0xff] %v154
  %185 = vst [vmem:[#allocation2 + $0x18] sm:$0xff] %v159
  %186 = vst [vmem:[#allocation2 + $0x20] sm:$0xff] %v164
  %187 = vst [vmem:[#allocation2 + $0x28] sm:$0xff] %v169
  %188 = vst [vmem:[#allocation2 + $0x30] sm:$0xff] %v174
  %189 = vst [vmem:[#allocation2 + $0x38] sm:$0xff] %v179
  %v190 = vld [vmem:[%s2] sm:$0xff]
  %v191 = vld [vmem:[%s2 + $0x8] sm:$0xff]
  %v192 = vld [vmem:[%s2 + $0x10] sm:$0xff]
  %v193 = vld [vmem:[%s2 + $0x18] sm:$0xff]
  %v194 = vld [vmem:[#allocation3] sm:$0xff]
  %v195 = vld [vmem:[#allocation4] sm:$0xff]
  %v196 = vld [vmem:[#allocation2] sm:$0xff]
  %vm197 = vcmask 261120
  %v199 = vsel %vm197, %v194, 0
  %201 = vmatprep.subr.mxu0 0.0
  %202 = vmatpush1.msra.mxu0 0.0
  %203 = vmatprep.subr.mxu0 0.0
  %204 = vmatpush1.msra.mxu0 0.0
  %205 = vmatprep.subr.mxu0 0.0
  %206 = vmatpush1.msra.mxu0 0.0
  %207 = vmatprep.subr.mxu0 0.0
  %208 = vmatpush1.msra.mxu0 0.0
  %209 = vmatprep.subr.mxu0 0.0
  %210 = vmatpush1.msra.mxu0 0.0
  %211 = vmatprep.subr.mxu0 0.0
  %212 = vmatpush1.msra.mxu0 0.0
  %213 = vmatprep.subr.mxu0 0.0
  %214 = vmatpush1.msra.mxu0 0.0
  %215 = vmatprep.subr.mxu0 0.0
  %216 = vmatpush1.msra.mxu0 0.0
  %217 = vmatprep.subr.mxu0 0.0
  %218 = vmatpush1.msra.mxu0 0.0
  %219 = vmatprep.subr.mxu0 0.0
  %220 = vmatpush1.msra.mxu0 0.0
  %221 = vmatprep.subr.mxu0 0.0
  %222 = vmatpush1.msra.mxu0 0.0
  %223 = vmatprep.subr.mxu0 0.0
  %224 = vmatpush1.msra.mxu0 0.0
  %225 = vmatprep.subr.mxu0 0.0
  %226 = vmatpush1.msra.mxu0 %v193
  %227 = vmatprep.subr.mxu0 0.0
  %228 = vmatpush1.msra.mxu0 %v192
  %229 = vmatprep.subr.mxu0 0.0
  %230 = vmatpush1.msra.mxu0 %v191
  %231 = vmatprep.subr.mxu0 0.0
  %232 = vmatpush1.msra.mxu0 %v190
  %233 = vmatprep.subr.mxu0 0.0
  %234 = vmatpush2.msra.mxu0 0.0
  %235 = vmatprep.subr.mxu0 0.0
  %236 = vmatpush2.msra.mxu0 0.0
  %237 = vmatprep.subr.mxu0 0.0
  %238 = vmatpush2.msra.mxu0 0.0
  %239 = vmatprep.subr.mxu0 0.0
  %240 = vmatpush2.msra.mxu0 0.0
  %241 = vmatprep.subr.mxu0 0.0
  %242 = vmatpush2.msra.mxu0 0.0
  %243 = vmatprep.subr.mxu0 0.0
  %244 = vmatpush2.msra.mxu0 0.0
  %245 = vmatprep.subr.mxu0 0.0
  %246 = vmatpush2.msra.mxu0 0.0
  %247 = vmatprep.subr.mxu0 0.0
  %248 = vmatpush2.msra.mxu0 0.0
  %249 = vmatprep.subr.mxu0 0.0
  %250 = vmatpush2.msra.mxu0 0.0
  %251 = vmatprep.subr.mxu0 0.0
  %252 = vmatpush2.msra.mxu0 0.0
  %253 = vmatprep.subr.mxu0 0.0
  %254 = vmatpush2.msra.mxu0 0.0
  %255 = vmatprep.subr.mxu0 0.0
  %256 = vmatpush2.msra.mxu0 0.0
  %257 = vmatprep.subr.mxu0 0.0
  %258 = vmatpush2.msra.mxu0 0.0
  %259 = vmatprep.subr.mxu0 0.0
  %260 = vmatpush2.msra.mxu0 0.0
  %261 = vmatprep.subr.mxu0 0.0
  %262 = vmatpush2.msra.mxu0 0.0
  %263 = vmatprep.subr.mxu0 0.0
  %264 = vmatpush2.msra.mxu0 0.0
  %265 = vmatprep.mubr.f32.mxu0 0.0
  %266 = vmatmul.mubr.f32.gmra.mxu0 %v199
  %v267 = vpop.f32.mrf.mxu0
  %v268 = vadd.f32 0.0, %v267
  %v269 = vpop.f32.mrf.mxu0
  %270 = vdwg.mxu0
  %v271 = vadd.f32 %v196, %v268
  %v272 = vmul.f32 %v271, 0.5
  %v273 = vtanh.pop %v272
  %v274 = vmul.f32 %v273, 0.5
  %v275 = vadd.f32 %v274, 0.5
  %v276 = vtanh.pop %v271
  %278 = vrot.lane.b32.xlu0 %v195, 32
  %v279 = vpop.permute.xlu0 %278
  %v281 = vmul.f32 %v275, %v279
  %283 = vrot.lane.b32.xlu0 %v276, 64
  %v284 = vpop.permute.xlu0 %283
  %v286 = vmul.f32 %v275, %v284
  %288 = vrot.lane.b32.xlu0 %v286, 32
  %v289 = vpop.permute.xlu0 %288
  %v291 = vadd.f32 %v281, %v289
  %v292 = vtanh.pop %v291
  %294 = vrot.lane.b32.xlu0 %v292, 64
  %v295 = vpop.permute.xlu0 %294
  %v297 = vmul.f32 %v275, %v295
  %299 = vrot.lane.b32.xlu0 %v297, 32
  %v300 = vpop.permute.xlu0 %299
  %302 = vst.msk [vmem:[%s6] sm:$0xff] %vm197, %v300
  %s303 = scalar_lea.vmem [#allocation2], 8
  %v304 = vld [vmem:[%s303] sm:$0xff]
  %v305 = vsel %vm197, %v300, 0
  %307 = vmatprep.subr.mxu0 0.0
  %308 = vmatpush1.msra.mxu0 0.0
  %309 = vmatprep.subr.mxu0 0.0
  %310 = vmatpush1.msra.mxu0 0.0
  %311 = vmatprep.subr.mxu0 0.0
  %312 = vmatpush1.msra.mxu0 0.0
  %313 = vmatprep.subr.mxu0 0.0
  %314 = vmatpush1.msra.mxu0 0.0
  %315 = vmatprep.subr.mxu0 0.0
  %316 = vmatpush1.msra.mxu0 0.0
  %317 = vmatprep.subr.mxu0 0.0
  %318 = vmatpush1.msra.mxu0 0.0
  %319 = vmatprep.subr.mxu0 0.0
  %320 = vmatpush1.msra.mxu0 0.0
  %321 = vmatprep.subr.mxu0 0.0
  %322 = vmatpush1.msra.mxu0 0.0
  %323 = vmatprep.subr.mxu0 0.0
  %324 = vmatpush1.msra.mxu0 0.0
  %325 = vmatprep.subr.mxu0 0.0
  %326 = vmatpush1.msra.mxu0 0.0
  %327 = vmatprep.subr.mxu0 0.0
  %328 = vmatpush1.msra.mxu0 0.0
  %329 = vmatprep.subr.mxu0 0.0
  %330 = vmatpush1.msra.mxu0 0.0
  %331 = vmatprep.subr.mxu0 0.0
  %332 = vmatpush1.msra.mxu0 %v193
  %333 = vmatprep.subr.mxu0 0.0
  %334 = vmatpush1.msra.mxu0 %v192
  %335 = vmatprep.subr.mxu0 0.0
  %336 = vmatpush1.msra.mxu0 %v191
  %337 = vmatprep.subr.mxu0 0.0
  %338 = vmatpush1.msra.mxu0 %v190
  %339 = vmatprep.subr.mxu0 0.0
  %340 = vmatpush2.msra.mxu0 0.0
  %341 = vmatprep.subr.mxu0 0.0
  %342 = vmatpush2.msra.mxu0 0.0
  %343 = vmatprep.subr.mxu0 0.0
  %344 = vmatpush2.msra.mxu0 0.0
  %345 = vmatprep.subr.mxu0 0.0
  %346 = vmatpush2.msra.mxu0 0.0
  %347 = vmatprep.subr.mxu0 0.0
  %348 = vmatpush2.msra.mxu0 0.0
  %349 = vmatprep.subr.mxu0 0.0
  %350 = vmatpush2.msra.mxu0 0.0
  %351 = vmatprep.subr.mxu0 0.0
  %352 = vmatpush2.msra.mxu0 0.0
  %353 = vmatprep.subr.mxu0 0.0
  %354 = vmatpush2.msra.mxu0 0.0
  %355 = vmatprep.subr.mxu0 0.0
  %356 = vmatpush2.msra.mxu0 0.0
  %357 = vmatprep.subr.mxu0 0.0
  %358 = vmatpush2.msra.mxu0 0.0
  %359 = vmatprep.subr.mxu0 0.0
  %360 = vmatpush2.msra.mxu0 0.0
  %361 = vmatprep.subr.mxu0 0.0
  %362 = vmatpush2.msra.mxu0 0.0
  %363 = vmatprep.subr.mxu0 0.0
  %364 = vmatpush2.msra.mxu0 0.0
  %365 = vmatprep.subr.mxu0 0.0
  %366 = vmatpush2.msra.mxu0 0.0
  %367 = vmatprep.subr.mxu0 0.0
  %368 = vmatpush2.msra.mxu0 0.0
  %369 = vmatprep.subr.mxu0 0.0
  %370 = vmatpush2.msra.mxu0 0.0
  %371 = vmatprep.mubr.f32.mxu0 0.0
  %372 = vmatmul.mubr.f32.gmra.mxu0 %v305
  %v373 = vpop.f32.mrf.mxu0
  %v374 = vadd.f32 0.0, %v373
  %v375 = vpop.f32.mrf.mxu0
  %376 = vdwg.mxu0
  %v377 = vadd.f32 %v304, %v374
  %v378 = vmul.f32 %v377, 0.5
  %v379 = vtanh.pop %v378
  %v380 = vmul.f32 %v379, 0.5
  %v381 = vadd.f32 %v380, 0.5
  %v382 = vtanh.pop %v377
  %v383 = vmul.f32 %v381, %v291
  %385 = vrot.lane.b32.xlu0 %v382, 64
  %v386 = vpop.permute.xlu0 %385
  %v388 = vmul.f32 %v381, %v386
  %390 = vrot.lane.b32.xlu0 %v388, 32
  %v391 = vpop.permute.xlu0 %390
  %v393 = vadd.f32 %v383, %v391
  %v394 = vtanh.pop %v393
  %396 = vrot.lane.b32.xlu0 %v394, 64
  %v397 = vpop.permute.xlu0 %396
  %v399 = vmul.f32 %v381, %v397
  %401 = vrot.lane.b32.xlu0 %v399, 32
  %v402 = vpop.permute.xlu0 %401
  %s404 = scalar_lea.vmem %s6, 8
  %405 = vst.msk [vmem:[%s404] sm:$0xff] %vm197, %v402
  %s406 = scalar_lea.vmem [#allocation2], 16
  %v407 = vld [vmem:[%s406] sm:$0xff]
  %v408 = vsel %vm197, %v402, 0
  %410 = vmatprep.subr.mxu0 0.0
  %411 = vmatpush1.msra.mxu0 0.0
  %412 = vmatprep.subr.mxu0 0.0
  %413 = vmatpush1.msra.mxu0 0.0
  %414 = vmatprep.subr.mxu0 0.0
  %415 = vmatpush1.msra.mxu0 0.0
  %416 = vmatprep.subr.mxu0 0.0
  %417 = vmatpush1.msra.mxu0 0.0
  %418 = vmatprep.subr.mxu0 0.0
  %419 = vmatpush1.msra.mxu0 0.0
  %420 = vmatprep.subr.mxu0 0.0
  %421 = vmatpush1.msra.mxu0 0.0
  %422 = vmatprep.subr.mxu0 0.0
  %423 = vmatpush1.msra.mxu0 0.0
  %424 = vmatprep.subr.mxu0 0.0
  %425 = vmatpush1.msra.mxu0 0.0
  %426 = vmatprep.subr.mxu0 0.0
  %427 = vmatpush1.msra.mxu0 0.0
  %428 = vmatprep.subr.mxu0 0.0
  %429 = vmatpush1.msra.mxu0 0.0
  %430 = vmatprep.subr.mxu0 0.0
  %431 = vmatpush1.msra.mxu0 0.0
  %432 = vmatprep.subr.mxu0 0.0
  %433 = vmatpush1.msra.mxu0 0.0
  %434 = vmatprep.subr.mxu0 0.0
  %435 = vmatpush1.msra.mxu0 %v193
  %436 = vmatprep.subr.mxu0 0.0
  %437 = vmatpush1.msra.mxu0 %v192
  %438 = vmatprep.subr.mxu0 0.0
  %439 = vmatpush1.msra.mxu0 %v191
  %440 = vmatprep.subr.mxu0 0.0
  %441 = vmatpush1.msra.mxu0 %v190
  %442 = vmatprep.subr.mxu0 0.0
  %443 = vmatpush2.msra.mxu0 0.0
  %444 = vmatprep.subr.mxu0 0.0
  %445 = vmatpush2.msra.mxu0 0.0
  %446 = vmatprep.subr.mxu0 0.0
  %447 = vmatpush2.msra.mxu0 0.0
  %448 = vmatprep.subr.mxu0 0.0
  %449 = vmatpush2.msra.mxu0 0.0
  %450 = vmatprep.subr.mxu0 0.0
  %451 = vmatpush2.msra.mxu0 0.0
  %452 = vmatprep.subr.mxu0 0.0
  %453 = vmatpush2.msra.mxu0 0.0
  %454 = vmatprep.subr.mxu0 0.0
  %455 = vmatpush2.msra.mxu0 0.0
  %456 = vmatprep.subr.mxu0 0.0
  %457 = vmatpush2.msra.mxu0 0.0
  %458 = vmatprep.subr.mxu0 0.0
  %459 = vmatpush2.msra.mxu0 0.0
  %460 = vmatprep.subr.mxu0 0.0
  %461 = vmatpush2.msra.mxu0 0.0
  %462 = vmatprep.subr.mxu0 0.0
  %463 = vmatpush2.msra.mxu0 0.0
  %464 = vmatprep.subr.mxu0 0.0
  %465 = vmatpush2.msra.mxu0 0.0
  %466 = vmatprep.subr.mxu0 0.0
  %467 = vmatpush2.msra.mxu0 0.0
  %468 = vmatprep.subr.mxu0 0.0
  %469 = vmatpush2.msra.mxu0 0.0
  %470 = vmatprep.subr.mxu0 0.0
  %471 = vmatpush2.msra.mxu0 0.0
  %472 = vmatprep.subr.mxu0 0.0
  %473 = vmatpush2.msra.mxu0 0.0
  %474 = vmatprep.mubr.f32.mxu0 0.0
  %475 = vmatmul.mubr.f32.gmra.mxu0 %v408
  %v476 = vpop.f32.mrf.mxu0
  %v477 = vadd.f32 0.0, %v476
  %v478 = vpop.f32.mrf.mxu0
  %479 = vdwg.mxu0
  %v480 = vadd.f32 %v407, %v477
  %v481 = vmul.f32 %v480, 0.5
  %v482 = vtanh.pop %v481
  %v483 = vmul.f32 %v482, 0.5
  %v484 = vadd.f32 %v483, 0.5
  %v485 = vtanh.pop %v480
  %v486 = vmul.f32 %v484, %v393
  %488 = vrot.lane.b32.xlu0 %v485, 64
  %v489 = vpop.permute.xlu0 %488
  %v491 = vmul.f32 %v484, %v489
  %493 = vrot.lane.b32.xlu0 %v491, 32
  %v494 = vpop.permute.xlu0 %493
  %v496 = vadd.f32 %v486, %v494
  %v497 = vtanh.pop %v496
  %499 = vrot.lane.b32.xlu0 %v497, 64
  %v500 = vpop.permute.xlu0 %499
  %v502 = vmul.f32 %v484, %v500
  %504 = vrot.lane.b32.xlu0 %v502, 32
  %v505 = vpop.permute.xlu0 %504
  %s507 = scalar_lea.vmem %s6, 16
  %508 = vst.msk [vmem:[%s507] sm:$0xff] %vm197, %v505
  %s509 = scalar_lea.vmem [#allocation2], 24
  %v510 = vld [vmem:[%s509] sm:$0xff]
  %v511 = vsel %vm197, %v505, 0
  %513 = vmatprep.subr.mxu0 0.0
  %514 = vmatpush1.msra.mxu0 0.0
  %515 = vmatprep.subr.mxu0 0.0
  %516 = vmatpush1.msra.mxu0 0.0
  %517 = vmatprep.subr.mxu0 0.0
  %518 = vmatpush1.msra.mxu0 0.0
  %519 = vmatprep.subr.mxu0 0.0
  %520 = vmatpush1.msra.mxu0 0.0
  %521 = vmatprep.subr.mxu0 0.0
  %522 = vmatpush1.msra.mxu0 0.0
  %523 = vmatprep.subr.mxu0 0.0
  %524 = vmatpush1.msra.mxu0 0.0
  %525 = vmatprep.subr.mxu0 0.0
  %526 = vmatpush1.msra.mxu0 0.0
  %527 = vmatprep.subr.mxu0 0.0
  %528 = vmatpush1.msra.mxu0 0.0
  %529 = vmatprep.subr.mxu0 0.0
  %530 = vmatpush1.msra.mxu0 0.0
  %531 = vmatprep.subr.mxu0 0.0
  %532 = vmatpush1.msra.mxu0 0.0
  %533 = vmatprep.subr.mxu0 0.0
  %534 = vmatpush1.msra.mxu0 0.0
  %535 = vmatprep.subr.mxu0 0.0
  %536 = vmatpush1.msra.mxu0 0.0
  %537 = vmatprep.subr.mxu0 0.0
  %538 = vmatpush1.msra.mxu0 %v193
  %539 = vmatprep.subr.mxu0 0.0
  %540 = vmatpush1.msra.mxu0 %v192
  %541 = vmatprep.subr.mxu0 0.0
  %542 = vmatpush1.msra.mxu0 %v191
  %543 = vmatprep.subr.mxu0 0.0
  %544 = vmatpush1.msra.mxu0 %v190
  %545 = vmatprep.subr.mxu0 0.0
  %546 = vmatpush2.msra.mxu0 0.0
  %547 = vmatprep.subr.mxu0 0.0
  %548 = vmatpush2.msra.mxu0 0.0
  %549 = vmatprep.subr.mxu0 0.0
  %550 = vmatpush2.msra.mxu0 0.0
  %551 = vmatprep.subr.mxu0 0.0
  %552 = vmatpush2.msra.mxu0 0.0
  %553 = vmatprep.subr.mxu0 0.0
  %554 = vmatpush2.msra.mxu0 0.0
  %555 = vmatprep.subr.mxu0 0.0
  %556 = vmatpush2.msra.mxu0 0.0
  %557 = vmatprep.subr.mxu0 0.0
  %558 = vmatpush2.msra.mxu0 0.0
  %559 = vmatprep.subr.mxu0 0.0
  %560 = vmatpush2.msra.mxu0 0.0
  %561 = vmatprep.subr.mxu0 0.0
  %562 = vmatpush2.msra.mxu0 0.0
  %563 = vmatprep.subr.mxu0 0.0
  %564 = vmatpush2.msra.mxu0 0.0
  %565 = vmatprep.subr.mxu0 0.0
  %566 = vmatpush2.msra.mxu0 0.0
  %567 = vmatprep.subr.mxu0 0.0
  %568 = vmatpush2.msra.mxu0 0.0
  %569 = vmatprep.subr.mxu0 0.0
  %570 = vmatpush2.msra.mxu0 0.0
  %571 = vmatprep.subr.mxu0 0.0
  %572 = vmatpush2.msra.mxu0 0.0
  %573 = vmatprep.subr.mxu0 0.0
  %574 = vmatpush2.msra.mxu0 0.0
  %575 = vmatprep.subr.mxu0 0.0
  %576 = vmatpush2.msra.mxu0 0.0
  %577 = vmatprep.mubr.f32.mxu0 0.0
  %578 = vmatmul.mubr.f32.gmra.mxu0 %v511
  %v579 = vpop.f32.mrf.mxu0
  %v580 = vadd.f32 0.0, %v579
  %v581 = vpop.f32.mrf.mxu0
  %582 = vdwg.mxu0
  %v583 = vadd.f32 %v510, %v580
  %v584 = vmul.f32 %v583, 0.5
  %v585 = vtanh.pop %v584
  %v586 = vmul.f32 %v585, 0.5
  %v587 = vadd.f32 %v586, 0.5
  %v588 = vtanh.pop %v583
  %v589 = vmul.f32 %v587, %v496
  %591 = vrot.lane.b32.xlu0 %v588, 64
  %v592 = vpop.permute.xlu0 %591
  %v594 = vmul.f32 %v587, %v592
  %596 = vrot.lane.b32.xlu0 %v594, 32
  %v597 = vpop.permute.xlu0 %596
  %v599 = vadd.f32 %v589, %v597
  %v600 = vtanh.pop %v599
  %602 = vrot.lane.b32.xlu0 %v600, 64
  %v603 = vpop.permute.xlu0 %602
  %v605 = vmul.f32 %v587, %v603
  %607 = vrot.lane.b32.xlu0 %v605, 32
  %v608 = vpop.permute.xlu0 %607
  %s610 = scalar_lea.vmem %s6, 24
  %611 = vst.msk [vmem:[%s610] sm:$0xff] %vm197, %v608
  %s612 = scalar_lea.vmem [#allocation2], 32
  %v613 = vld [vmem:[%s612] sm:$0xff]
  %v614 = vsel %vm197, %v608, 0
  %616 = vmatprep.subr.mxu0 0.0
  %617 = vmatpush1.msra.mxu0 0.0
  %618 = vmatprep.subr.mxu0 0.0
  %619 = vmatpush1.msra.mxu0 0.0
  %620 = vmatprep.subr.mxu0 0.0
  %621 = vmatpush1.msra.mxu0 0.0
  %622 = vmatprep.subr.mxu0 0.0
  %623 = vmatpush1.msra.mxu0 0.0
  %624 = vmatprep.subr.mxu0 0.0
  %625 = vmatpush1.msra.mxu0 0.0
  %626 = vmatprep.subr.mxu0 0.0
  %627 = vmatpush1.msra.mxu0 0.0
  %628 = vmatprep.subr.mxu0 0.0
  %629 = vmatpush1.msra.mxu0 0.0
  %630 = vmatprep.subr.mxu0 0.0
  %631 = vmatpush1.msra.mxu0 0.0
  %632 = vmatprep.subr.mxu0 0.0
  %633 = vmatpush1.msra.mxu0 0.0
  %634 = vmatprep.subr.mxu0 0.0
  %635 = vmatpush1.msra.mxu0 0.0
  %636 = vmatprep.subr.mxu0 0.0
  %637 = vmatpush1.msra.mxu0 0.0
  %638 = vmatprep.subr.mxu0 0.0
  %639 = vmatpush1.msra.mxu0 0.0
  %640 = vmatprep.subr.mxu0 0.0
  %641 = vmatpush1.msra.mxu0 %v193
  %642 = vmatprep.subr.mxu0 0.0
  %643 = vmatpush1.msra.mxu0 %v192
  %644 = vmatprep.subr.mxu0 0.0
  %645 = vmatpush1.msra.mxu0 %v191
  %646 = vmatprep.subr.mxu0 0.0
  %647 = vmatpush1.msra.mxu0 %v190
  %648 = vmatprep.subr.mxu0 0.0
  %649 = vmatpush2.msra.mxu0 0.0
  %650 = vmatprep.subr.mxu0 0.0
  %651 = vmatpush2.msra.mxu0 0.0
  %652 = vmatprep.subr.mxu0 0.0
  %653 = vmatpush2.msra.mxu0 0.0
  %654 = vmatprep.subr.mxu0 0.0
  %655 = vmatpush2.msra.mxu0 0.0
  %656 = vmatprep.subr.mxu0 0.0
  %657 = vmatpush2.msra.mxu0 0.0
  %658 = vmatprep.subr.mxu0 0.0
  %659 = vmatpush2.msra.mxu0 0.0
  %660 = vmatprep.subr.mxu0 0.0
  %661 = vmatpush2.msra.mxu0 0.0
  %662 = vmatprep.subr.mxu0 0.0
  %663 = vmatpush2.msra.mxu0 0.0
  %664 = vmatprep.subr.mxu0 0.0
  %665 = vmatpush2.msra.mxu0 0.0
  %666 = vmatprep.subr.mxu0 0.0
  %667 = vmatpush2.msra.mxu0 0.0
  %668 = vmatprep.subr.mxu0 0.0
  %669 = vmatpush2.msra.mxu0 0.0
  %670 = vmatprep.subr.mxu0 0.0
  %671 = vmatpush2.msra.mxu0 0.0
  %672 = vmatprep.subr.mxu0 0.0
  %673 = vmatpush2.msra.mxu0 0.0
  %674 = vmatprep.subr.mxu0 0.0
  %675 = vmatpush2.msra.mxu0 0.0
  %676 = vmatprep.subr.mxu0 0.0
  %677 = vmatpush2.msra.mxu0 0.0
  %678 = vmatprep.subr.mxu0 0.0
  %679 = vmatpush2.msra.mxu0 0.0
  %680 = vmatprep.mubr.f32.mxu0 0.0
  %681 = vmatmul.mubr.f32.gmra.mxu0 %v614
  %v682 = vpop.f32.mrf.mxu0
  %v683 = vadd.f32 0.0, %v682
  %v684 = vpop.f32.mrf.mxu0
  %685 = vdwg.mxu0
  %v686 = vadd.f32 %v613, %v683
  %v687 = vmul.f32 %v686, 0.5
  %v688 = vtanh.pop %v687
  %v689 = vmul.f32 %v688, 0.5
  %v690 = vadd.f32 %v689, 0.5
  %v691 = vtanh.pop %v686
  %v692 = vmul.f32 %v690, %v599
  %694 = vrot.lane.b32.xlu0 %v691, 64
  %v695 = vpop.permute.xlu0 %694
  %v697 = vmul.f32 %v690, %v695
  %699 = vrot.lane.b32.xlu0 %v697, 32
  %v700 = vpop.permute.xlu0 %699
  %v702 = vadd.f32 %v692, %v700
  %v703 = vtanh.pop %v702
  %705 = vrot.lane.b32.xlu0 %v703, 64
  %v706 = vpop.permute.xlu0 %705
  %v708 = vmul.f32 %v690, %v706
  %710 = vrot.lane.b32.xlu0 %v708, 32
  %v711 = vpop.permute.xlu0 %710
  %s713 = scalar_lea.vmem %s6, 32
  %714 = vst.msk [vmem:[%s713] sm:$0xff] %vm197, %v711
  %s715 = scalar_lea.vmem [#allocation2], 40
  %v716 = vld [vmem:[%s715] sm:$0xff]
  %v717 = vsel %vm197, %v711, 0
  %719 = vmatprep.subr.mxu0 0.0
  %720 = vmatpush1.msra.mxu0 0.0
  %721 = vmatprep.subr.mxu0 0.0
  %722 = vmatpush1.msra.mxu0 0.0
  %723 = vmatprep.subr.mxu0 0.0
  %724 = vmatpush1.msra.mxu0 0.0
  %725 = vmatprep.subr.mxu0 0.0
  %726 = vmatpush1.msra.mxu0 0.0
  %727 = vmatprep.subr.mxu0 0.0
  %728 = vmatpush1.msra.mxu0 0.0
  %729 = vmatprep.subr.mxu0 0.0
  %730 = vmatpush1.msra.mxu0 0.0
  %731 = vmatprep.subr.mxu0 0.0
  %732 = vmatpush1.msra.mxu0 0.0
  %733 = vmatprep.subr.mxu0 0.0
  %734 = vmatpush1.msra.mxu0 0.0
  %735 = vmatprep.subr.mxu0 0.0
  %736 = vmatpush1.msra.mxu0 0.0
  %737 = vmatprep.subr.mxu0 0.0
  %738 = vmatpush1.msra.mxu0 0.0
  %739 = vmatprep.subr.mxu0 0.0
  %740 = vmatpush1.msra.mxu0 0.0
  %741 = vmatprep.subr.mxu0 0.0
  %742 = vmatpush1.msra.mxu0 0.0
  %743 = vmatprep.subr.mxu0 0.0
  %744 = vmatpush1.msra.mxu0 %v193
  %745 = vmatprep.subr.mxu0 0.0
  %746 = vmatpush1.msra.mxu0 %v192
  %747 = vmatprep.subr.mxu0 0.0
  %748 = vmatpush1.msra.mxu0 %v191
  %749 = vmatprep.subr.mxu0 0.0
  %750 = vmatpush1.msra.mxu0 %v190
  %751 = vmatprep.subr.mxu0 0.0
  %752 = vmatpush2.msra.mxu0 0.0
  %753 = vmatprep.subr.mxu0 0.0
  %754 = vmatpush2.msra.mxu0 0.0
  %755 = vmatprep.subr.mxu0 0.0
  %756 = vmatpush2.msra.mxu0 0.0
  %757 = vmatprep.subr.mxu0 0.0
  %758 = vmatpush2.msra.mxu0 0.0
  %759 = vmatprep.subr.mxu0 0.0
  %760 = vmatpush2.msra.mxu0 0.0
  %761 = vmatprep.subr.mxu0 0.0
  %762 = vmatpush2.msra.mxu0 0.0
  %763 = vmatprep.subr.mxu0 0.0
  %764 = vmatpush2.msra.mxu0 0.0
  %765 = vmatprep.subr.mxu0 0.0
  %766 = vmatpush2.msra.mxu0 0.0
  %767 = vmatprep.subr.mxu0 0.0
  %768 = vmatpush2.msra.mxu0 0.0
  %769 = vmatprep.subr.mxu0 0.0
  %770 = vmatpush2.msra.mxu0 0.0
  %771 = vmatprep.subr.mxu0 0.0
  %772 = vmatpush2.msra.mxu0 0.0
  %773 = vmatprep.subr.mxu0 0.0
  %774 = vmatpush2.msra.mxu0 0.0
  %775 = vmatprep.subr.mxu0 0.0
  %776 = vmatpush2.msra.mxu0 0.0
  %777 = vmatprep.subr.mxu0 0.0
  %778 = vmatpush2.msra.mxu0 0.0
  %779 = vmatprep.subr.mxu0 0.0
  %780 = vmatpush2.msra.mxu0 0.0
  %781 = vmatprep.subr.mxu0 0.0
  %782 = vmatpush2.msra.mxu0 0.0
  %783 = vmatprep.mubr.f32.mxu0 0.0
  %784 = vmatmul.mubr.f32.gmra.mxu0 %v717
  %v785 = vpop.f32.mrf.mxu0
  %v786 = vadd.f32 0.0, %v785
  %v787 = vpop.f32.mrf.mxu0
  %788 = vdwg.mxu0
  %v789 = vadd.f32 %v716, %v786
  %v790 = vmul.f32 %v789, 0.5
  %v791 = vtanh.pop %v790
  %v792 = vmul.f32 %v791, 0.5
  %v793 = vadd.f32 %v792, 0.5
  %v794 = vtanh.pop %v789
  %v795 = vmul.f32 %v793, %v702
  %797 = vrot.lane.b32.xlu0 %v794, 64
  %v798 = vpop.permute.xlu0 %797
  %v800 = vmul.f32 %v793, %v798
  %802 = vrot.lane.b32.xlu0 %v800, 32
  %v803 = vpop.permute.xlu0 %802
  %v805 = vadd.f32 %v795, %v803
  %v806 = vtanh.pop %v805
  %808 = vrot.lane.b32.xlu0 %v806, 64
  %v809 = vpop.permute.xlu0 %808
  %v811 = vmul.f32 %v793, %v809
  %813 = vrot.lane.b32.xlu0 %v811, 32
  %v814 = vpop.permute.xlu0 %813
  %s816 = scalar_lea.vmem %s6, 40
  %817 = vst.msk [vmem:[%s816] sm:$0xff] %vm197, %v814
  %s818 = scalar_lea.vmem [#allocation2], 48
  %v819 = vld [vmem:[%s818] sm:$0xff]
  %v820 = vsel %vm197, %v814, 0
  %822 = vmatprep.subr.mxu0 0.0
  %823 = vmatpush1.msra.mxu0 0.0
  %824 = vmatprep.subr.mxu0 0.0
  %825 = vmatpush1.msra.mxu0 0.0
  %826 = vmatprep.subr.mxu0 0.0
  %827 = vmatpush1.msra.mxu0 0.0
  %828 = vmatprep.subr.mxu0 0.0
  %829 = vmatpush1.msra.mxu0 0.0
  %830 = vmatprep.subr.mxu0 0.0
  %831 = vmatpush1.msra.mxu0 0.0
  %832 = vmatprep.subr.mxu0 0.0
  %833 = vmatpush1.msra.mxu0 0.0
  %834 = vmatprep.subr.mxu0 0.0
  %835 = vmatpush1.msra.mxu0 0.0
  %836 = vmatprep.subr.mxu0 0.0
  %837 = vmatpush1.msra.mxu0 0.0
  %838 = vmatprep.subr.mxu0 0.0
  %839 = vmatpush1.msra.mxu0 0.0
  %840 = vmatprep.subr.mxu0 0.0
  %841 = vmatpush1.msra.mxu0 0.0
  %842 = vmatprep.subr.mxu0 0.0
  %843 = vmatpush1.msra.mxu0 0.0
  %844 = vmatprep.subr.mxu0 0.0
  %845 = vmatpush1.msra.mxu0 0.0
  %846 = vmatprep.subr.mxu0 0.0
  %847 = vmatpush1.msra.mxu0 %v193
  %848 = vmatprep.subr.mxu0 0.0
  %849 = vmatpush1.msra.mxu0 %v192
  %850 = vmatprep.subr.mxu0 0.0
  %851 = vmatpush1.msra.mxu0 %v191
  %852 = vmatprep.subr.mxu0 0.0
  %853 = vmatpush1.msra.mxu0 %v190
  %854 = vmatprep.subr.mxu0 0.0
  %855 = vmatpush2.msra.mxu0 0.0
  %856 = vmatprep.subr.mxu0 0.0
  %857 = vmatpush2.msra.mxu0 0.0
  %858 = vmatprep.subr.mxu0 0.0
  %859 = vmatpush2.msra.mxu0 0.0
  %860 = vmatprep.subr.mxu0 0.0
  %861 = vmatpush2.msra.mxu0 0.0
  %862 = vmatprep.subr.mxu0 0.0
  %863 = vmatpush2.msra.mxu0 0.0
  %864 = vmatprep.subr.mxu0 0.0
  %865 = vmatpush2.msra.mxu0 0.0
  %866 = vmatprep.subr.mxu0 0.0
  %867 = vmatpush2.msra.mxu0 0.0
  %868 = vmatprep.subr.mxu0 0.0
  %869 = vmatpush2.msra.mxu0 0.0
  %870 = vmatprep.subr.mxu0 0.0
  %871 = vmatpush2.msra.mxu0 0.0
  %872 = vmatprep.subr.mxu0 0.0
  %873 = vmatpush2.msra.mxu0 0.0
  %874 = vmatprep.subr.mxu0 0.0
  %875 = vmatpush2.msra.mxu0 0.0
  %876 = vmatprep.subr.mxu0 0.0
  %877 = vmatpush2.msra.mxu0 0.0
  %878 = vmatprep.subr.mxu0 0.0
  %879 = vmatpush2.msra.mxu0 0.0
  %880 = vmatprep.subr.mxu0 0.0
  %881 = vmatpush2.msra.mxu0 0.0
  %882 = vmatprep.subr.mxu0 0.0
  %883 = vmatpush2.msra.mxu0 0.0
  %884 = vmatprep.subr.mxu0 0.0
  %885 = vmatpush2.msra.mxu0 0.0
  %886 = vmatprep.mubr.f32.mxu0 0.0
  %887 = vmatmul.mubr.f32.gmra.mxu0 %v820
  %v888 = vpop.f32.mrf.mxu0
  %v889 = vadd.f32 0.0, %v888
  %v890 = vpop.f32.mrf.mxu0
  %891 = vdwg.mxu0
  %v892 = vadd.f32 %v819, %v889
  %v893 = vmul.f32 %v892, 0.5
  %v894 = vtanh.pop %v893
  %v895 = vmul.f32 %v894, 0.5
  %v896 = vadd.f32 %v895, 0.5
  %v897 = vtanh.pop %v892
  %v898 = vmul.f32 %v896, %v805
  %900 = vrot.lane.b32.xlu0 %v897, 64
  %v901 = vpop.permute.xlu0 %900
  %v903 = vmul.f32 %v896, %v901
  %905 = vrot.lane.b32.xlu0 %v903, 32
  %v906 = vpop.permute.xlu0 %905
  %v908 = vadd.f32 %v898, %v906
  %v909 = vtanh.pop %v908
  %911 = vrot.lane.b32.xlu0 %v909, 64
  %v912 = vpop.permute.xlu0 %911
  %v914 = vmul.f32 %v896, %v912
  %916 = vrot.lane.b32.xlu0 %v914, 32
  %v917 = vpop.permute.xlu0 %916
  %s919 = scalar_lea.vmem %s6, 48
  %920 = vst.msk [vmem:[%s919] sm:$0xff] %vm197, %v917
  %s921 = scalar_lea.vmem [#allocation2], 56
  %v922 = vld [vmem:[%s921] sm:$0xff]
  %v923 = vsel %vm197, %v917, 0
  %925 = vmatprep.subr.mxu0 0.0
  %926 = vmatpush1.msra.mxu0 0.0
  %927 = vmatprep.subr.mxu0 0.0
  %928 = vmatpush1.msra.mxu0 0.0
  %929 = vmatprep.subr.mxu0 0.0
  %930 = vmatpush1.msra.mxu0 0.0
  %931 = vmatprep.subr.mxu0 0.0
  %932 = vmatpush1.msra.mxu0 0.0
  %933 = vmatprep.subr.mxu0 0.0
  %934 = vmatpush1.msra.mxu0 0.0
  %935 = vmatprep.subr.mxu0 0.0
  %936 = vmatpush1.msra.mxu0 0.0
  %937 = vmatprep.subr.mxu0 0.0
  %938 = vmatpush1.msra.mxu0 0.0
  %939 = vmatprep.subr.mxu0 0.0
  %940 = vmatpush1.msra.mxu0 0.0
  %941 = vmatprep.subr.mxu0 0.0
  %942 = vmatpush1.msra.mxu0 0.0
  %943 = vmatprep.subr.mxu0 0.0
  %944 = vmatpush1.msra.mxu0 0.0
  %945 = vmatprep.subr.mxu0 0.0
  %946 = vmatpush1.msra.mxu0 0.0
  %947 = vmatprep.subr.mxu0 0.0
  %948 = vmatpush1.msra.mxu0 0.0
  %949 = vmatprep.subr.mxu0 0.0
  %950 = vmatpush1.msra.mxu0 %v193
  %951 = vmatprep.subr.mxu0 0.0
  %952 = vmatpush1.msra.mxu0 %v192
  %953 = vmatprep.subr.mxu0 0.0
  %954 = vmatpush1.msra.mxu0 %v191
  %955 = vmatprep.subr.mxu0 0.0
  %956 = vmatpush1.msra.mxu0 %v190
  %957 = vmatprep.subr.mxu0 0.0
  %958 = vmatpush2.msra.mxu0 0.0
  %959 = vmatprep.subr.mxu0 0.0
  %960 = vmatpush2.msra.mxu0 0.0
  %961 = vmatprep.subr.mxu0 0.0
  %962 = vmatpush2.msra.mxu0 0.0
  %963 = vmatprep.subr.mxu0 0.0
  %964 = vmatpush2.msra.mxu0 0.0
  %965 = vmatprep.subr.mxu0 0.0
  %966 = vmatpush2.msra.mxu0 0.0
  %967 = vmatprep.subr.mxu0 0.0
  %968 = vmatpush2.msra.mxu0 0.0
  %969 = vmatprep.subr.mxu0 0.0
  %970 = vmatpush2.msra.mxu0 0.0
  %971 = vmatprep.subr.mxu0 0.0
  %972 = vmatpush2.msra.mxu0 0.0
  %973 = vmatprep.subr.mxu0 0.0
  %974 = vmatpush2.msra.mxu0 0.0
  %975 = vmatprep.subr.mxu0 0.0
  %976 = vmatpush2.msra.mxu0 0.0
  %977 = vmatprep.subr.mxu0 0.0
  %978 = vmatpush2.msra.mxu0 0.0
  %979 = vmatprep.subr.mxu0 0.0
  %980 = vmatpush2.msra.mxu0 0.0
  %981 = vmatprep.subr.mxu0 0.0
  %982 = vmatpush2.msra.mxu0 0.0
  %983 = vmatprep.subr.mxu0 0.0
  %984 = vmatpush2.msra.mxu0 0.0
  %985 = vmatprep.subr.mxu0 0.0
  %986 = vmatpush2.msra.mxu0 0.0
  %987 = vmatprep.subr.mxu0 0.0
  %988 = vmatpush2.msra.mxu0 0.0
  %989 = vmatprep.mubr.f32.mxu0 0.0
  %990 = vmatmul.mubr.f32.gmra.mxu0 %v923
  %v991 = vpop.f32.mrf.mxu0
  %v992 = vadd.f32 0.0, %v991
  %v993 = vpop.f32.mrf.mxu0
  %994 = vdwg.mxu0
  %v995 = vadd.f32 %v922, %v992
  %v996 = vmul.f32 %v995, 0.5
  %v997 = vtanh.pop %v996
  %v998 = vmul.f32 %v997, 0.5
  %v999 = vadd.f32 %v998, 0.5
  %v1000 = vtanh.pop %v995
  %v1001 = vmul.f32 %v999, %v908
  %1003 = vrot.lane.b32.xlu0 %v1000, 64
  %v1004 = vpop.permute.xlu0 %1003
  %v1006 = vmul.f32 %v999, %v1004
  %1008 = vrot.lane.b32.xlu0 %v1006, 32
  %v1009 = vpop.permute.xlu0 %1008
  %v1011 = vadd.f32 %v1001, %v1009
  %v1012 = vtanh.pop %v1011
  %1014 = vrot.lane.b32.xlu0 %v1012, 64
  %v1015 = vpop.permute.xlu0 %1014
  %v1017 = vmul.f32 %v999, %v1015
  %1019 = vrot.lane.b32.xlu0 %v1017, 32
  %v1020 = vpop.permute.xlu0 %1019
  %s1022 = scalar_lea.vmem %s6, 56
  %1023 = vst.msk [vmem:[%s1022] sm:$0xff] %vm197, %v1020
  %1024 = vst.msk [vmem:[#allocation3] sm:$0xff] %vm197, %v1020
  %1026 = vrot.lane.b32.xlu0 %v1011, 96
  %v1027 = vpop.permute.xlu0 %1026
  %1029 = vst.msk [vmem:[#allocation4] sm:$0xff] %vm197, %v1027
  // Predicated region
  $region30: #{decoder_lstm_forward.3} parent=0 // pred_check
    %p1030 = pneg %p26
  $region31: #{decoder_lstm_forward.3} parent=0 // pred_check_branch
    %1032 = sbr.rel (%p1030) target = $region33
  $region32: #{decoder_lstm_forward.3} parent=0 // pred_region
    %1033 = vst.msk [vmem:[%s7] sm:$0xff] %vm197, %v1020
    %1034 = vst.msk [vmem:[%s8] sm:$0xff] %vm197, %v1027
  $region33: #{decoder_lstm_forward.3} parent=0 // pred_fallthru
    _
  // Predicated region
  $region34: #{decoder_lstm_forward.3} parent=0 // pred_check
    _
  $region35: #{decoder_lstm_forward.3} parent=0 // pred_check_branch
    %1036 = sbr.rel (0) target = $region37
  $region36: #{decoder_lstm_forward.3} parent=0 // pred_region
    _
  $region37: #{decoder_lstm_forward.3} parent=0 // pred_fallthru
    _
  // Predicated region
  $region38: #{decoder_lstm_forward.3} parent=0 // pred_check
    _
  $region39: #{decoder_lstm_forward.3} parent=0 // pred_check_branch
    %1038 = sbr.rel (0) target = $region41
  $region40: #{decoder_lstm_forward.3} parent=0 // pred_region
    _
  $region41: #{decoder_lstm_forward.3} parent=0 // pred_fallthru
    _
  // Predicated region
  $region42: #{decoder_lstm_forward.3} parent=0 // pred_check
    _
  $region43: #{decoder_lstm_forward.3} parent=0 // pred_check_branch
    %1040 = sbr.rel (0) target = $region45
  $region44: #{decoder_lstm_forward.3} parent=0 // pred_region
    _
  $region45: #{decoder_lstm_forward.3} parent=0 // pred_fallthru
    _
  // Predicated region
  $region46: #{decoder_lstm_forward.3} parent=0 // pred_check
    _
  $region47: #{decoder_lstm_forward.3} parent=0 // pred_check_branch
    %1042 = sbr.rel (0) target = $region49
  $region48: #{decoder_lstm_forward.3} parent=0 // pred_region
    _
  $region49: #{decoder_lstm_forward.3} parent=0 // pred_fallthru
    _
  // Predicated region
  $region50: #{decoder_lstm_forward.3} parent=0 // pred_check
    _
  $region51: #{decoder_lstm_forward.3} parent=0 // pred_check_branch
    %1044 = sbr.rel (0) target = $region53
  $region52: #{decoder_lstm_forward.3} parent=0 // pred_region
    _
  $region53: #{decoder_lstm_forward.3} parent=0 // pred_fallthru
    _
  // Predicated region
  $region54: #{decoder_lstm_forward.3} parent=0 // pred_check
    _
  $region55: #{decoder_lstm_forward.3} parent=0 // pred_check_branch
    %1046 = sbr.rel (0) target = $region57
  $region56: #{decoder_lstm_forward.3} parent=0 // pred_region
    _
  $region57: #{decoder_lstm_forward.3} parent=0 // pred_fallthru
    _

// kernel: decoder_lstm_forward.4
$region0: #{decoder_lstm_forward.4}
  #allocation0 [shape = 'u32[]', space=smem, size = 0x4, offset = 0x4, fixed_abs, tag = 'smem constant byte address 0x4 - core index']
  #allocation1 [shape = 'u32[144,128]{1,0:T(1,128)}', space=vmem, size = 0x12000, scoped, tag = 'internal scratch']
  #allocation2 [shape = 'f32[8,8,128]{2,1,0:T(8,128)}', space=vmem, size = 0x8000, scoped, tag = 'scratch operand']
  #allocation3 [shape = 'f32[8,32]{1,0:T(8,128)}', space=vmem, size = 0x1000, scoped, tag = 'scratch operand']
  #allocation4 [shape = 'f32[8,32]{1,0:T(8,128)}', space=vmem, size = 0x1000, scoped, tag = 'scratch operand']
  %s0 = inlined_call_operand.vmem [shape: f32[8,8,32], index: 0, kind: input, shape index: {}]
  %s1 = inlined_call_operand.vmem [shape: f32[32,128], index: 1, kind: input, shape index: {}]
  %s2 = inlined_call_operand.vmem [shape: f32[32,128], index: 2, kind: input, shape index: {}]
  %s3 = inlined_call_operand.vmem [shape: f32[1,128], index: 3, kind: input, shape index: {}]
  %s4 = inlined_call_operand.vmem [shape: f32[8,32], index: 4, kind: input, shape index: {}]
  %s5 = inlined_call_operand.vmem [shape: f32[8,32], index: 5, kind: input, shape index: {}]
  %s6 = inlined_call_operand.vmem [shape: f32[8,8,32], index: 6, kind: output, shape index: {0}]
  %s7 = inlined_call_operand.vmem [shape: f32[8,32], index: 7, kind: output, shape index: {1}]
  %s8 = inlined_call_operand.vmem [shape: f32[8,32], index: 8, kind: output, shape index: {2}]
  %9 = xla_tuple %s6, %s7, %s8
  %s10 = sld [smem:[#allocation0]]
  $region58: #{decoder_lstm_forward.4} parent=0
    _
  %s12 = ssub.s32 1, %s10
  %s13 = scalar_select 0, %s12, %s10
  // Predicated region
  $region2: #{decoder_lstm_forward.4} parent=0 // pred_check
    _
  $region3: #{decoder_lstm_forward.4} parent=0 // pred_check_branch
    %15 = sbr.rel (0) target = $region5
  $region4: #{decoder_lstm_forward.4} parent=0 // pred_region
    _
  $region5: #{decoder_lstm_forward.4} parent=0 // pred_fallthru
    _
  // Predicated region
  $region6: #{decoder_lstm_forward.4} parent=0 // pred_check
    _
  $region7: #{decoder_lstm_forward.4} parent=0 // pred_check_branch
    %17 = sbr.rel (0) target = $region9
  $region8: #{decoder_lstm_forward.4} parent=0 // pred_region
    _
  $region9: #{decoder_lstm_forward.4} parent=0 // pred_fallthru
    _
  // Predicated region
  $region10: #{decoder_lstm_forward.4} parent=0 // pred_check
    _
  $region11: #{decoder_lstm_forward.4} parent=0 // pred_check_branch
    %19 = sbr.rel (0) target = $region13
  $region12: #{decoder_lstm_forward.4} parent=0 // pred_region
    _
  $region13: #{decoder_lstm_forward.4} parent=0 // pred_fallthru
    _
  // Predicated region
  $region14: #{decoder_lstm_forward.4} parent=0 // pred_check
    _
  $region15: #{decoder_lstm_forward.4} parent=0 // pred_check_branch
    %21 = sbr.rel (0) target = $region17
  $region16: #{decoder_lstm_forward.4} parent=0 // pred_region
    _
  $region17: #{decoder_lstm_forward.4} parent=0 // pred_fallthru
    _
  // Predicated region
  $region18: #{decoder_lstm_forward.4} parent=0 // pred_check
    _
  $region19: #{decoder_lstm_forward.4} parent=0 // pred_check_branch
    %23 = sbr.rel (0) target = $region21
  $region20: #{decoder_lstm_forward.4} parent=0 // pred_region
    _
  $region21: #{decoder_lstm_forward.4} parent=0 // pred_fallthru
    _
  // Predicated region
  $region22: #{decoder_lstm_forward.4} parent=0 // pred_check
    _
  $region23: #{decoder_lstm_forward.4} parent=0 // pred_check_branch
    %25 = sbr.rel (0) target = $region25
  $region24: #{decoder_lstm_forward.4} parent=0 // pred_region
    _
  $region25: #{decoder_lstm_forward.4} parent=0 // pred_fallthru
    _
  %p26 = scmp.eq.s32.totalorder 0, 0
  // Predicated region
  $region26: #{decoder_lstm_forward.4} parent=0 // pred_check
    %p27 = pneg %p26
  $region27: #{decoder_lstm_forward.4} parent=0 // pred_check_branch
    %29 = sbr.rel (%p27) target = $region29
  $region28: #{decoder_lstm_forward.4} parent=0 // pred_region
    %v30 = vld [vmem:[%s4] sm:$0xff]
    %vm31 = vcmask 261120
    %32 = vst.msk [vmem:[#allocation3] sm:$0xff] %vm31, %v30
    %v33 = vld [vmem:[%s5] sm:$0xff]
    %34 = vst.msk [vmem:[#allocation4] sm:$0xff] %vm31, %v33
  $region29: #{decoder_lstm_forward.4} parent=0 // pred_fallthru
    _
  %v35 = vld [vmem:[%s0] sm:$0xff]
  %v36 = vld [vmem:[%s0 + $0x8] sm:$0xff]
  %v37 = vld [vmem:[%s0 + $0x10] sm:$0xff]
  %v38 = vld [vmem:[%s0 + $0x18] sm:$0xff]
  %v39 = vld [vmem:[%s0 + $0x20] sm:$0xff]
  %v40 = vld [vmem:[%s0 + $0x28] sm:$0xff]
  %v41 = vld [vmem:[%s0 + $0x30] sm:$0xff]
  %v42 = vld [vmem:[%s0 + $0x38] sm:$0xff]
  %v43 = vld [vmem:[%s1] sm:$0xff]
  %v44 = vld [vmem:[%s1 + $0x8] sm:$0xff]
  %v45 = vld [vmem:[%s1 + $0x10] sm:$0xff]
  %v46 = vld [vmem:[%s1 + $0x18] sm:$0xff]
  %v47 = vld [vmem:[%s3] sm:$0x1]
  %v49 = vlaneseq
  %v50 = vshrl.u32 %v49, 7
  %v51 = vsub.s32 0, %v50
  %v52 = vrot.slane %v47, %v51
  %vm54 = vcmask 261120
  %v56 = vsel %vm54, %v35, 0
  %v59 = vsel %vm54, %v36, 0
  %v62 = vsel %vm54, %v37, 0
  %v65 = vsel %vm54, %v38, 0
  %v68 = vsel %vm54, %v39, 0
  %v71 = vsel %vm54, %v40, 0
  %v74 = vsel %vm54, %v41, 0
  %v77 = vsel %vm54, %v42, 0
  %79 = vmatprep.subr.mxu0 0.0
  %80 = vmatpush1.msra.mxu0 0.0
  %81 = vmatprep.subr.mxu0 0.0
  %82 = vmatpush1.msra.mxu0 0.0
  %83 = vmatprep.subr.mxu0 0.0
  %84 = vmatpush1.msra.mxu0 0.0
  %85 = vmatprep.subr.mxu0 0.0
  %86 = vmatpush1.msra.mxu0 0.0
  %87 = vmatprep.subr.mxu0 0.0
  %88 = vmatpush1.msra.mxu0 0.0
  %89 = vmatprep.subr.mxu0 0.0
  %90 = vmatpush1.msra.mxu0 0.0
  %91 = vmatprep.subr.mxu0 0.0
  %92 = vmatpush1.msra.mxu0 0.0
  %93 = vmatprep.subr.mxu0 0.0
  %94 = vmatpush1.msra.mxu0 0.0
  %95 = vmatprep.subr.mxu0 0.0
  %96 = vmatpush1.msra.mxu0 0.0
  %97 = vmatprep.subr.mxu0 0.0
  %98 = vmatpush1.msra.mxu0 0.0
  %99 = vmatprep.subr.mxu0 0.0
  %100 = vmatpush1.msra.mxu0 0.0
  %101 = vmatprep.subr.mxu0 0.0
  %102 = vmatpush1.msra.mxu0 0.0
  %103 = vmatprep.subr.mxu0 0.0
  %104 = vmatpush1.msra.mxu0 %v46
  %105 = vmatprep.subr.mxu0 0.0
  %106 = vmatpush1.msra.mxu0 %v45
  %107 = vmatprep.subr.mxu0 0.0
  %108 = vmatpush1.msra.mxu0 %v44
  %109 = vmatprep.subr.mxu0 0.0
  %110 = vmatpush1.msra.mxu0 %v43
  %111 = vmatprep.subr.mxu0 0.0
  %112 = vmatpush2.msra.mxu0 0.0
  %113 = vmatprep.subr.mxu0 0.0
  %114 = vmatpush2.msra.mxu0 0.0
  %115 = vmatprep.subr.mxu0 0.0
  %116 = vmatpush2.msra.mxu0 0.0
  %117 = vmatprep.subr.mxu0 0.0
  %118 = vmatpush2.msra.mxu0 0.0
  %119 = vmatprep.subr.mxu0 0.0
  %120 = vmatpush2.msra.mxu0 0.0
  %121 = vmatprep.subr.mxu0 0.0
  %122 = vmatpush2.msra.mxu0 0.0
  %123 = vmatprep.subr.mxu0 0.0
  %124 = vmatpush2.msra.mxu0 0.0
  %125 = vmatprep.subr.mxu0 0.0
  %126 = vmatpush2.msra.mxu0 0.0
  %127 = vmatprep.subr.mxu0 0.0
  %128 = vmatpush2.msra.mxu0 0.0
  %129 = vmatprep.subr.mxu0 0.0
  %130 = vmatpush2.msra.mxu0 0.0
  %131 = vmatprep.subr.mxu0 0.0
  %132 = vmatpush2.msra.mxu0 0.0
  %133 = vmatprep.subr.mxu0 0.0
  %134 = vmatpush2.msra.mxu0 0.0
  %135 = vmatprep.subr.mxu0 0.0
  %136 = vmatpush2.msra.mxu0 0.0
  %137 = vmatprep.subr.mxu0 0.0
  %138 = vmatpush2.msra.mxu0 0.0
  %139 = vmatprep.subr.mxu0 0.0
  %140 = vmatpush2.msra.mxu0 0.0
  %141 = vmatprep.subr.mxu0 0.0
  %142 = vmatpush2.msra.mxu0 0.0
  %143 = vmatprep.mubr.f32.mxu0 0.0
  %144 = vmatmul.mubr.f32.gmra.mxu0 %v56
  %v145 = vpop.f32.mrf.mxu0
  %v146 = vadd.f32 %v52, %v145
  %v147 = vpop.f32.mrf.mxu0
  %148 = vmatprep.mubr.f32.mxu0 0.0
  %149 = vmatmul.mubr.f32.gmra.mxu0 %v59
  %v150 = vpop.f32.mrf.mxu0
  %v151 = vadd.f32 %v52, %v150
  %v152 = vpop.f32.mrf.mxu0
  %153 = vmatprep.mubr.f32.mxu0 0.0
  %154 = vmatmul.mubr.f32.gmra.mxu0 %v62
  %v155 = vpop.f32.mrf.mxu0
  %v156 = vadd.f32 %v52, %v155
  %v157 = vpop.f32.mrf.mxu0
  %158 = vmatprep.mubr.f32.mxu0 0.0
  %159 = vmatmul.mubr.f32.gmra.mxu0 %v65
  %v160 = vpop.f32.mrf.mxu0
  %v161 = vadd.f32 %v52, %v160
  %v162 = vpop.f32.mrf.mxu0
  %163 = vmatprep.mubr.f32.mxu0 0.0
  %164 = vmatmul.mubr.f32.gmra.mxu0 %v68
  %v165 = vpop.f32.mrf.mxu0
  %v166 = vadd.f32 %v52, %v165
  %v167 = vpop.f32.mrf.mxu0
  %168 = vmatprep.mubr.f32.mxu0 0.0
  %169 = vmatmul.mubr.f32.gmra.mxu0 %v71
  %v170 = vpop.f32.mrf.mxu0
  %v171 = vadd.f32 %v52, %v170
  %v172 = vpop.f32.mrf.mxu0
  %173 = vmatprep.mubr.f32.mxu0 0.0
  %174 = vmatmul.mubr.f32.gmra.mxu0 %v74
  %v175 = vpop.f32.mrf.mxu0
  %v176 = vadd.f32 %v52, %v175
  %v177 = vpop.f32.mrf.mxu0
  %178 = vmatprep.mubr.f32.mxu0 0.0
  %179 = vmatmul.mubr.f32.gmra.mxu0 %v77
  %v180 = vpop.f32.mrf.mxu0
  %v181 = vadd.f32 %v52, %v180
  %v182 = vpop.f32.mrf.mxu0
  %183 = vdwg.mxu0
  %184 = vst [vmem:[#allocation2] sm:$0xff] %v146
  %185 = vst [vmem:[#allocation2 + $0x8] sm:$0xff] %v151
  %186 = vst [vmem:[#allocation2 + $0x10] sm:$0xff] %v156
  %187 = vst [vmem:[#allocation2 + $0x18] sm:$0xff] %v161
  %188 = vst [vmem:[#allocation2 + $0x20] sm:$0xff] %v166
  %189 = vst [vmem:[#allocation2 + $0x28] sm:$0xff] %v171
  %190 = vst [vmem:[#allocation2 + $0x30] sm:$0xff] %v176
  %191 = vst [vmem:[#allocation2 + $0x38] sm:$0xff] %v181
  %v192 = vld [vmem:[%s2] sm:$0xff]
  %v193 = vld [vmem:[%s2 + $0x8] sm:$0xff]
  %v194 = vld [vmem:[%s2 + $0x10] sm:$0xff]
  %v195 = vld [vmem:[%s2 + $0x18] sm:$0xff]
  %v196 = vld [vmem:[#allocation3] sm:$0xff]
  %v197 = vld [vmem:[#allocation4] sm:$0xff]
  %v198 = vld [vmem:[#allocation2] sm:$0xff]
  %v200 = vsel %vm54, %v196, 0
  %202 = vmatprep.subr.mxu0 0.0
  %203 = vmatpush1.msra.mxu0 0.0
  %204 = vmatprep.subr.mxu0 0.0
  %205 = vmatpush1.msra.mxu0 0.0
  %206 = vmatprep.subr.mxu0 0.0
  %207 = vmatpush1.msra.mxu0 0.0
  %208 = vmatprep.subr.mxu0 0.0
  %209 = vmatpush1.msra.mxu0 0.0
  %210 = vmatprep.subr.mxu0 0.0
  %211 = vmatpush1.msra.mxu0 0.0
  %212 = vmatprep.subr.mxu0 0.0
  %213 = vmatpush1.msra.mxu0 0.0
  %214 = vmatprep.subr.mxu0 0.0
  %215 = vmatpush1.msra.mxu0 0.0
  %216 = vmatprep.subr.mxu0 0.0
  %217 = vmatpush1.msra.mxu0 0.0
  %218 = vmatprep.subr.mxu0 0.0
  %219 = vmatpush1.msra.mxu0 0.0
  %220 = vmatprep.subr.mxu0 0.0
  %221 = vmatpush1.msra.mxu0 0.0
  %222 = vmatprep.subr.mxu0 0.0
  %223 = vmatpush1.msra.mxu0 0.0
  %224 = vmatprep.subr.mxu0 0.0
  %225 = vmatpush1.msra.mxu0 0.0
  %226 = vmatprep.subr.mxu0 0.0
  %227 = vmatpush1.msra.mxu0 %v195
  %228 = vmatprep.subr.mxu0 0.0
  %229 = vmatpush1.msra.mxu0 %v194
  %230 = vmatprep.subr.mxu0 0.0
  %231 = vmatpush1.msra.mxu0 %v193
  %232 = vmatprep.subr.mxu0 0.0
  %233 = vmatpush1.msra.mxu0 %v192
  %234 = vmatprep.subr.mxu0 0.0
  %235 = vmatpush2.msra.mxu0 0.0
  %236 = vmatprep.subr.mxu0 0.0
  %237 = vmatpush2.msra.mxu0 0.0
  %238 = vmatprep.subr.mxu0 0.0
  %239 = vmatpush2.msra.mxu0 0.0
  %240 = vmatprep.subr.mxu0 0.0
  %241 = vmatpush2.msra.mxu0 0.0
  %242 = vmatprep.subr.mxu0 0.0
  %243 = vmatpush2.msra.mxu0 0.0
  %244 = vmatprep.subr.mxu0 0.0
  %245 = vmatpush2.msra.mxu0 0.0
  %246 = vmatprep.subr.mxu0 0.0
  %247 = vmatpush2.msra.mxu0 0.0
  %248 = vmatprep.subr.mxu0 0.0
  %249 = vmatpush2.msra.mxu0 0.0
  %250 = vmatprep.subr.mxu0 0.0
  %251 = vmatpush2.msra.mxu0 0.0
  %252 = vmatprep.subr.mxu0 0.0
  %253 = vmatpush2.msra.mxu0 0.0
  %254 = vmatprep.subr.mxu0 0.0
  %255 = vmatpush2.msra.mxu0 0.0
  %256 = vmatprep.subr.mxu0 0.0
  %257 = vmatpush2.msra.mxu0 0.0
  %258 = vmatprep.subr.mxu0 0.0
  %259 = vmatpush2.msra.mxu0 0.0
  %260 = vmatprep.subr.mxu0 0.0
  %261 = vmatpush2.msra.mxu0 0.0
  %262 = vmatprep.subr.mxu0 0.0
  %263 = vmatpush2.msra.mxu0 0.0
  %264 = vmatprep.subr.mxu0 0.0
  %265 = vmatpush2.msra.mxu0 0.0
  %266 = vmatprep.mubr.f32.mxu0 0.0
  %267 = vmatmul.mubr.f32.gmra.mxu0 %v200
  %v268 = vpop.f32.mrf.mxu0
  %v269 = vadd.f32 0.0, %v268
  %v270 = vpop.f32.mrf.mxu0
  %271 = vdwg.mxu0
  %v272 = vadd.f32 %v198, %v269
  %v273 = vmul.f32 %v272, 0.5
  %v274 = vtanh.pop %v273
  %v275 = vmul.f32 %v274, 0.5
  %v276 = vadd.f32 %v275, 0.5
  %v277 = vtanh.pop %v272
  %279 = vrot.lane.b32.xlu0 %v197, 32
  %v280 = vpop.permute.xlu0 %279
  %v282 = vmul.f32 %v276, %v280
  %284 = vrot.lane.b32.xlu0 %v277, 64
  %v285 = vpop.permute.xlu0 %284
  %v287 = vmul.f32 %v276, %v285
  %289 = vrot.lane.b32.xlu0 %v287, 32
  %v290 = vpop.permute.xlu0 %289
  %v292 = vadd.f32 %v282, %v290
  %v293 = vtanh.pop %v292
  %295 = vrot.lane.b32.xlu0 %v293, 64
  %v296 = vpop.permute.xlu0 %295
  %v298 = vmul.f32 %v276, %v296
  %300 = vrot.lane.b32.xlu0 %v298, 32
  %v301 = vpop.permute.xlu0 %300
  %303 = vst.msk [vmem:[%s6] sm:$0xff] %vm54, %v301
  %s304 = scalar_lea.vmem [#allocation2], 8
  %v305 = vld [vmem:[%s304] sm:$0xff]
  %v306 = vsel %vm54, %v301, 0
  %308 = vmatprep.subr.mxu0 0.0
  %309 = vmatpush1.msra.mxu0 0.0
  %310 = vmatprep.subr.mxu0 0.0
  %311 = vmatpush1.msra.mxu0 0.0
  %312 = vmatprep.subr.mxu0 0.0
  %313 = vmatpush1.msra.mxu0 0.0
  %314 = vmatprep.subr.mxu0 0.0
  %315 = vmatpush1.msra.mxu0 0.0
  %316 = vmatprep.subr.mxu0 0.0
  %317 = vmatpush1.msra.mxu0 0.0
  %318 = vmatprep.subr.mxu0 0.0
  %319 = vmatpush1.msra.mxu0 0.0
  %320 = vmatprep.subr.mxu0 0.0
  %321 = vmatpush1.msra.mxu0 0.0
  %322 = vmatprep.subr.mxu0 0.0
  %323 = vmatpush1.msra.mxu0 0.0
  %324 = vmatprep.subr.mxu0 0.0
  %325 = vmatpush1.msra.mxu0 0.0
  %326 = vmatprep.subr.mxu0 0.0
  %327 = vmatpush1.msra.mxu0 0.0
  %328 = vmatprep.subr.mxu0 0.0
  %329 = vmatpush1.msra.mxu0 0.0
  %330 = vmatprep.subr.mxu0 0.0
  %331 = vmatpush1.msra.mxu0 0.0
  %332 = vmatprep.subr.mxu0 0.0
  %333 = vmatpush1.msra.mxu0 %v195
  %334 = vmatprep.subr.mxu0 0.0
  %335 = vmatpush1.msra.mxu0 %v194
  %336 = vmatprep.subr.mxu0 0.0
  %337 = vmatpush1.msra.mxu0 %v193
  %338 = vmatprep.subr.mxu0 0.0
  %339 = vmatpush1.msra.mxu0 %v192
  %340 = vmatprep.subr.mxu0 0.0
  %341 = vmatpush2.msra.mxu0 0.0
  %342 = vmatprep.subr.mxu0 0.0
  %343 = vmatpush2.msra.mxu0 0.0
  %344 = vmatprep.subr.mxu0 0.0
  %345 = vmatpush2.msra.mxu0 0.0
  %346 = vmatprep.subr.mxu0 0.0
  %347 = vmatpush2.msra.mxu0 0.0
  %348 = vmatprep.subr.mxu0 0.0
  %349 = vmatpush2.msra.mxu0 0.0
  %350 = vmatprep.subr.mxu0 0.0
  %351 = vmatpush2.msra.mxu0 0.0
  %352 = vmatprep.subr.mxu0 0.0
  %353 = vmatpush2.msra.mxu0 0.0
  %354 = vmatprep.subr.mxu0 0.0
  %355 = vmatpush2.msra.mxu0 0.0
  %356 = vmatprep.subr.mxu0 0.0
  %357 = vmatpush2.msra.mxu0 0.0
  %358 = vmatprep.subr.mxu0 0.0
  %359 = vmatpush2.msra.mxu0 0.0
  %360 = vmatprep.subr.mxu0 0.0
  %361 = vmatpush2.msra.mxu0 0.0
  %362 = vmatprep.subr.mxu0 0.0
  %363 = vmatpush2.msra.mxu0 0.0
  %364 = vmatprep.subr.mxu0 0.0
  %365 = vmatpush2.msra.mxu0 0.0
  %366 = vmatprep.subr.mxu0 0.0
  %367 = vmatpush2.msra.mxu0 0.0
  %368 = vmatprep.subr.mxu0 0.0
  %369 = vmatpush2.msra.mxu0 0.0
  %370 = vmatprep.subr.mxu0 0.0
  %371 = vmatpush2.msra.mxu0 0.0
  %372 = vmatprep.mubr.f32.mxu0 0.0
  %373 = vmatmul.mubr.f32.gmra.mxu0 %v306
  %v374 = vpop.f32.mrf.mxu0
  %v375 = vadd.f32 0.0, %v374
  %v376 = vpop.f32.mrf.mxu0
  %377 = vdwg.mxu0
  %v378 = vadd.f32 %v305, %v375
  %v379 = vmul.f32 %v378, 0.5
  %v380 = vtanh.pop %v379
  %v381 = vmul.f32 %v380, 0.5
  %v382 = vadd.f32 %v381, 0.5
  %v383 = vtanh.pop %v378
  %v384 = vmul.f32 %v382, %v292
  %386 = vrot.lane.b32.xlu0 %v383, 64
  %v387 = vpop.permute.xlu0 %386
  %v389 = vmul.f32 %v382, %v387
  %391 = vrot.lane.b32.xlu0 %v389, 32
  %v392 = vpop.permute.xlu0 %391
  %v394 = vadd.f32 %v384, %v392
  %v395 = vtanh.pop %v394
  %397 = vrot.lane.b32.xlu0 %v395, 64
  %v398 = vpop.permute.xlu0 %397
  %v400 = vmul.f32 %v382, %v398
  %402 = vrot.lane.b32.xlu0 %v400, 32
  %v403 = vpop.permute.xlu0 %402
  %s405 = scalar_lea.vmem %s6, 8
  %406 = vst.msk [vmem:[%s405] sm:$0xff] %vm54, %v403
  %s407 = scalar_lea.vmem [#allocation2], 16
  %v408 = vld [vmem:[%s407] sm:$0xff]
  %v409 = vsel %vm54, %v403, 0
  %411 = vmatprep.subr.mxu0 0.0
  %412 = vmatpush1.msra.mxu0 0.0
  %413 = vmatprep.subr.mxu0 0.0
  %414 = vmatpush1.msra.mxu0 0.0
  %415 = vmatprep.subr.mxu0 0.0
  %416 = vmatpush1.msra.mxu0 0.0
  %417 = vmatprep.subr.mxu0 0.0
  %418 = vmatpush1.msra.mxu0 0.0
  %419 = vmatprep.subr.mxu0 0.0
  %420 = vmatpush1.msra.mxu0 0.0
  %421 = vmatprep.subr.mxu0 0.0
  %422 = vmatpush1.msra.mxu0 0.0
  %423 = vmatprep.subr.mxu0 0.0
  %424 = vmatpush1.msra.mxu0 0.0
  %425 = vmatprep.subr.mxu0 0.0
  %426 = vmatpush1.msra.mxu0 0.0
  %427 = vmatprep.subr.mxu0 0.0
  %428 = vmatpush1.msra.mxu0 0.0
  %429 = vmatprep.subr.mxu0 0.0
  %430 = vmatpush1.msra.mxu0 0.0
  %431 = vmatprep.subr.mxu0 0.0
  %432 = vmatpush1.msra.mxu0 0.0
  %433 = vmatprep.subr.mxu0 0.0
  %434 = vmatpush1.msra.mxu0 0.0
  %435 = vmatprep.subr.mxu0 0.0
  %436 = vmatpush1.msra.mxu0 %v195
  %437 = vmatprep.subr.mxu0 0.0
  %438 = vmatpush1.msra.mxu0 %v194
  %439 = vmatprep.subr.mxu0 0.0
  %440 = vmatpush1.msra.mxu0 %v193
  %441 = vmatprep.subr.mxu0 0.0
  %442 = vmatpush1.msra.mxu0 %v192
  %443 = vmatprep.subr.mxu0 0.0
  %444 = vmatpush2.msra.mxu0 0.0
  %445 = vmatprep.subr.mxu0 0.0
  %446 = vmatpush2.msra.mxu0 0.0
  %447 = vmatprep.subr.mxu0 0.0
  %448 = vmatpush2.msra.mxu0 0.0
  %449 = vmatprep.subr.mxu0 0.0
  %450 = vmatpush2.msra.mxu0 0.0
  %451 = vmatprep.subr.mxu0 0.0
  %452 = vmatpush2.msra.mxu0 0.0
  %453 = vmatprep.subr.mxu0 0.0
  %454 = vmatpush2.msra.mxu0 0.0
  %455 = vmatprep.subr.mxu0 0.0
  %456 = vmatpush2.msra.mxu0 0.0
  %457 = vmatprep.subr.mxu0 0.0
  %458 = vmatpush2.msra.mxu0 0.0
  %459 = vmatprep.subr.mxu0 0.0
  %460 = vmatpush2.msra.mxu0 0.0
  %461 = vmatprep.subr.mxu0 0.0
  %462 = vmatpush2.msra.mxu0 0.0
  %463 = vmatprep.subr.mxu0 0.0
  %464 = vmatpush2.msra.mxu0 0.0
  %465 = vmatprep.subr.mxu0 0.0
  %466 = vmatpush2.msra.mxu0 0.0
  %467 = vmatprep.subr.mxu0 0.0
  %468 = vmatpush2.msra.mxu0 0.0
  %469 = vmatprep.subr.mxu0 0.0
  %470 = vmatpush2.msra.mxu0 0.0
  %471 = vmatprep.subr.mxu0 0.0
  %472 = vmatpush2.msra.mxu0 0.0
  %473 = vmatprep.subr.mxu0 0.0
  %474 = vmatpush2.msra.mxu0 0.0
  %475 = vmatprep.mubr.f32.mxu0 0.0
  %476 = vmatmul.mubr.f32.gmra.mxu0 %v409
  %v477 = vpop.f32.mrf.mxu0
  %v478 = vadd.f32 0.0, %v477
  %v479 = vpop.f32.mrf.mxu0
  %480 = vdwg.mxu0
  %v481 = vadd.f32 %v408, %v478
  %v482 = vmul.f32 %v481, 0.5
  %v483 = vtanh.pop %v482
  %v484 = vmul.f32 %v483, 0.5
  %v485 = vadd.f32 %v484, 0.5
  %v486 = vtanh.pop %v481
  %v487 = vmul.f32 %v485, %v394
  %489 = vrot.lane.b32.xlu0 %v486, 64
  %v490 = vpop.permute.xlu0 %489
  %v492 = vmul.f32 %v485, %v490
  %494 = vrot.lane.b32.xlu0 %v492, 32
  %v495 = vpop.permute.xlu0 %494
  %v497 = vadd.f32 %v487, %v495
  %v498 = vtanh.pop %v497
  %500 = vrot.lane.b32.xlu0 %v498, 64
  %v501 = vpop.permute.xlu0 %500
  %v503 = vmul.f32 %v485, %v501
  %505 = vrot.lane.b32.xlu0 %v503, 32
  %v506 = vpop.permute.xlu0 %505
  %s508 = scalar_lea.vmem %s6, 16
  %509 = vst.msk [vmem:[%s508] sm:$0xff] %vm54, %v506
  %s510 = scalar_lea.vmem [#allocation2], 24
  %v511 = vld [vmem:[%s510] sm:$0xff]
  %v512 = vsel %vm54, %v506, 0
  %514 = vmatprep.subr.mxu0 0.0
  %515 = vmatpush1.msra.mxu0 0.0
  %516 = vmatprep.subr.mxu0 0.0
  %517 = vmatpush1.msra.mxu0 0.0
  %518 = vmatprep.subr.mxu0 0.0
  %519 = vmatpush1.msra.mxu0 0.0
  %520 = vmatprep.subr.mxu0 0.0
  %521 = vmatpush1.msra.mxu0 0.0
  %522 = vmatprep.subr.mxu0 0.0
  %523 = vmatpush1.msra.mxu0 0.0
  %524 = vmatprep.subr.mxu0 0.0
  %525 = vmatpush1.msra.mxu0 0.0
  %526 = vmatprep.subr.mxu0 0.0
  %527 = vmatpush1.msra.mxu0 0.0
  %528 = vmatprep.subr.mxu0 0.0
  %529 = vmatpush1.msra.mxu0 0.0
  %530 = vmatprep.subr.mxu0 0.0
  %531 = vmatpush1.msra.mxu0 0.0
  %532 = vmatprep.subr.mxu0 0.0
  %533 = vmatpush1.msra.mxu0 0.0
  %534 = vmatprep.subr.mxu0 0.0
  %535 = vmatpush1.msra.mxu0 0.0
  %536 = vmatprep.subr.mxu0 0.0
  %537 = vmatpush1.msra.mxu0 0.0
  %538 = vmatprep.subr.mxu0 0.0
  %539 = vmatpush1.msra.mxu0 %v195
  %540 = vmatprep.subr.mxu0 0.0
  %541 = vmatpush1.msra.mxu0 %v194
  %542 = vmatprep.subr.mxu0 0.0
  %543 = vmatpush1.msra.mxu0 %v193
  %544 = vmatprep.subr.mxu0 0.0
  %545 = vmatpush1.msra.mxu0 %v192
  %546 = vmatprep.subr.mxu0 0.0
  %547 = vmatpush2.msra.mxu0 0.0
  %548 = vmatprep.subr.mxu0 0.0
  %549 = vmatpush2.msra.mxu0 0.0
  %550 = vmatprep.subr.mxu0 0.0
  %551 = vmatpush2.msra.mxu0 0.0
  %552 = vmatprep.subr.mxu0 0.0
  %553 = vmatpush2.msra.mxu0 0.0
  %554 = vmatprep.subr.mxu0 0.0
  %555 = vmatpush2.msra.mxu0 0.0
  %556 = vmatprep.subr.mxu0 0.0
  %557 = vmatpush2.msra.mxu0 0.0
  %558 = vmatprep.subr.mxu0 0.0
  %559 = vmatpush2.msra.mxu0 0.0
  %560 = vmatprep.subr.mxu0 0.0
  %561 = vmatpush2.msra.mxu0 0.0
  %562 = vmatprep.subr.mxu0 0.0
  %563 = vmatpush2.msra.mxu0 0.0
  %564 = vmatprep.subr.mxu0 0.0
  %565 = vmatpush2.msra.mxu0 0.0
  %566 = vmatprep.subr.mxu0 0.0
  %567 = vmatpush2.msra.mxu0 0.0
  %568 = vmatprep.subr.mxu0 0.0
  %569 = vmatpush2.msra.mxu0 0.0
  %570 = vmatprep.subr.mxu0 0.0
  %571 = vmatpush2.msra.mxu0 0.0
  %572 = vmatprep.subr.mxu0 0.0
  %573 = vmatpush2.msra.mxu0 0.0
  %574 = vmatprep.subr.mxu0 0.0
  %575 = vmatpush2.msra.mxu0 0.0
  %576 = vmatprep.subr.mxu0 0.0
  %577 = vmatpush2.msra.mxu0 0.0
  %578 = vmatprep.mubr.f32.mxu0 0.0
  %579 = vmatmul.mubr.f32.gmra.mxu0 %v512
  %v580 = vpop.f32.mrf.mxu0
  %v581 = vadd.f32 0.0, %v580
  %v582 = vpop.f32.mrf.mxu0
  %583 = vdwg.mxu0
  %v584 = vadd.f32 %v511, %v581
  %v585 = vmul.f32 %v584, 0.5
  %v586 = vtanh.pop %v585
  %v587 = vmul.f32 %v586, 0.5
  %v588 = vadd.f32 %v587, 0.5
  %v589 = vtanh.pop %v584
  %v590 = vmul.f32 %v588, %v497
  %592 = vrot.lane.b32.xlu0 %v589, 64
  %v593 = vpop.permute.xlu0 %592
  %v595 = vmul.f32 %v588, %v593
  %597 = vrot.lane.b32.xlu0 %v595, 32
  %v598 = vpop.permute.xlu0 %597
  %v600 = vadd.f32 %v590, %v598
  %v601 = vtanh.pop %v600
  %603 = vrot.lane.b32.xlu0 %v601, 64
  %v604 = vpop.permute.xlu0 %603
  %v606 = vmul.f32 %v588, %v604
  %608 = vrot.lane.b32.xlu0 %v606, 32
  %v609 = vpop.permute.xlu0 %608
  %s611 = scalar_lea.vmem %s6, 24
  %612 = vst.msk [vmem:[%s611] sm:$0xff] %vm54, %v609
  %s613 = scalar_lea.vmem [#allocation2], 32
  %v614 = vld [vmem:[%s613] sm:$0xff]
  %v615 = vsel %vm54, %v609, 0
  %617 = vmatprep.subr.mxu0 0.0
  %618 = vmatpush1.msra.mxu0 0.0
  %619 = vmatprep.subr.mxu0 0.0
  %620 = vmatpush1.msra.mxu0 0.0
  %621 = vmatprep.subr.mxu0 0.0
  %622 = vmatpush1.msra.mxu0 0.0
  %623 = vmatprep.subr.mxu0 0.0
  %624 = vmatpush1.msra.mxu0 0.0
  %625 = vmatprep.subr.mxu0 0.0
  %626 = vmatpush1.msra.mxu0 0.0
  %627 = vmatprep.subr.mxu0 0.0
  %628 = vmatpush1.msra.mxu0 0.0
  %629 = vmatprep.subr.mxu0 0.0
  %630 = vmatpush1.msra.mxu0 0.0
  %631 = vmatprep.subr.mxu0 0.0
  %632 = vmatpush1.msra.mxu0 0.0
  %633 = vmatprep.subr.mxu0 0.0
  %634 = vmatpush1.msra.mxu0 0.0
  %635 = vmatprep.subr.mxu0 0.0
  %636 = vmatpush1.msra.mxu0 0.0
  %637 = vmatprep.subr.mxu0 0.0
  %638 = vmatpush1.msra.mxu0 0.0
  %639 = vmatprep.subr.mxu0 0.0
  %640 = vmatpush1.msra.mxu0 0.0
  %641 = vmatprep.subr.mxu0 0.0
  %642 = vmatpush1.msra.mxu0 %v195
  %643 = vmatprep.subr.mxu0 0.0
  %644 = vmatpush1.msra.mxu0 %v194
  %645 = vmatprep.subr.mxu0 0.0
  %646 = vmatpush1.msra.mxu0 %v193
  %647 = vmatprep.subr.mxu0 0.0
  %648 = vmatpush1.msra.mxu0 %v192
  %649 = vmatprep.subr.mxu0 0.0
  %650 = vmatpush2.msra.mxu0 0.0
  %651 = vmatprep.subr.mxu0 0.0
  %652 = vmatpush2.msra.mxu0 0.0
  %653 = vmatprep.subr.mxu0 0.0
  %654 = vmatpush2.msra.mxu0 0.0
  %655 = vmatprep.subr.mxu0 0.0
  %656 = vmatpush2.msra.mxu0 0.0
  %657 = vmatprep.subr.mxu0 0.0
  %658 = vmatpush2.msra.mxu0 0.0
  %659 = vmatprep.subr.mxu0 0.0
  %660 = vmatpush2.msra.mxu0 0.0
  %661 = vmatprep.subr.mxu0 0.0
  %662 = vmatpush2.msra.mxu0 0.0
  %663 = vmatprep.subr.mxu0 0.0
  %664 = vmatpush2.msra.mxu0 0.0
  %665 = vmatprep.subr.mxu0 0.0
  %666 = vmatpush2.msra.mxu0 0.0
  %667 = vmatprep.subr.mxu0 0.0
  %668 = vmatpush2.msra.mxu0 0.0
  %669 = vmatprep.subr.mxu0 0.0
  %670 = vmatpush2.msra.mxu0 0.0
  %671 = vmatprep.subr.mxu0 0.0
  %672 = vmatpush2.msra.mxu0 0.0
  %673 = vmatprep.subr.mxu0 0.0
  %674 = vmatpush2.msra.mxu0 0.0
  %675 = vmatprep.subr.mxu0 0.0
  %676 = vmatpush2.msra.mxu0 0.0
  %677 = vmatprep.subr.mxu0 0.0
  %678 = vmatpush2.msra.mxu0 0.0
  %679 = vmatprep.subr.mxu0 0.0
  %680 = vmatpush2.msra.mxu0 0.0
  %681 = vmatprep.mubr.f32.mxu0 0.0
  %682 = vmatmul.mubr.f32.gmra.mxu0 %v615
  %v683 = vpop.f32.mrf.mxu0
  %v684 = vadd.f32 0.0, %v683
  %v685 = vpop.f32.mrf.mxu0
  %686 = vdwg.mxu0
  %v687 = vadd.f32 %v614, %v684
  %v688 = vmul.f32 %v687, 0.5
  %v689 = vtanh.pop %v688
  %v690 = vmul.f32 %v689, 0.5
  %v691 = vadd.f32 %v690, 0.5
  %v692 = vtanh.pop %v687
  %v693 = vmul.f32 %v691, %v600
  %695 = vrot.lane.b32.xlu0 %v692, 64
  %v696 = vpop.permute.xlu0 %695
  %v698 = vmul.f32 %v691, %v696
  %700 = vrot.lane.b32.xlu0 %v698, 32
  %v701 = vpop.permute.xlu0 %700
  %v703 = vadd.f32 %v693, %v701
  %v704 = vtanh.pop %v703
  %706 = vrot.lane.b32.xlu0 %v704, 64
  %v707 = vpop.permute.xlu0 %706
  %v709 = vmul.f32 %v691, %v707
  %711 = vrot.lane.b32.xlu0 %v709, 32
  %v712 = vpop.permute.xlu0 %711
  %s714 = scalar_lea.vmem %s6, 32
  %715 = vst.msk [vmem:[%s714] sm:$0xff] %vm54, %v712
  %s716 = scalar_lea.vmem [#allocation2], 40
  %v717 = vld [vmem:[%s716] sm:$0xff]
  %v718 = vsel %vm54, %v712, 0
  %720 = vmatprep.subr.mxu0 0.0
  %721 = vmatpush1.msra.mxu0 0.0
  %722 = vmatprep.subr.mxu0 0.0
  %723 = vmatpush1.msra.mxu0 0.0
  %724 = vmatprep.subr.mxu0 0.0
  %725 = vmatpush1.msra.mxu0 0.0
  %726 = vmatprep.subr.mxu0 0.0
  %727 = vmatpush1.msra.mxu0 0.0
  %728 = vmatprep.subr.mxu0 0.0
  %729 = vmatpush1.msra.mxu0 0.0
  %730 = vmatprep.subr.mxu0 0.0
  %731 = vmatpush1.msra.mxu0 0.0
  %732 = vmatprep.subr.mxu0 0.0
  %733 = vmatpush1.msra.mxu0 0.0
  %734 = vmatprep.subr.mxu0 0.0
  %735 = vmatpush1.msra.mxu0 0.0
  %736 = vmatprep.subr.mxu0 0.0
  %737 = vmatpush1.msra.mxu0 0.0
  %738 = vmatprep.subr.mxu0 0.0
  %739 = vmatpush1.msra.mxu0 0.0
  %740 = vmatprep.subr.mxu0 0.0
  %741 = vmatpush1.msra.mxu0 0.0
  %742 = vmatprep.subr.mxu0 0.0
  %743 = vmatpush1.msra.mxu0 0.0
  %744 = vmatprep.subr.mxu0 0.0
  %745 = vmatpush1.msra.mxu0 %v195
  %746 = vmatprep.subr.mxu0 0.0
  %747 = vmatpush1.msra.mxu0 %v194
  %748 = vmatprep.subr.mxu0 0.0
  %749 = vmatpush1.msra.mxu0 %v193
  %750 = vmatprep.subr.mxu0 0.0
  %751 = vmatpush1.msra.mxu0 %v192
  %752 = vmatprep.subr.mxu0 0.0
  %753 = vmatpush2.msra.mxu0 0.0
  %754 = vmatprep.subr.mxu0 0.0
  %755 = vmatpush2.msra.mxu0 0.0
  %756 = vmatprep.subr.mxu0 0.0
  %757 = vmatpush2.msra.mxu0 0.0
  %758 = vmatprep.subr.mxu0 0.0
  %759 = vmatpush2.msra.mxu0 0.0
  %760 = vmatprep.subr.mxu0 0.0
  %761 = vmatpush2.msra.mxu0 0.0
  %762 = vmatprep.subr.mxu0 0.0
  %763 = vmatpush2.msra.mxu0 0.0
  %764 = vmatprep.subr.mxu0 0.0
  %765 = vmatpush2.msra.mxu0 0.0
  %766 = vmatprep.subr.mxu0 0.0
  %767 = vmatpush2.msra.mxu0 0.0
  %768 = vmatprep.subr.mxu0 0.0
  %769 = vmatpush2.msra.mxu0 0.0
  %770 = vmatprep.subr.mxu0 0.0
  %771 = vmatpush2.msra.mxu0 0.0
  %772 = vmatprep.subr.mxu0 0.0
  %773 = vmatpush2.msra.mxu0 0.0
  %774 = vmatprep.subr.mxu0 0.0
  %775 = vmatpush2.msra.mxu0 0.0
  %776 = vmatprep.subr.mxu0 0.0
  %777 = vmatpush2.msra.mxu0 0.0
  %778 = vmatprep.subr.mxu0 0.0
  %779 = vmatpush2.msra.mxu0 0.0
  %780 = vmatprep.subr.mxu0 0.0
  %781 = vmatpush2.msra.mxu0 0.0
  %782 = vmatprep.subr.mxu0 0.0
  %783 = vmatpush2.msra.mxu0 0.0
  %784 = vmatprep.mubr.f32.mxu0 0.0
  %785 = vmatmul.mubr.f32.gmra.mxu0 %v718
  %v786 = vpop.f32.mrf.mxu0
  %v787 = vadd.f32 0.0, %v786
  %v788 = vpop.f32.mrf.mxu0
  %789 = vdwg.mxu0
  %v790 = vadd.f32 %v717, %v787
  %v791 = vmul.f32 %v790, 0.5
  %v792 = vtanh.pop %v791
  %v793 = vmul.f32 %v792, 0.5
  %v794 = vadd.f32 %v793, 0.5
  %v795 = vtanh.pop %v790
  %v796 = vmul.f32 %v794, %v703
  %798 = vrot.lane.b32.xlu0 %v795, 64
  %v799 = vpop.permute.xlu0 %798
  %v801 = vmul.f32 %v794, %v799
  %803 = vrot.lane.b32.xlu0 %v801, 32
  %v804 = vpop.permute.xlu0 %803
  %v806 = vadd.f32 %v796, %v804
  %v807 = vtanh.pop %v806
  %809 = vrot.lane.b32.xlu0 %v807, 64
  %v810 = vpop.permute.xlu0 %809
  %v812 = vmul.f32 %v794, %v810
  %814 = vrot.lane.b32.xlu0 %v812, 32
  %v815 = vpop.permute.xlu0 %814
  %s817 = scalar_lea.vmem %s6, 40
  %818 = vst.msk [vmem:[%s817] sm:$0xff] %vm54, %v815
  %s819 = scalar_lea.vmem [#allocation2], 48
  %v820 = vld [vmem:[%s819] sm:$0xff]
  %v821 = vsel %vm54, %v815, 0
  %823 = vmatprep.subr.mxu0 0.0
  %824 = vmatpush1.msra.mxu0 0.0
  %825 = vmatprep.subr.mxu0 0.0
  %826 = vmatpush1.msra.mxu0 0.0
  %827 = vmatprep.subr.mxu0 0.0
  %828 = vmatpush1.msra.mxu0 0.0
  %829 = vmatprep.subr.mxu0 0.0
  %830 = vmatpush1.msra.mxu0 0.0
  %831 = vmatprep.subr.mxu0 0.0
  %832 = vmatpush1.msra.mxu0 0.0
  %833 = vmatprep.subr.mxu0 0.0
  %834 = vmatpush1.msra.mxu0 0.0
  %835 = vmatprep.subr.mxu0 0.0
  %836 = vmatpush1.msra.mxu0 0.0
  %837 = vmatprep.subr.mxu0 0.0
  %838 = vmatpush1.msra.mxu0 0.0
  %839 = vmatprep.subr.mxu0 0.0
  %840 = vmatpush1.msra.mxu0 0.0
  %841 = vmatprep.subr.mxu0 0.0
  %842 = vmatpush1.msra.mxu0 0.0
  %843 = vmatprep.subr.mxu0 0.0
  %844 = vmatpush1.msra.mxu0 0.0
  %845 = vmatprep.subr.mxu0 0.0
  %846 = vmatpush1.msra.mxu0 0.0
  %847 = vmatprep.subr.mxu0 0.0
  %848 = vmatpush1.msra.mxu0 %v195
  %849 = vmatprep.subr.mxu0 0.0
  %850 = vmatpush1.msra.mxu0 %v194
  %851 = vmatprep.subr.mxu0 0.0
  %852 = vmatpush1.msra.mxu0 %v193
  %853 = vmatprep.subr.mxu0 0.0
  %854 = vmatpush1.msra.mxu0 %v192
  %855 = vmatprep.subr.mxu0 0.0
  %856 = vmatpush2.msra.mxu0 0.0
  %857 = vmatprep.subr.mxu0 0.0
  %858 = vmatpush2.msra.mxu0 0.0
  %859 = vmatprep.subr.mxu0 0.0
  %860 = vmatpush2.msra.mxu0 0.0
  %861 = vmatprep.subr.mxu0 0.0
  %862 = vmatpush2.msra.mxu0 0.0
  %863 = vmatprep.subr.mxu0 0.0
  %864 = vmatpush2.msra.mxu0 0.0
  %865 = vmatprep.subr.mxu0 0.0
  %866 = vmatpush2.msra.mxu0 0.0
  %867 = vmatprep.subr.mxu0 0.0
  %868 = vmatpush2.msra.mxu0 0.0
  %869 = vmatprep.subr.mxu0 0.0
  %870 = vmatpush2.msra.mxu0 0.0
  %871 = vmatprep.subr.mxu0 0.0
  %872 = vmatpush2.msra.mxu0 0.0
  %873 = vmatprep.subr.mxu0 0.0
  %874 = vmatpush2.msra.mxu0 0.0
  %875 = vmatprep.subr.mxu0 0.0
  %876 = vmatpush2.msra.mxu0 0.0
  %877 = vmatprep.subr.mxu0 0.0
  %878 = vmatpush2.msra.mxu0 0.0
  %879 = vmatprep.subr.mxu0 0.0
  %880 = vmatpush2.msra.mxu0 0.0
  %881 = vmatprep.subr.mxu0 0.0
  %882 = vmatpush2.msra.mxu0 0.0
  %883 = vmatprep.subr.mxu0 0.0
  %884 = vmatpush2.msra.mxu0 0.0
  %885 = vmatprep.subr.mxu0 0.0
  %886 = vmatpush2.msra.mxu0 0.0
  %887 = vmatprep.mubr.f32.mxu0 0.0
  %888 = vmatmul.mubr.f32.gmra.mxu0 %v821
  %v889 = vpop.f32.mrf.mxu0
  %v890 = vadd.f32 0.0, %v889
  %v891 = vpop.f32.mrf.mxu0
  %892 = vdwg.mxu0
  %v893 = vadd.f32 %v820, %v890
  %v894 = vmul.f32 %v893, 0.5
  %v895 = vtanh.pop %v894
  %v896 = vmul.f32 %v895, 0.5
  %v897 = vadd.f32 %v896, 0.5
  %v898 = vtanh.pop %v893
  %v899 = vmul.f32 %v897, %v806
  %901 = vrot.lane.b32.xlu0 %v898, 64
  %v902 = vpop.permute.xlu0 %901
  %v904 = vmul.f32 %v897, %v902
  %906 = vrot.lane.b32.xlu0 %v904, 32
  %v907 = vpop.permute.xlu0 %906
  %v909 = vadd.f32 %v899, %v907
  %v910 = vtanh.pop %v909
  %912 = vrot.lane.b32.xlu0 %v910, 64
  %v913 = vpop.permute.xlu0 %912
  %v915 = vmul.f32 %v897, %v913
  %917 = vrot.lane.b32.xlu0 %v915, 32
  %v918 = vpop.permute.xlu0 %917
  %s920 = scalar_lea.vmem %s6, 48
  %921 = vst.msk [vmem:[%s920] sm:$0xff] %vm54, %v918
  %s922 = scalar_lea.vmem [#allocation2], 56
  %v923 = vld [vmem:[%s922] sm:$0xff]
  %v924 = vsel %vm54, %v918, 0
  %926 = vmatprep.subr.mxu0 0.0
  %927 = vmatpush1.msra.mxu0 0.0
  %928 = vmatprep.subr.mxu0 0.0
  %929 = vmatpush1.msra.mxu0 0.0
  %930 = vmatprep.subr.mxu0 0.0
  %931 = vmatpush1.msra.mxu0 0.0
  %932 = vmatprep.subr.mxu0 0.0
  %933 = vmatpush1.msra.mxu0 0.0
  %934 = vmatprep.subr.mxu0 0.0
  %935 = vmatpush1.msra.mxu0 0.0
  %936 = vmatprep.subr.mxu0 0.0
  %937 = vmatpush1.msra.mxu0 0.0
  %938 = vmatprep.subr.mxu0 0.0
  %939 = vmatpush1.msra.mxu0 0.0
  %940 = vmatprep.subr.mxu0 0.0
  %941 = vmatpush1.msra.mxu0 0.0
  %942 = vmatprep.subr.mxu0 0.0
  %943 = vmatpush1.msra.mxu0 0.0
  %944 = vmatprep.subr.mxu0 0.0
  %945 = vmatpush1.msra.mxu0 0.0
  %946 = vmatprep.subr.mxu0 0.0
  %947 = vmatpush1.msra.mxu0 0.0
  %948 = vmatprep.subr.mxu0 0.0
  %949 = vmatpush1.msra.mxu0 0.0
  %950 = vmatprep.subr.mxu0 0.0
  %951 = vmatpush1.msra.mxu0 %v195
  %952 = vmatprep.subr.mxu0 0.0
  %953 = vmatpush1.msra.mxu0 %v194
  %954 = vmatprep.subr.mxu0 0.0
  %955 = vmatpush1.msra.mxu0 %v193
  %956 = vmatprep.subr.mxu0 0.0
  %957 = vmatpush1.msra.mxu0 %v192
  %958 = vmatprep.subr.mxu0 0.0
  %959 = vmatpush2.msra.mxu0 0.0
  %960 = vmatprep.subr.mxu0 0.0
  %961 = vmatpush2.msra.mxu0 0.0
  %962 = vmatprep.subr.mxu0 0.0
  %963 = vmatpush2.msra.mxu0 0.0
  %964 = vmatprep.subr.mxu0 0.0
  %965 = vmatpush2.msra.mxu0 0.0
  %966 = vmatprep.subr.mxu0 0.0
  %967 = vmatpush2.msra.mxu0 0.0
  %968 = vmatprep.subr.mxu0 0.0
  %969 = vmatpush2.msra.mxu0 0.0
  %970 = vmatprep.subr.mxu0 0.0
  %971 = vmatpush2.msra.mxu0 0.0
  %972 = vmatprep.subr.mxu0 0.0
  %973 = vmatpush2.msra.mxu0 0.0
  %974 = vmatprep.subr.mxu0 0.0
  %975 = vmatpush2.msra.mxu0 0.0
  %976 = vmatprep.subr.mxu0 0.0
  %977 = vmatpush2.msra.mxu0 0.0
  %978 = vmatprep.subr.mxu0 0.0
  %979 = vmatpush2.msra.mxu0 0.0
  %980 = vmatprep.subr.mxu0 0.0
  %981 = vmatpush2.msra.mxu0 0.0
  %982 = vmatprep.subr.mxu0 0.0
  %983 = vmatpush2.msra.mxu0 0.0
  %984 = vmatprep.subr.mxu0 0.0
  %985 = vmatpush2.msra.mxu0 0.0
  %986 = vmatprep.subr.mxu0 0.0
  %987 = vmatpush2.msra.mxu0 0.0
  %988 = vmatprep.subr.mxu0 0.0
  %989 = vmatpush2.msra.mxu0 0.0
  %990 = vmatprep.mubr.f32.mxu0 0.0
  %991 = vmatmul.mubr.f32.gmra.mxu0 %v924
  %v992 = vpop.f32.mrf.mxu0
  %v993 = vadd.f32 0.0, %v992
  %v994 = vpop.f32.mrf.mxu0
  %995 = vdwg.mxu0
  %v996 = vadd.f32 %v923, %v993
  %v997 = vmul.f32 %v996, 0.5
  %v998 = vtanh.pop %v997
  %v999 = vmul.f32 %v998, 0.5
  %v1000 = vadd.f32 %v999, 0.5
  %v1001 = vtanh.pop %v996
  %v1002 = vmul.f32 %v1000, %v909
  %1004 = vrot.lane.b32.xlu0 %v1001, 64
  %v1005 = vpop.permute.xlu0 %1004
  %v1007 = vmul.f32 %v1000, %v1005
  %1009 = vrot.lane.b32.xlu0 %v1007, 32
  %v1010 = vpop.permute.xlu0 %1009
  %v1012 = vadd.f32 %v1002, %v1010
  %v1013 = vtanh.pop %v1012
  %1015 = vrot.lane.b32.xlu0 %v1013, 64
  %v1016 = vpop.permute.xlu0 %1015
  %v1018 = vmul.f32 %v1000, %v1016
  %1020 = vrot.lane.b32.xlu0 %v1018, 32
  %v1021 = vpop.permute.xlu0 %1020
  %s1023 = scalar_lea.vmem %s6, 56
  %1024 = vst.msk [vmem:[%s1023] sm:$0xff] %vm54, %v1021
  %1025 = vst.msk [vmem:[#allocation3] sm:$0xff] %vm54, %v1021
  %1027 = vrot.lane.b32.xlu0 %v1012, 96
  %v1028 = vpop.permute.xlu0 %1027
  %1030 = vst.msk [vmem:[#allocation4] sm:$0xff] %vm54, %v1028
  // Predicated region
  $region30: #{decoder_lstm_forward.4} parent=0 // pred_check
    %p1031 = pneg %p26
  $region31: #{decoder_lstm_forward.4} parent=0 // pred_check_branch
    %1033 = sbr.rel (%p1031) target = $region33
  $region32: #{decoder_lstm_forward.4} parent=0 // pred_region
    %1034 = vst.msk [vmem:[%s7] sm:$0xff] %vm54, %v1021
    %1035 = vst.msk [vmem:[%s8] sm:$0xff] %vm54, %v1028
  $region33: #{decoder_lstm_forward.4} parent=0 // pred_fallthru
    _
  // Predicated region
  $region34: #{decoder_lstm_forward.4} parent=0 // pred_check
    _
  $region35: #{decoder_lstm_forward.4} parent=0 // pred_check_branch
    %1037 = sbr.rel (0) target = $region37
  $region36: #{decoder_lstm_forward.4} parent=0 // pred_region
    _
  $region37: #{decoder_lstm_forward.4} parent=0 // pred_fallthru
    _
  // Predicated region
  $region38: #{decoder_lstm_forward.4} parent=0 // pred_check
    _
  $region39: #{decoder_lstm_forward.4} parent=0 // pred_check_branch
    %1039 = sbr.rel (0) target = $region41
  $region40: #{decoder_lstm_forward.4} parent=0 // pred_region
    _
  $region41: #{decoder_lstm_forward.4} parent=0 // pred_fallthru
    _
  // Predicated region
  $region42: #{decoder_lstm_forward.4} parent=0 // pred_check
    _
  $region43: #{decoder_lstm_forward.4} parent=0 // pred_check_branch
    %1041 = sbr.rel (0) target = $region45
  $region44: #{decoder_lstm_forward.4} parent=0 // pred_region
    _
  $region45: #{decoder_lstm_forward.4} parent=0 // pred_fallthru
    _
  // Predicated region
  $region46: #{decoder_lstm_forward.4} parent=0 // pred_check
    _
  $region47: #{decoder_lstm_forward.4} parent=0 // pred_check_branch
    %1043 = sbr.rel (0) target = $region49
  $region48: #{decoder_lstm_forward.4} parent=0 // pred_region
    _
  $region49: #{decoder_lstm_forward.4} parent=0 // pred_fallthru
    _
  // Predicated region
  $region50: #{decoder_lstm_forward.4} parent=0 // pred_check
    _
  $region51: #{decoder_lstm_forward.4} parent=0 // pred_check_branch
    %1045 = sbr.rel (0) target = $region53
  $region52: #{decoder_lstm_forward.4} parent=0 // pred_region
    _
  $region53: #{decoder_lstm_forward.4} parent=0 // pred_fallthru
    _
  // Predicated region
  $region54: #{decoder_lstm_forward.4} parent=0 // pred_check
    _
  $region55: #{decoder_lstm_forward.4} parent=0 // pred_check_branch
    %1047 = sbr.rel (0) target = $region57
  $region56: #{decoder_lstm_forward.4} parent=0 // pred_region
    _
  $region57: #{decoder_lstm_forward.4} parent=0 // pred_fallthru
    _

</llo_original>
